<compile_context>
chip_gen: v7x
topology: tpu7x:2x2x1
jax: 0.10.0
libtpu: 0.0.40
codegen_flags: <defaults>
</compile_context>

<pallas_src>
import functools

import jax
import jax.numpy as jnp
from jax.experimental import pallas as pl
from jax.experimental.pallas import tpu as pltpu

VMEM_LIMIT = 48 * 1024 * 1024     # headroom even on v7x's 64 MiB physical VMEM
LN_EPS = 1e-5


def _tile(dim, target, mult):
    """Largest multiple of `mult` that divides `dim` and is <= target, else full dim.

    Dims fed to this are padded (M -> mult of 8, V -> mult of 128), so the
    full-dim fallback only triggers for small dims (< mult), where it is legal
    (block == full array dim) and cheap.
    """
    t = (min(target, dim) // mult) * mult
    while t >= mult:
        if dim % t == 0:
            return t
        t -= mult
    return dim


def _pad_to(n, mult):
    return -(-n // mult) * mult


def _layernorm_f32(x, g, b, eps):
    mean = jnp.mean(x, axis=-1, keepdims=True)
    var = jnp.mean(jnp.square(x - mean), axis=-1, keepdims=True)
    return (x - mean) * jax.lax.rsqrt(var + eps) * g + b


# ----------------------------- Pallas kernels -----------------------------

def _ln_qkv_kernel(x_ref, g_ref, b_ref, wq_ref, wk_ref, wv_ref,
                   bq_ref, bk_ref, bv_ref, q_ref, k_ref, v_ref, *, eps):
    """Fused LayerNorm + QKV projection; three bf16 outputs (no HBM transpose)."""
    h = _layernorm_f32(x_ref[...].astype(jnp.float32), g_ref[...], b_ref[...], eps)
    hb = h.astype(jnp.bfloat16)                       # bf16 MXU inputs, f32 accumulate
    q_ref[...] = (jnp.dot(hb, wq_ref[...], preferred_element_type=jnp.float32)
                  + bq_ref[...]).astype(q_ref.dtype)
    k_ref[...] = (jnp.dot(hb, wk_ref[...], preferred_element_type=jnp.float32)
                  + bk_ref[...]).astype(k_ref.dtype)
    v_ref[...] = (jnp.dot(hb, wv_ref[...], preferred_element_type=jnp.float32)
                  + bv_ref[...]).astype(v_ref.dtype)


def _ln_linear_kernel(x_ref, g_ref, b_ref, w_ref, bias_ref, o_ref, *, eps, activation):
    """Fused LayerNorm + Linear (+ optional GELU). Used for LN2 + MLP fc."""
    h = _layernorm_f32(x_ref[...].astype(jnp.float32), g_ref[...], b_ref[...], eps)
    acc = jnp.dot(h.astype(jnp.bfloat16), w_ref[...],
                  preferred_element_type=jnp.float32) + bias_ref[...]
    if activation == "gelu":
        acc = jax.nn.gelu(acc, approximate=True)      # GPT-2 "gelu_new" (tanh approx)
    o_ref[...] = acc.astype(o_ref.dtype)


def _res_linear_simple_kernel(x_ref, w_ref, b_ref, res_ref, o_ref):
    """Linear + fused residual add, full-K (no accumulator, no K grid axis)."""
    acc = jnp.dot(x_ref[...].astype(jnp.bfloat16), w_ref[...],
                  preferred_element_type=jnp.float32)
    o_ref[...] = (acc + b_ref[...] + res_ref[...].astype(jnp.float32)
                  ).astype(o_ref.dtype)


def _res_linear_kernel(x_ref, w_ref, b_ref, res_ref, o_ref, acc_ref):
    """K-tiled Linear with f32 accumulator scratch and fused residual add."""
    k = pl.program_id(2)

    @pl.when(k == 0)
    def _():
        acc_ref[...] = jnp.zeros_like(acc_ref)

    acc_ref[...] += jnp.dot(x_ref[...].astype(jnp.bfloat16), w_ref[...],
                            preferred_element_type=jnp.float32)

    @pl.when(k == pl.num_programs(2) - 1)
    def _():
        o_ref[...] = (acc_ref[...] + b_ref[...]
                      + res_ref[...].astype(jnp.float32)).astype(o_ref.dtype)


def _ln_lmhead_kernel(x_ref, g_ref, b_ref, wte_ref, o_ref, h_sc, *, eps):
    """Final LayerNorm (computed once per row block into VMEM scratch) + tied head.

    x @ wte^T with wte kept as (V, D) row blocks — no transposed HBM copy.
    The vocab grid axis is "arbitrary" so the LN result persists in scratch.
    """
    @pl.when(pl.program_id(1) == 0)
    def _():
        h = _layernorm_f32(x_ref[...].astype(jnp.float32), g_ref[...], b_ref[...], eps)
        h_sc[...] = h.astype(jnp.bfloat16)

    o_ref[...] = jax.lax.dot_general(
        h_sc[...], wte_ref[...], (((1,), (1,)), ((), ())),
        preferred_element_type=jnp.float32).astype(o_ref.dtype)


def _attn_kernel(qi_map_ref, ki_map_ref, q_ref, k_ref, v_ref, o_ref,
                 m_sc, l_sc, acc_sc, *, n_head, scale, tq, tkv):
    """Flash-style causal attention over a lower-triangular (qi, ki) schedule.

    All heads per grid step, online softmax in scratch.  q/k/v tiles stay bf16;
    only scores / softmax state are f32.  Masking only on the diagonal block,
    finalize (normalize + per-head slice store) at the diagonal block.
    """
    t = pl.program_id(1)
    qi = qi_map_ref[t]
    ki = ki_map_ref[t]
    hd = acc_sc.shape[-1]
    dims = (((1,), (1,)), ((), ()))                    # contract head_dim with head_dim

    @pl.when(ki == 0)
    def _():
        m_sc[...] = jnp.full_like(m_sc, -jnp.inf)
        l_sc[...] = jnp.zeros_like(l_sc)
        acc_sc[...] = jnp.zeros_like(acc_sc)

    def make_step(masked):
        def body():
            q = q_ref[0]                               # (tq, D) bf16
            k = k_ref[0]                               # (tkv, D) bf16
            v = v_ref[0]                               # (tkv, D) bf16
            if masked:
                # diagonal block: q_start == k_start, so local offsets suffice
                row = jax.lax.broadcasted_iota(jnp.int32, (tq, tkv), 0)
                col = jax.lax.broadcasted_iota(jnp.int32, (tq, tkv), 1)
                causal = row >= col
            for h in range(n_head):
                lo, hi = h * hd, (h + 1) * hd
                s = jax.lax.dot_general(q[:, lo:hi], k[:, lo:hi], dims,
                                        preferred_element_type=jnp.float32) * scale
                if masked:
                    s = jnp.where(causal, s, jnp.float32(-1e30))
                m_prev = m_sc[h]                                            # (tq, 1)
                m_new = jnp.maximum(m_prev, jnp.max(s, axis=-1, keepdims=True))
                alpha = jnp.exp(m_prev - m_new)
                p = jnp.exp(s - m_new)                                      # (tq, tkv)
                l_sc[h] = alpha * l_sc[h] + jnp.sum(p, axis=-1, keepdims=True)
                acc_sc[h] = alpha * acc_sc[h] + jnp.dot(
                    p.astype(jnp.bfloat16), v[:, lo:hi],
                    preferred_element_type=jnp.float32)
                m_sc[h] = m_new
        return body

    # kv blocks strictly below the diagonal: no masking needed.
    pl.when(ki < qi)(make_step(False))

    # diagonal block: mask, then finalize (this is the last kv step for this qi).
    @pl.when(ki == qi)
    def _():
        make_step(True)()
        for h in range(n_head):
            inv = pl.reciprocal(l_sc[h], approx=True)                       # (tq, 1)
            o_ref[0, :, h * hd:(h + 1) * hd] = (acc_sc[h] * inv).astype(o_ref.dtype)


# ----------------------------- Pallas wrappers -----------------------------

def pallas_ln_qkv(x, g, b, wq, wk, wv, bq, bk, bv):
    M, D = x.shape
    tm = _tile(M, 512, 8)
    tn = _tile(D, 1024, 128)
    row_spec = pl.BlockSpec((tm, D), lambda i, j: (i, 0))
    vec_d = pl.BlockSpec((1, D), lambda i, j: (0, 0))
    w_spec = pl.BlockSpec((D, tn), lambda i, j: (0, j))
    bias_spec = pl.BlockSpec((1, tn), lambda i, j: (0, j))
    out_spec = pl.BlockSpec((tm, tn), lambda i, j: (i, j))
    out_sds = jax.ShapeDtypeStruct((M, D), jnp.bfloat16)       # bf16 q/k/v to HBM
    return pl.pallas_call(
        functools.partial(_ln_qkv_kernel, eps=LN_EPS),
        out_shape=(out_sds, out_sds, out_sds),
        grid=(M // tm, D // tn),
        in_specs=[row_spec, vec_d, vec_d,
                  w_spec, w_spec, w_spec,
                  bias_spec, bias_spec, bias_spec],
        out_specs=(out_spec, out_spec, out_spec),
        compiler_params=pltpu.CompilerParams(
            dimension_semantics=("parallel", "parallel"),
            vmem_limit_bytes=VMEM_LIMIT),
    )(x, g.reshape(1, D), b.reshape(1, D), wq, wk, wv,
      bq.reshape(1, D), bk.reshape(1, D), bv.reshape(1, D))


def pallas_ln_linear(x, g, b, w, bias, activation=None, out_dtype=jnp.bfloat16):
    M, D = x.shape
    _, N = w.shape
    tm = _tile(M, 512, 8)
    tn = _tile(N, 1024, 128)
    return pl.pallas_call(
        functools.partial(_ln_linear_kernel, eps=LN_EPS, activation=activation),
        out_shape=jax.ShapeDtypeStruct((M, N), out_dtype),
        grid=(M // tm, N // tn),
        in_specs=[pl.BlockSpec((tm, D), lambda i, j: (i, 0)),
                  pl.BlockSpec((1, D), lambda i, j: (0, 0)),
                  pl.BlockSpec((1, D), lambda i, j: (0, 0)),
                  pl.BlockSpec((D, tn), lambda i, j: (0, j)),
                  pl.BlockSpec((1, tn), lambda i, j: (0, j))],
        out_specs=pl.BlockSpec((tm, tn), lambda i, j: (i, j)),
        compiler_params=pltpu.CompilerParams(
            dimension_semantics=("parallel", "parallel"),
            vmem_limit_bytes=VMEM_LIMIT),
    )(x, g.reshape(1, D), b.reshape(1, D), w, bias.reshape(1, N))


def pallas_residual_linear(x, w, bias, residual):
    M, K = x.shape
    _, N = w.shape
    tm = _tile(M, 512, 8)
    tn = _tile(N, 1024, 128)

    if K <= 1024:
        # Full-K path: no accumulator scratch, no init/finalize branches.
        return pl.pallas_call(
            _res_linear_simple_kernel,
            out_shape=jax.ShapeDtypeStruct((M, N), jnp.float32),
            grid=(M // tm, N // tn),
            in_specs=[pl.BlockSpec((tm, K), lambda i, j: (i, 0)),
                      pl.BlockSpec((K, tn), lambda i, j: (0, j)),
                      pl.BlockSpec((1, tn), lambda i, j: (0, j)),
                      pl.BlockSpec((tm, tn), lambda i, j: (i, j))],
            out_specs=pl.BlockSpec((tm, tn), lambda i, j: (i, j)),
            compiler_params=pltpu.CompilerParams(
                dimension_semantics=("parallel", "parallel"),
                vmem_limit_bytes=VMEM_LIMIT),
        )(x, w, bias.reshape(1, N), residual)

    tk = _tile(K, 512, 128)
    # TODO(synk): on v5e consider pipeline_mode=pl.Buffered(3) on the weight spec
    # (VMEM there is 128 MiB); re-check the budget before enabling on v7x.
    return pl.pallas_call(
        _res_linear_kernel,
        out_shape=jax.ShapeDtypeStruct((M, N), jnp.float32),
        grid=(M // tm, N // tn, K // tk),
        in_specs=[pl.BlockSpec((tm, tk), lambda i, j, k: (i, k)),
                  pl.BlockSpec((tk, tn), lambda i, j, k: (k, j)),
                  pl.BlockSpec((1, tn), lambda i, j, k: (0, j)),
                  pl.BlockSpec((tm, tn), lambda i, j, k: (i, j))],
        out_specs=pl.BlockSpec((tm, tn), lambda i, j, k: (i, j)),
        scratch_shapes=[pltpu.VMEM((tm, tn), jnp.float32)],
        compiler_params=pltpu.CompilerParams(
            dimension_semantics=("parallel", "parallel", "arbitrary"),
            vmem_limit_bytes=VMEM_LIMIT),
    )(x, w, bias.reshape(1, N), residual)


def pallas_ln_lmhead(x, g, b, wte):
    M, D = x.shape
    Vp, _ = wte.shape                 # vocab already padded to a multiple of 128
    tm = _tile(M, 512, 8)
    tv = _tile(Vp, 512, 128)
    return pl.pallas_call(
        functools.partial(_ln_lmhead_kernel, eps=LN_EPS),
        out_shape=jax.ShapeDtypeStruct((M, Vp), jnp.float32),
        grid=(M // tm, Vp // tv),
        in_specs=[pl.BlockSpec((tm, D), lambda i, j: (i, 0)),
                  pl.BlockSpec((1, D), lambda i, j: (0, 0)),
                  pl.BlockSpec((1, D), lambda i, j: (0, 0)),
                  pl.BlockSpec((tv, D), lambda i, j: (j, 0))],
        out_specs=pl.BlockSpec((tm, tv), lambda i, j: (i, j)),
        scratch_shapes=[pltpu.VMEM((tm, D), jnp.bfloat16)],    # LN'd rows, computed once
        compiler_params=pltpu.CompilerParams(
            dimension_semantics=("parallel", "arbitrary"),
            vmem_limit_bytes=VMEM_LIMIT),
    )(x, g.reshape(1, D), b.reshape(1, D), wte)


def pallas_causal_attention(q, k, v, n_head):
    # q, k, v: (B, T, D) bf16 — all heads handled inside each grid step (lane-dense D).
    B, T, D = q.shape
    hd = D // n_head
    tq = _tile(T, 256, 8)
    tkv = tq                          # equal tiles => only the diagonal block needs a mask
    nq = T // tq

    # Lower-triangular (qi, ki) schedule, flattened onto one "arbitrary" grid axis.
    qi_sched, ki_sched = [], []
    for i in range(nq):
        for j in range(i + 1):
            qi_sched.append(i)
            ki_sched.append(j)
    qi_map = jnp.asarray(qi_sched, dtype=jnp.int32)
    ki_map = jnp.asarray(ki_sched, dtype=jnp.int32)
    n_steps = len(qi_sched)

    grid_spec = pltpu.PrefetchScalarGridSpec(
        num_scalar_prefetch=2,
        grid=(B, n_steps),
        in_specs=[pl.BlockSpec((1, tq, D), lambda b, t, qm, km: (b, qm[t], 0)),
                  pl.BlockSpec((1, tkv, D), lambda b, t, qm, km: (b, km[t], 0)),
                  pl.BlockSpec((1, tkv, D), lambda b, t, qm, km: (b, km[t], 0))],
        out_specs=pl.BlockSpec((1, tq, D), lambda b, t, qm, km: (b, qm[t], 0)),
        scratch_shapes=[pltpu.VMEM((n_head, tq, 1), jnp.float32),
                        pltpu.VMEM((n_head, tq, 1), jnp.float32),
                        pltpu.VMEM((n_head, tq, hd), jnp.float32)])

    return pl.pallas_call(
        functools.partial(_attn_kernel, n_head=n_head, scale=1.0 / (hd ** 0.5),
                          tq=tq, tkv=tkv),
        out_shape=jax.ShapeDtypeStruct((B, T, D), jnp.bfloat16),
        grid_spec=grid_spec,
        compiler_params=pltpu.CompilerParams(
            dimension_semantics=("parallel", "arbitrary"),
            vmem_limit_bytes=VMEM_LIMIT),
    )(qi_map, ki_map, q, k, v)


# ----------------------------- GPT-2 style model -----------------------------

def init_params(key, vocab, d_model, n_head, n_layer, max_pos):
    def normal(k, shape):
        return (0.02 * jax.random.normal(k, shape, dtype=jnp.float32)
                ).astype(jnp.bfloat16)                      # bf16 weights for the MXU

    vocab_pad = max(_pad_to(vocab, 128), 128)               # lane-tileable LM head
    keys = jax.random.split(key, 2 + n_layer)
    wte = normal(keys[0], (vocab, d_model))
    wte = jnp.pad(wte, ((0, vocab_pad - vocab), (0, 0)))     # padded rows never gathered
    params = {
        "wte": wte,
        "wpe": normal(keys[1], (max_pos, d_model)),
        "lnf_g": jnp.ones((d_model,), jnp.float32),
        "lnf_b": jnp.zeros((d_model,), jnp.float32),
        "blocks": [],
    }
    for l in range(n_layer):
        kk = jax.random.split(keys[2 + l], 6)
        params["blocks"].append({
            "ln1_g": jnp.ones((d_model,), jnp.float32),
            "ln1_b": jnp.zeros((d_model,), jnp.float32),
            "wq": normal(kk[0], (d_model, d_model)),
            "wk": normal(kk[1], (d_model, d_model)),
            "wv": normal(kk[2], (d_model, d_model)),
            "bq": jnp.zeros((d_model,), jnp.float32),
            "bk": jnp.zeros((d_model,), jnp.float32),
            "bv": jnp.zeros((d_model,), jnp.float32),
            "proj_w": normal(kk[3], (d_model, d_model)),
            "proj_b": jnp.zeros((d_model,), jnp.float32),
            "ln2_g": jnp.ones((d_model,), jnp.float32),
            "ln2_b": jnp.zeros((d_model,), jnp.float32),
            "fc_w": normal(kk[4], (d_model, 4 * d_model)),
            "fc_b": jnp.zeros((4 * d_model,), jnp.float32),
            "mlp_proj_w": normal(kk[5], (4 * d_model, d_model)),
            "mlp_proj_b": jnp.zeros((d_model,), jnp.float32),
        })
    return params


def ubar_plus_forward(input_ids, params, n_head, vocab_size):
    """Equivalent of UBAR_plus.forward(inputs_ids) -> LM logits (B, T, vocab_size)."""
    B, T = input_ids.shape
    wte, wpe = params["wte"], params["wpe"]
    Vp, D = wte.shape

    # pad the sequence so B*T_pad tiles cleanly on the sublane axis
    T_pad = _pad_to(T, 8)
    if T_pad != T:
        input_ids = jnp.pad(input_ids, ((0, 0), (0, T_pad - T)))

    # embeddings (JAX glue: gather); residual stream kept in f32
    x = wte[input_ids].astype(jnp.float32) + wpe[:T_pad].astype(jnp.float32)[None, :, :]
    xf = x.reshape(B * T_pad, D)

    for blk in params["blocks"]:
        # --- attention sub-block: fused LN1 + QKV (one call, three bf16 outputs) ---
        q, k, v = pallas_ln_qkv(xf, blk["ln1_g"], blk["ln1_b"],
                                blk["wq"], blk["wk"], blk["wv"],
                                blk["bq"], blk["bk"], blk["bv"])
        a = pallas_causal_attention(q.reshape(B, T_pad, D), k.reshape(B, T_pad, D),
                                    v.reshape(B, T_pad, D), n_head)
        # output projection with fused residual add
        xf = pallas_residual_linear(a.reshape(B * T_pad, D),
                                    blk["proj_w"], blk["proj_b"], xf)

        # --- MLP sub-block: fused LN2 + FC + GELU, then residual-fused proj ---
        m = pallas_ln_linear(xf, blk["ln2_g"], blk["ln2_b"],
                             blk["fc_w"], blk["fc_b"], activation="gelu")
        xf = pallas_residual_linear(m, blk["mlp_proj_w"], blk["mlp_proj_b"], xf)

    # final LN fused into tied LM head; wte stays (Vp, D) — no transposed HBM copy
    logits = pallas_ln_lmhead(xf, params["lnf_g"], params["lnf_b"], wte)
    return logits.reshape(B, T_pad, Vp)[:, :T, :vocab_size]


# TODO(synk): tokenizer, TfIdf kp_model.search_batch (generate_correct_char) and
# HF autoregressive .generate() are host/string-side logic with no Pallas
# equivalent; only the forward() hot path (transformer LM) is implemented.


if __name__ == "__main__":
    key = jax.random.PRNGKey(0)
    B, T = 2, 8
    VOCAB, D_MODEL, N_HEAD, N_LAYER = 64, 32, 4, 2

    kp, kid = jax.random.split(key)
    params = init_params(kp, VOCAB, D_MODEL, N_HEAD, N_LAYER, max_pos=16)
    input_ids = jax.random.randint(kid, (B, T), 0, VOCAB, dtype=jnp.int32)

    fwd = jax.jit(lambda ids, p: ubar_plus_forward(ids, p, n_head=N_HEAD,
                                                   vocab_size=VOCAB))
    logits = fwd(input_ids, params)
    jax.block_until_ready(logits)
    assert logits.shape == (B, T, VOCAB)
    assert bool(jnp.isfinite(logits).all())
    print("KERNEL_OK")
</pallas_src>

<mosaic_0001>
module attributes {stable_mosaic.version = 11 : i64} {
  func.func @_ln_qkv_kernel(%arg0: i32, %arg1: i32, %arg2: memref<16x32xf32, #tpu.memory_space<vmem>>, %arg3: memref<1x32xf32, #tpu.memory_space<vmem>>, %arg4: memref<1x32xf32, #tpu.memory_space<vmem>>, %arg5: memref<32x32xbf16, #tpu.memory_space<vmem>>, %arg6: memref<32x32xbf16, #tpu.memory_space<vmem>>, %arg7: memref<32x32xbf16, #tpu.memory_space<vmem>>, %arg8: memref<1x32xf32, #tpu.memory_space<vmem>>, %arg9: memref<1x32xf32, #tpu.memory_space<vmem>>, %arg10: memref<1x32xf32, #tpu.memory_space<vmem>>, %arg11: memref<16x32xbf16, #tpu.memory_space<vmem>>, %arg12: memref<16x32xbf16, #tpu.memory_space<vmem>>, %arg13: memref<16x32xbf16, #tpu.memory_space<vmem>>) attributes {dimension_semantics = [#tpu.dimension_semantics<parallel>, #tpu.dimension_semantics<parallel>], iteration_bounds = array<i64: 1, 1>, scalar_prefetch = 0 : i64, scratch_operands = 0 : i64, tpu.core_type = #tpu.core_type<tc>, window_params = [{transform_indices = @transform_0, window_bounds = array<i64: 16, 32>}, {pipeline_mode = #tpu.pipeline_mode<synchronous>, transform_indices = @transform_1, window_bounds = array<i64: 1, 32>}, {pipeline_mode = #tpu.pipeline_mode<synchronous>, transform_indices = @transform_2, window_bounds = array<i64: 1, 32>}, {transform_indices = @transform_3, window_bounds = array<i64: 32, 32>}, {transform_indices = @transform_4, window_bounds = array<i64: 32, 32>}, {transform_indices = @transform_5, window_bounds = array<i64: 32, 32>}, {transform_indices = @transform_6, window_bounds = array<i64: 1, 32>}, {transform_indices = @transform_7, window_bounds = array<i64: 1, 32>}, {transform_indices = @transform_8, window_bounds = array<i64: 1, 32>}, {transform_indices = @transform_9, window_bounds = array<i64: 16, 32>}, {transform_indices = @transform_10, window_bounds = array<i64: 16, 32>}, {transform_indices = @transform_11, window_bounds = array<i64: 16, 32>}]} {
    %c0 = arith.constant 0 : index
    %c0_0 = arith.constant 0 : index
    %0 = vector.load %arg2[%c0, %c0_0] : memref<16x32xf32, #tpu.memory_space<vmem>>, vector<16x32xf32>
    %c0_1 = arith.constant 0 : index
    %c0_2 = arith.constant 0 : index
    %1 = vector.load %arg3[%c0_1, %c0_2] : memref<1x32xf32, #tpu.memory_space<vmem>>, vector<1x32xf32>
    %c0_3 = arith.constant 0 : index
    %c0_4 = arith.constant 0 : index
    %2 = vector.load %arg4[%c0_3, %c0_4] : memref<1x32xf32, #tpu.memory_space<vmem>>, vector<1x32xf32>
    %cst = arith.constant dense<0.000000e+00> : vector<16xf32>
    %3 = vector.multi_reduction <add>, %0, %cst [1] : vector<16x32xf32> to vector<16xf32>
    %4 = vector.shape_cast %3 : vector<16xf32> to vector<16x1xf32>
    %cst_5 = arith.constant 3.200000e+01 : f32
    %5 = vector.broadcast %cst_5 : f32 to vector<16x1xf32>
    %6 = arith.divf %4, %5 : vector<16x1xf32>
    %7 = vector.broadcast %6 : vector<16x1xf32> to vector<16x32xf32>
    %8 = arith.subf %0, %7 : vector<16x32xf32>
    %9 = arith.mulf %8, %8 : vector<16x32xf32>
    %cst_6 = arith.constant dense<0.000000e+00> : vector<16xf32>
    %10 = vector.multi_reduction <add>, %9, %cst_6 [1] : vector<16x32xf32> to vector<16xf32>
    %11 = vector.shape_cast %10 : vector<16xf32> to vector<16x1xf32>
    %cst_7 = arith.constant 3.200000e+01 : f32
    %12 = vector.broadcast %cst_7 : f32 to vector<16x1xf32>
    %13 = arith.divf %11, %12 : vector<16x1xf32>
    %14 = vector.broadcast %6 : vector<16x1xf32> to vector<16x32xf32>
    %15 = arith.subf %0, %14 : vector<16x32xf32>
    %cst_8 = arith.constant 9.99999974E-6 : f32
    %16 = vector.broadcast %cst_8 : f32 to vector<16x1xf32>
    %17 = arith.addf %13, %16 : vector<16x1xf32>
    %18 = math.rsqrt %17 : vector<16x1xf32>
    %19 = vector.broadcast %18 : vector<16x1xf32> to vector<16x32xf32>
    %20 = arith.mulf %15, %19 : vector<16x32xf32>
    %21 = vector.broadcast %1 : vector<1x32xf32> to vector<16x32xf32>
    %22 = arith.mulf %20, %21 : vector<16x32xf32>
    %23 = vector.broadcast %2 : vector<1x32xf32> to vector<16x32xf32>
    %24 = arith.addf %22, %23 : vector<16x32xf32>
    %25 = arith.truncf %24 : vector<16x32xf32> to vector<16x32xbf16>
    %c0_9 = arith.constant 0 : index
    %c0_10 = arith.constant 0 : index
    %26 = vector.load %arg5[%c0_9, %c0_10] : memref<32x32xbf16, #tpu.memory_space<vmem>>, vector<32x32xbf16>
    %cst_11 = arith.constant dense<0.000000e+00> : vector<16x32xf32>
    %27 = tpu.matmul %25, %26, %cst_11 {dimension_numbers = #tpu.dot_dimension_numbers<[1], [0], [0], [1], [0, 0, 1, 1], [], []>} : vector<16x32xbf16>, vector<32x32xbf16>, vector<16x32xf32> -> vector<16x32xf32>
    %c0_12 = arith.constant 0 : index
    %c0_13 = arith.constant 0 : index
    %28 = vector.load %arg8[%c0_12, %c0_13] : memref<1x32xf32, #tpu.memory_space<vmem>>, vector<1x32xf32>
    %29 = vector.broadcast %28 : vector<1x32xf32> to vector<16x32xf32>
    %30 = arith.addf %27, %29 : vector<16x32xf32>
    %31 = arith.truncf %30 : vector<16x32xf32> to vector<16x32xbf16>
    %c0_14 = arith.constant 0 : index
    %c0_15 = arith.constant 0 : index
    %32 = vector.load %arg11[%c0_14, %c0_15] : memref<16x32xbf16, #tpu.memory_space<vmem>>, vector<16x32xbf16>
    tpu.vector_store %arg11[%c0_14, %c0_15], %31 {strides = array<i32>} : memref<16x32xbf16, #tpu.memory_space<vmem>>, vector<16x32xbf16>,
    %c0_16 = arith.constant 0 : index
    %c0_17 = arith.constant 0 : index
    %33 = vector.load %arg6[%c0_16, %c0_17] : memref<32x32xbf16, #tpu.memory_space<vmem>>, vector<32x32xbf16>
    %cst_18 = arith.constant dense<0.000000e+00> : vector<16x32xf32>
    %34 = tpu.matmul %25, %33, %cst_18 {dimension_numbers = #tpu.dot_dimension_numbers<[1], [0], [0], [1], [0, 0, 1, 1], [], []>} : vector<16x32xbf16>, vector<32x32xbf16>, vector<16x32xf32> -> vector<16x32xf32>
    %c0_19 = arith.constant 0 : index
    %c0_20 = arith.constant 0 : index
    %35 = vector.load %arg9[%c0_19, %c0_20] : memref<1x32xf32, #tpu.memory_space<vmem>>, vector<1x32xf32>
    %36 = vector.broadcast %35 : vector<1x32xf32> to vector<16x32xf32>
    %37 = arith.addf %34, %36 : vector<16x32xf32>
    %38 = arith.truncf %37 : vector<16x32xf32> to vector<16x32xbf16>
    %c0_21 = arith.constant 0 : index
    %c0_22 = arith.constant 0 : index
    %39 = vector.load %arg12[%c0_21, %c0_22] : memref<16x32xbf16, #tpu.memory_space<vmem>>, vector<16x32xbf16>
    tpu.vector_store %arg12[%c0_21, %c0_22], %38 {strides = array<i32>} : memref<16x32xbf16, #tpu.memory_space<vmem>>, vector<16x32xbf16>,
    %c0_23 = arith.constant 0 : index
    %c0_24 = arith.constant 0 : index
    %40 = vector.load %arg7[%c0_23, %c0_24] : memref<32x32xbf16, #tpu.memory_space<vmem>>, vector<32x32xbf16>
    %cst_25 = arith.constant dense<0.000000e+00> : vector<16x32xf32>
    %41 = tpu.matmul %25, %40, %cst_25 {dimension_numbers = #tpu.dot_dimension_numbers<[1], [0], [0], [1], [0, 0, 1, 1], [], []>} : vector<16x32xbf16>, vector<32x32xbf16>, vector<16x32xf32> -> vector<16x32xf32>
    %c0_26 = arith.constant 0 : index
    %c0_27 = arith.constant 0 : index
    %42 = vector.load %arg10[%c0_26, %c0_27] : memref<1x32xf32, #tpu.memory_space<vmem>>, vector<1x32xf32>
    %43 = vector.broadcast %42 : vector<1x32xf32> to vector<16x32xf32>
    %44 = arith.addf %41, %43 : vector<16x32xf32>
    %45 = arith.truncf %44 : vector<16x32xf32> to vector<16x32xbf16>
    %c0_28 = arith.constant 0 : index
    %c0_29 = arith.constant 0 : index
    %46 = vector.load %arg13[%c0_28, %c0_29] : memref<16x32xbf16, #tpu.memory_space<vmem>>, vector<16x32xbf16>
    tpu.vector_store %arg13[%c0_28, %c0_29], %45 {strides = array<i32>} : memref<16x32xbf16, #tpu.memory_space<vmem>>, vector<16x32xbf16>,
    return
  }
  func.func @transform_0(%arg0: i32, %arg1: i32) -> (i32, i32) {
    %c0_i32 = arith.constant 0 : i32
    %c0_i32_0 = arith.constant 0 : i32
    return %arg0, %c0_i32 : i32, i32
  }
  func.func @transform_1(%arg0: i32, %arg1: i32) -> (i32, i32) {
    %c0_i32 = arith.constant 0 : i32
    %c0_i32_0 = arith.constant 0 : i32
    %c0_i32_1 = arith.constant 0 : i32
    return %c0_i32, %c0_i32_0 : i32, i32
  }
  func.func @transform_2(%arg0: i32, %arg1: i32) -> (i32, i32) {
    %c0_i32 = arith.constant 0 : i32
    %c0_i32_0 = arith.constant 0 : i32
    %c0_i32_1 = arith.constant 0 : i32
    return %c0_i32, %c0_i32_0 : i32, i32
  }
  func.func @transform_3(%arg0: i32, %arg1: i32) -> (i32, i32) {
    %c0_i32 = arith.constant 0 : i32
    %c0_i32_0 = arith.constant 0 : i32
    return %c0_i32, %arg1 : i32, i32
  }
  func.func @transform_4(%arg0: i32, %arg1: i32) -> (i32, i32) {
    %c0_i32 = arith.constant 0 : i32
    %c0_i32_0 = arith.constant 0 : i32
    return %c0_i32, %arg1 : i32, i32
  }
  func.func @transform_5(%arg0: i32, %arg1: i32) -> (i32, i32) {
    %c0_i32 = arith.constant 0 : i32
    %c0_i32_0 = arith.constant 0 : i32
    return %c0_i32, %arg1 : i32, i32
  }
  func.func @transform_6(%arg0: i32, %arg1: i32) -> (i32, i32) {
    %c0_i32 = arith.constant 0 : i32
    %c0_i32_0 = arith.constant 0 : i32
    return %c0_i32, %arg1 : i32, i32
  }
  func.func @transform_7(%arg0: i32, %arg1: i32) -> (i32, i32) {
    %c0_i32 = arith.constant 0 : i32
    %c0_i32_0 = arith.constant 0 : i32
    return %c0_i32, %arg1 : i32, i32
  }
  func.func @transform_8(%arg0: i32, %arg1: i32) -> (i32, i32) {
    %c0_i32 = arith.constant 0 : i32
    %c0_i32_0 = arith.constant 0 : i32
    return %c0_i32, %arg1 : i32, i32
  }
  func.func @transform_9(%arg0: i32, %arg1: i32) -> (i32, i32) {
    %c0_i32 = arith.constant 0 : i32
    return %arg0, %arg1 : i32, i32
  }
  func.func @transform_10(%arg0: i32, %arg1: i32) -> (i32, i32) {
    %c0_i32 = arith.constant 0 : i32
    return %arg0, %arg1 : i32, i32
  }
  func.func @transform_11(%arg0: i32, %arg1: i32) -> (i32, i32) {
    %c0_i32 = arith.constant 0 : i32
    return %arg0, %arg1 : i32, i32
  }
}

module attributes {stable_mosaic.version = 11 : i64} {
  func.func @_ln_linear_kernel(%arg0: i32, %arg1: i32, %arg2: memref<16x32xf32, #tpu.memory_space<vmem>>, %arg3: memref<1x32xf32, #tpu.memory_space<vmem>>, %arg4: memref<1x32xf32, #tpu.memory_space<vmem>>, %arg5: memref<32x128xbf16, #tpu.memory_space<vmem>>, %arg6: memref<1x128xf32, #tpu.memory_space<vmem>>, %arg7: memref<16x128xbf16, #tpu.memory_space<vmem>>) attributes {dimension_semantics = [#tpu.dimension_semantics<parallel>, #tpu.dimension_semantics<parallel>], iteration_bounds = array<i64: 1, 1>, scalar_prefetch = 0 : i64, scratch_operands = 0 : i64, tpu.core_type = #tpu.core_type<tc>, window_params = [{transform_indices = @transform_0, window_bounds = array<i64: 16, 32>}, {pipeline_mode = #tpu.pipeline_mode<synchronous>, transform_indices = @transform_1, window_bounds = array<i64: 1, 32>}, {pipeline_mode = #tpu.pipeline_mode<synchronous>, transform_indices = @transform_2, window_bounds = array<i64: 1, 32>}, {transform_indices = @transform_3, window_bounds = array<i64: 32, 128>}, {transform_indices = @transform_4, window_bounds = array<i64: 1, 128>}, {transform_indices = @transform_5, window_bounds = array<i64: 16, 128>}]} {
    %c0 = arith.constant 0 : index
    %c0_0 = arith.constant 0 : index
    %0 = vector.load %arg2[%c0, %c0_0] : memref<16x32xf32, #tpu.memory_space<vmem>>, vector<16x32xf32>
    %c0_1 = arith.constant 0 : index
    %c0_2 = arith.constant 0 : index
    %1 = vector.load %arg3[%c0_1, %c0_2] : memref<1x32xf32, #tpu.memory_space<vmem>>, vector<1x32xf32>
    %c0_3 = arith.constant 0 : index
    %c0_4 = arith.constant 0 : index
    %2 = vector.load %arg4[%c0_3, %c0_4] : memref<1x32xf32, #tpu.memory_space<vmem>>, vector<1x32xf32>
    %cst = arith.constant dense<0.000000e+00> : vector<16xf32>
    %3 = vector.multi_reduction <add>, %0, %cst [1] : vector<16x32xf32> to vector<16xf32>
    %4 = vector.shape_cast %3 : vector<16xf32> to vector<16x1xf32>
    %cst_5 = arith.constant 3.200000e+01 : f32
    %5 = vector.broadcast %cst_5 : f32 to vector<16x1xf32>
    %6 = arith.divf %4, %5 : vector<16x1xf32>
    %7 = vector.broadcast %6 : vector<16x1xf32> to vector<16x32xf32>
    %8 = arith.subf %0, %7 : vector<16x32xf32>
    %9 = arith.mulf %8, %8 : vector<16x32xf32>
    %cst_6 = arith.constant dense<0.000000e+00> : vector<16xf32>
    %10 = vector.multi_reduction <add>, %9, %cst_6 [1] : vector<16x32xf32> to vector<16xf32>
    %11 = vector.shape_cast %10 : vector<16xf32> to vector<16x1xf32>
    %cst_7 = arith.constant 3.200000e+01 : f32
    %12 = vector.broadcast %cst_7 : f32 to vector<16x1xf32>
    %13 = arith.divf %11, %12 : vector<16x1xf32>
    %14 = vector.broadcast %6 : vector<16x1xf32> to vector<16x32xf32>
    %15 = arith.subf %0, %14 : vector<16x32xf32>
    %cst_8 = arith.constant 9.99999974E-6 : f32
    %16 = vector.broadcast %cst_8 : f32 to vector<16x1xf32>
    %17 = arith.addf %13, %16 : vector<16x1xf32>
    %18 = math.rsqrt %17 : vector<16x1xf32>
    %19 = vector.broadcast %18 : vector<16x1xf32> to vector<16x32xf32>
    %20 = arith.mulf %15, %19 : vector<16x32xf32>
    %21 = vector.broadcast %1 : vector<1x32xf32> to vector<16x32xf32>
    %22 = arith.mulf %20, %21 : vector<16x32xf32>
    %23 = vector.broadcast %2 : vector<1x32xf32> to vector<16x32xf32>
    %24 = arith.addf %22, %23 : vector<16x32xf32>
    %25 = arith.truncf %24 : vector<16x32xf32> to vector<16x32xbf16>
    %c0_9 = arith.constant 0 : index
    %c0_10 = arith.constant 0 : index
    %26 = vector.load %arg5[%c0_9, %c0_10] : memref<32x128xbf16, #tpu.memory_space<vmem>>, vector<32x128xbf16>
    %cst_11 = arith.constant dense<0.000000e+00> : vector<16x128xf32>
    %27 = tpu.matmul %25, %26, %cst_11 {dimension_numbers = #tpu.dot_dimension_numbers<[1], [0], [0], [1], [0, 0, 1, 1], [], []>} : vector<16x32xbf16>, vector<32x128xbf16>, vector<16x128xf32> -> vector<16x128xf32>
    %c0_12 = arith.constant 0 : index
    %c0_13 = arith.constant 0 : index
    %28 = vector.load %arg6[%c0_12, %c0_13] : memref<1x128xf32, #tpu.memory_space<vmem>>, vector<1x128xf32>
    %29 = vector.broadcast %28 : vector<1x128xf32> to vector<16x128xf32>
    %30 = arith.addf %27, %29 : vector<16x128xf32>
    %31 = arith.mulf %30, %30 : vector<16x128xf32>
    %32 = arith.mulf %30, %31 : vector<16x128xf32>
    %cst_14 = arith.constant 4.471500e-02 : f32
    %33 = vector.broadcast %cst_14 : f32 to vector<16x128xf32>
    %34 = arith.mulf %33, %32 : vector<16x128xf32>
    %35 = arith.addf %30, %34 : vector<16x128xf32>
    %cst_15 = arith.constant 0.797884583 : f32
    %36 = vector.broadcast %cst_15 : f32 to vector<16x128xf32>
    %37 = arith.mulf %36, %35 : vector<16x128xf32>
    %38 = math.tanh %37 : vector<16x128xf32>
    %cst_16 = arith.constant 1.000000e+00 : f32
    %39 = vector.broadcast %cst_16 : f32 to vector<16x128xf32>
    %40 = arith.addf %39, %38 : vector<16x128xf32>
    %cst_17 = arith.constant 5.000000e-01 : f32
    %41 = vector.broadcast %cst_17 : f32 to vector<16x128xf32>
    %42 = arith.mulf %41, %40 : vector<16x128xf32>
    %43 = arith.mulf %30, %42 : vector<16x128xf32>
    %44 = arith.truncf %43 : vector<16x128xf32> to vector<16x128xbf16>
    %c0_18 = arith.constant 0 : index
    %c0_19 = arith.constant 0 : index
    %45 = vector.load %arg7[%c0_18, %c0_19] : memref<16x128xbf16, #tpu.memory_space<vmem>>, vector<16x128xbf16>
    tpu.vector_store %arg7[%c0_18, %c0_19], %44 {strides = array<i32>} : memref<16x128xbf16, #tpu.memory_space<vmem>>, vector<16x128xbf16>,
    return
  }
  func.func @transform_0(%arg0: i32, %arg1: i32) -> (i32, i32) {
    %c0_i32 = arith.constant 0 : i32
    %c0_i32_0 = arith.constant 0 : i32
    return %arg0, %c0_i32 : i32, i32
  }
  func.func @transform_1(%arg0: i32, %arg1: i32) -> (i32, i32) {
    %c0_i32 = arith.constant 0 : i32
    %c0_i32_0 = arith.constant 0 : i32
    %c0_i32_1 = arith.constant 0 : i32
    return %c0_i32, %c0_i32_0 : i32, i32
  }
  func.func @transform_2(%arg0: i32, %arg1: i32) -> (i32, i32) {
    %c0_i32 = arith.constant 0 : i32
    %c0_i32_0 = arith.constant 0 : i32
    %c0_i32_1 = arith.constant 0 : i32
    return %c0_i32, %c0_i32_0 : i32, i32
  }
  func.func @transform_3(%arg0: i32, %arg1: i32) -> (i32, i32) {
    %c0_i32 = arith.constant 0 : i32
    %c0_i32_0 = arith.constant 0 : i32
    return %c0_i32, %arg1 : i32, i32
  }
  func.func @transform_4(%arg0: i32, %arg1: i32) -> (i32, i32) {
    %c0_i32 = arith.constant 0 : i32
    %c0_i32_0 = arith.constant 0 : i32
    return %c0_i32, %arg1 : i32, i32
  }
  func.func @transform_5(%arg0: i32, %arg1: i32) -> (i32, i32) {
    %c0_i32 = arith.constant 0 : i32
    return %arg0, %arg1 : i32, i32
  }
}

module attributes {stable_mosaic.version = 11 : i64} {
  func.func @_attn_kernel(%arg0: i32, %arg1: i32, %arg2: memref<1xi32, #tpu.memory_space<smem>>, %arg3: memref<1xi32, #tpu.memory_space<smem>>, %arg4: memref<1x8x32xbf16, #tpu.memory_space<vmem>>, %arg5: memref<1x8x32xbf16, #tpu.memory_space<vmem>>, %arg6: memref<1x8x32xbf16, #tpu.memory_space<vmem>>, %arg7: memref<1x8x32xbf16, #tpu.memory_space<vmem>>, %arg8: memref<4x8x1xf32, #tpu.memory_space<vmem>>, %arg9: memref<4x8x1xf32, #tpu.memory_space<vmem>>, %arg10: memref<4x8x8xf32, #tpu.memory_space<vmem>>) attributes {dimension_semantics = [#tpu.dimension_semantics<parallel>, #tpu.dimension_semantics<arbitrary>], iteration_bounds = array<i64: 2, 1>, scalar_prefetch = 2 : i64, scratch_operands = 3 : i64, tpu.core_type = #tpu.core_type<tc>, window_params = [{transform_indices = @transform_0, window_bounds = array<i64: 1, 8, 32>}, {transform_indices = @transform_1, window_bounds = array<i64: 1, 8, 32>}, {transform_indices = @transform_2, window_bounds = array<i64: 1, 8, 32>}, {transform_indices = @transform_3, window_bounds = array<i64: 1, 8, 32>}]} {
    %0 = arith.index_cast %arg1 : i32 to index
    %1 = memref.load %arg2[%0] : memref<1xi32, #tpu.memory_space<smem>>
    %2 = arith.index_cast %arg1 : i32 to index
    %3 = memref.load %arg3[%2] : memref<1xi32, #tpu.memory_space<smem>>
    %c0_i32 = arith.constant 0 : i32
    %4 = arith.cmpi eq, %3, %c0_i32 : i32
    %5 = arith.extui %4 : i1 to i32
    %c0_i32_0 = arith.constant 0 : i32
    %6 = arith.cmpi ne, %5, %c0_i32_0 : i32
    scf.if %6 {
      %cst = arith.constant 0xFF800000 : f32
      %13 = vector.broadcast %cst : f32 to vector<4x8x1xf32>
      %c0 = arith.constant 0 : index
      %c0_3 = arith.constant 0 : index
      %c0_4 = arith.constant 0 : index
      %14 = vector.load %arg8[%c0, %c0_3, %c0_4] : memref<4x8x1xf32, #tpu.memory_space<vmem>>, vector<4x8x1xf32>
      tpu.vector_store %arg8[%c0, %c0_3, %c0_4], %13 {strides = array<i32>} : memref<4x8x1xf32, #tpu.memory_space<vmem>>, vector<4x8x1xf32>,
      %cst_5 = arith.constant 0.000000e+00 : f32
      %15 = vector.broadcast %cst_5 : f32 to vector<4x8x1xf32>
      %c0_6 = arith.constant 0 : index
      %c0_7 = arith.constant 0 : index
      %c0_8 = arith.constant 0 : index
      %16 = vector.load %arg9[%c0_6, %c0_7, %c0_8] : memref<4x8x1xf32, #tpu.memory_space<vmem>>, vector<4x8x1xf32>
      tpu.vector_store %arg9[%c0_6, %c0_7, %c0_8], %15 {strides = array<i32>} : memref<4x8x1xf32, #tpu.memory_space<vmem>>, vector<4x8x1xf32>,
      %cst_9 = arith.constant 0.000000e+00 : f32
      %17 = vector.broadcast %cst_9 : f32 to vector<4x8x8xf32>
      %c0_10 = arith.constant 0 : index
      %c0_11 = arith.constant 0 : index
      %c0_12 = arith.constant 0 : index
      %18 = vector.load %arg10[%c0_10, %c0_11, %c0_12] : memref<4x8x8xf32, #tpu.memory_space<vmem>>, vector<4x8x8xf32>
      tpu.vector_store %arg10[%c0_10, %c0_11, %c0_12], %17 {strides = array<i32>} : memref<4x8x8xf32, #tpu.memory_space<vmem>>, vector<4x8x8xf32>,
    } else {
    }
    %7 = arith.cmpi slt, %3, %1 : i32
    %8 = arith.extui %7 : i1 to i32
    %c0_i32_1 = arith.constant 0 : i32
    %9 = arith.cmpi ne, %8, %c0_i32_1 : i32
    scf.if %9 {
      %c0 = arith.constant 0 : index
      %c0_3 = arith.constant 0 : index
      %c0_4 = arith.constant 0 : index
      %13 = vector.load %arg4[%c0, %c0_3, %c0_4] : memref<1x8x32xbf16, #tpu.memory_space<vmem>>, vector<1x8x32xbf16>
      %14 = vector.shape_cast %13 : vector<1x8x32xbf16> to vector<8x32xbf16>
      %c0_5 = arith.constant 0 : index
      %c0_6 = arith.constant 0 : index
      %c0_7 = arith.constant 0 : index
      %15 = vector.load %arg5[%c0_5, %c0_6, %c0_7] : memref<1x8x32xbf16, #tpu.memory_space<vmem>>, vector<1x8x32xbf16>
      %16 = vector.shape_cast %15 : vector<1x8x32xbf16> to vector<8x32xbf16>
      %c0_8 = arith.constant 0 : index
      %c0_9 = arith.constant 0 : index
      %c0_10 = arith.constant 0 : index
      %17 = vector.load %arg6[%c0_8, %c0_9, %c0_10] : memref<1x8x32xbf16, #tpu.memory_space<vmem>>, vector<1x8x32xbf16>
      %18 = vector.shape_cast %17 : vector<1x8x32xbf16> to vector<8x32xbf16>
      %19 = vector.extract_strided_slice %14 {offsets = [0, 0], sizes = [8, 8], strides = [1, 1]} : vector<8x32xbf16> to vector<8x8xbf16>
      %20 = vector.extract_strided_slice %16 {offsets = [0, 0], sizes = [8, 8], strides = [1, 1]} : vector<8x32xbf16> to vector<8x8xbf16>
      %cst = arith.constant dense<0.000000e+00> : vector<8x8xf32>
      %21 = tpu.matmul %19, %20, %cst {dimension_numbers = #tpu.dot_dimension_numbers<[1], [1], [0], [0], [0, 0, 1, 0], [], []>} : vector<8x8xbf16>, vector<8x8xbf16>, vector<8x8xf32> -> vector<8x8xf32>
      %cst_11 = arith.constant 0.353553385 : f32
      %22 = vector.broadcast %cst_11 : f32 to vector<8x8xf32>
      %23 = arith.mulf %21, %22 : vector<8x8xf32>
      %c0_12 = arith.constant 0 : index
      %c0_13 = arith.constant 0 : index
      %c0_14 = arith.constant 0 : index
      %24 = vector.load %arg8[%c0_12, %c0_13, %c0_14] : memref<4x8x1xf32, #tpu.memory_space<vmem>>, vector<1x8x1xf32>
      %25 = vector.shape_cast %24 : vector<1x8x1xf32> to vector<8x1xf32>
      %cst_15 = arith.constant dense<0xFF800000> : vector<8xf32>
      %26 = vector.multi_reduction <maximumf>, %23, %cst_15 [1] : vector<8x8xf32> to vector<8xf32>
      %27 = vector.shape_cast %26 : vector<8xf32> to vector<8x1xf32>
      %28 = arith.maximumf %25, %27 : vector<8x1xf32>
      %29 = arith.subf %25, %28 : vector<8x1xf32>
      %30 = math.exp %29 : vector<8x1xf32>
      %31 = vector.broadcast %28 : vector<8x1xf32> to vector<8x8xf32>
      %32 = arith.subf %23, %31 : vector<8x8xf32>
      %33 = math.exp %32 : vector<8x8xf32>
      %c0_16 = arith.constant 0 : index
      %c0_17 = arith.constant 0 : index
      %c0_18 = arith.constant 0 : index
      %34 = vector.load %arg9[%c0_16, %c0_17, %c0_18] : memref<4x8x1xf32, #tpu.memory_space<vmem>>, vector<1x8x1xf32>
      %35 = vector.shape_cast %34 : vector<1x8x1xf32> to vector<8x1xf32>
      %36 = arith.mulf %30, %35 : vector<8x1xf32>
      %cst_19 = arith.constant dense<0.000000e+00> : vector<8xf32>
      %37 = vector.multi_reduction <add>, %33, %cst_19 [1] : vector<8x8xf32> to vector<8xf32>
      %38 = vector.shape_cast %37 : vector<8xf32> to vector<8x1xf32>
      %39 = arith.addf %36, %38 : vector<8x1xf32>
      %c0_20 = arith.constant 0 : index
      %c0_21 = arith.constant 0 : index
      %c0_22 = arith.constant 0 : index
      %40 = vector.load %arg9[%c0_20, %c0_21, %c0_22] : memref<4x8x1xf32, #tpu.memory_space<vmem>>, vector<1x8x1xf32>
      %41 = vector.shape_cast %40 : vector<1x8x1xf32> to vector<8x1xf32>
      %42 = vector.shape_cast %39 : vector<8x1xf32> to vector<1x8x1xf32>
      tpu.vector_store %arg9[%c0_20, %c0_21, %c0_22], %42 {strides = array<i32>} : memref<4x8x1xf32, #tpu.memory_space<vmem>>, vector<1x8x1xf32>,
      %c0_23 = arith.constant 0 : index
      %c0_24 = arith.constant 0 : index
      %c0_25 = arith.constant 0 : index
      %43 = vector.load %arg10[%c0_23, %c0_24, %c0_25] : memref<4x8x8xf32, #tpu.memory_space<vmem>>, vector<1x8x8xf32>
      %44 = vector.shape_cast %43 : vector<1x8x8xf32> to vector<8x8xf32>
      %45 = vector.broadcast %30 : vector<8x1xf32> to vector<8x8xf32>
      %46 = arith.mulf %45, %44 : vector<8x8xf32>
      %47 = arith.truncf %33 : vector<8x8xf32> to vector<8x8xbf16>
      %48 = vector.extract_strided_slice %18 {offsets = [0, 0], sizes = [8, 8], strides = [1, 1]} : vector<8x32xbf16> to vector<8x8xbf16>
      %cst_26 = arith.constant dense<0.000000e+00> : vector<8x8xf32>
      %49 = tpu.matmul %47, %48, %cst_26 {dimension_numbers = #tpu.dot_dimension_numbers<[1], [0], [0], [1], [0, 0, 1, 1], [], []>} : vector<8x8xbf16>, vector<8x8xbf16>, vector<8x8xf32> -> vector<8x8xf32>
      %50 = arith.addf %46, %49 : vector<8x8xf32>
      %c0_27 = arith.constant 0 : index
      %c0_28 = arith.constant 0 : index
      %c0_29 = arith.constant 0 : index
      %51 = vector.load %arg10[%c0_27, %c0_28, %c0_29] : memref<4x8x8xf32, #tpu.memory_space<vmem>>, vector<1x8x8xf32>
      %52 = vector.shape_cast %51 : vector<1x8x8xf32> to vector<8x8xf32>
      %53 = vector.shape_cast %50 : vector<8x8xf32> to vector<1x8x8xf32>
      tpu.vector_store %arg10[%c0_27, %c0_28, %c0_29], %53 {strides = array<i32>} : memref<4x8x8xf32, #tpu.memory_space<vmem>>, vector<1x8x8xf32>,
      %c0_30 = arith.constant 0 : index
      %c0_31 = arith.constant 0 : index
      %c0_32 = arith.constant 0 : index
      %54 = vector.load %arg8[%c0_30, %c0_31, %c0_32] : memref<4x8x1xf32, #tpu.memory_space<vmem>>, vector<1x8x1xf32>
      %55 = vector.shape_cast %54 : vector<1x8x1xf32> to vector<8x1xf32>
      %56 = vector.shape_cast %28 : vector<8x1xf32> to vector<1x8x1xf32>
      tpu.vector_store %arg8[%c0_30, %c0_31, %c0_32], %56 {strides = array<i32>} : memref<4x8x1xf32, #tpu.memory_space<vmem>>, vector<1x8x1xf32>,
      %57 = vector.extract_strided_slice %14 {offsets = [0, 8], sizes = [8, 8], strides = [1, 1]} : vector<8x32xbf16> to vector<8x8xbf16>
      %58 = vector.extract_strided_slice %16 {offsets = [0, 8], sizes = [8, 8], strides = [1, 1]} : vector<8x32xbf16> to vector<8x8xbf16>
      %cst_33 = arith.constant dense<0.000000e+00> : vector<8x8xf32>
      %59 = tpu.matmul %57, %58, %cst_33 {dimension_numbers = #tpu.dot_dimension_numbers<[1], [1], [0], [0], [0, 0, 1, 0], [], []>} : vector<8x8xbf16>, vector<8x8xbf16>, vector<8x8xf32> -> vector<8x8xf32>
      %cst_34 = arith.constant 0.353553385 : f32
      %60 = vector.broadcast %cst_34 : f32 to vector<8x8xf32>
      %61 = arith.mulf %59, %60 : vector<8x8xf32>
      %c1 = arith.constant 1 : index
      %c0_35 = arith.constant 0 : index
      %c0_36 = arith.constant 0 : index
      %62 = vector.load %arg8[%c1, %c0_35, %c0_36] : memref<4x8x1xf32, #tpu.memory_space<vmem>>, vector<1x8x1xf32>
      %63 = vector.shape_cast %62 : vector<1x8x1xf32> to vector<8x1xf32>
      %cst_37 = arith.constant dense<0xFF800000> : vector<8xf32>
      %64 = vector.multi_reduction <maximumf>, %61, %cst_37 [1] : vector<8x8xf32> to vector<8xf32>
      %65 = vector.shape_cast %64 : vector<8xf32> to vector<8x1xf32>
      %66 = arith.maximumf %63, %65 : vector<8x1xf32>
      %67 = arith.subf %63, %66 : vector<8x1xf32>
      %68 = math.exp %67 : vector<8x1xf32>
      %69 = vector.broadcast %66 : vector<8x1xf32> to vector<8x8xf32>
      %70 = arith.subf %61, %69 : vector<8x8xf32>
      %71 = math.exp %70 : vector<8x8xf32>
      %c1_38 = arith.constant 1 : index
      %c0_39 = arith.constant 0 : index
      %c0_40 = arith.constant 0 : index
      %72 = vector.load %arg9[%c1_38, %c0_39, %c0_40] : memref<4x8x1xf32, #tpu.memory_space<vmem>>, vector<1x8x1xf32>
      %73 = vector.shape_cast %72 : vector<1x8x1xf32> to vector<8x1xf32>
      %74 = arith.mulf %68, %73 : vector<8x1xf32>
      %cst_41 = arith.constant dense<0.000000e+00> : vector<8xf32>
      %75 = vector.multi_reduction <add>, %71, %cst_41 [1] : vector<8x8xf32> to vector<8xf32>
      %76 = vector.shape_cast %75 : vector<8xf32> to vector<8x1xf32>
      %77 = arith.addf %74, %76 : vector<8x1xf32>
      %c1_42 = arith.constant 1 : index
      %c0_43 = arith.constant 0 : index
      %c0_44 = arith.constant 0 : index
      %78 = vector.load %arg9[%c1_42, %c0_43, %c0_44] : memref<4x8x1xf32, #tpu.memory_space<vmem>>, vector<1x8x1xf32>
      %79 = vector.shape_cast %78 : vector<1x8x1xf32> to vector<8x1xf32>
      %80 = vector.shape_cast %77 : vector<8x1xf32> to vector<1x8x1xf32>
      tpu.vector_store %arg9[%c1_42, %c0_43, %c0_44], %80 {strides = array<i32>} : memref<4x8x1xf32, #tpu.memory_space<vmem>>, vector<1x8x1xf32>,
      %c1_45 = arith.constant 1 : index
      %c0_46 = arith.constant 0 : index
      %c0_47 = arith.constant 0 : index
      %81 = vector.load %arg10[%c1_45, %c0_46, %c0_47] : memref<4x8x8xf32, #tpu.memory_space<vmem>>, vector<1x8x8xf32>
      %82 = vector.shape_cast %81 : vector<1x8x8xf32> to vector<8x8xf32>
      %83 = vector.broadcast %68 : vector<8x1xf32> to vector<8x8xf32>
      %84 = arith.mulf %83, %82 : vector<8x8xf32>
      %85 = arith.truncf %71 : vector<8x8xf32> to vector<8x8xbf16>
      %86 = vector.extract_strided_slice %18 {offsets = [0, 8], sizes = [8, 8], strides = [1, 1]} : vector<8x32xbf16> to vector<8x8xbf16>
      %cst_48 = arith.constant dense<0.000000e+00> : vector<8x8xf32>
      %87 = tpu.matmul %85, %86, %cst_48 {dimension_numbers = #tpu.dot_dimension_numbers<[1], [0], [0], [1], [0, 0, 1, 1], [], []>} : vector<8x8xbf16>, vector<8x8xbf16>, vector<8x8xf32> -> vector<8x8xf32>
      %88 = arith.addf %84, %87 : vector<8x8xf32>
      %c1_49 = arith.constant 1 : index
      %c0_50 = arith.constant 0 : index
      %c0_51 = arith.constant 0 : index
      %89 = vector.load %arg10[%c1_49, %c0_50, %c0_51] : memref<4x8x8xf32, #tpu.memory_space<vmem>>, vector<1x8x8xf32>
      %90 = vector.shape_cast %89 : vector<1x8x8xf32> to vector<8x8xf32>
      %91 = vector.shape_cast %88 : vector<8x8xf32> to vector<1x8x8xf32>
      tpu.vector_store %arg10[%c1_49, %c0_50, %c0_51], %91 {strides = array<i32>} : memref<4x8x8xf32, #tpu.memory_space<vmem>>, vector<1x8x8xf32>,
      %c1_52 = arith.constant 1 : index
      %c0_53 = arith.constant 0 : index
      %c0_54 = arith.constant 0 : index
      %92 = vector.load %arg8[%c1_52, %c0_53, %c0_54] : memref<4x8x1xf32, #tpu.memory_space<vmem>>, vector<1x8x1xf32>
      %93 = vector.shape_cast %92 : vector<1x8x1xf32> to vector<8x1xf32>
      %94 = vector.shape_cast %66 : vector<8x1xf32> to vector<1x8x1xf32>
      tpu.vector_store %arg8[%c1_52, %c0_53, %c0_54], %94 {strides = array<i32>} : memref<4x8x1xf32, #tpu.memory_space<vmem>>, vector<1x8x1xf32>,
      %95 = vector.extract_strided_slice %14 {offsets = [0, 16], sizes = [8, 8], strides = [1, 1]} : vector<8x32xbf16> to vector<8x8xbf16>
      %96 = vector.extract_strided_slice %16 {offsets = [0, 16], sizes = [8, 8], strides = [1, 1]} : vector<8x32xbf16> to vector<8x8xbf16>
      %cst_55 = arith.constant dense<0.000000e+00> : vector<8x8xf32>
      %97 = tpu.matmul %95, %96, %cst_55 {dimension_numbers = #tpu.dot_dimension_numbers<[1], [1], [0], [0], [0, 0, 1, 0], [], []>} : vector<8x8xbf16>, vector<8x8xbf16>, vector<8x8xf32> -> vector<8x8xf32>
      %cst_56 = arith.constant 0.353553385 : f32
      %98 = vector.broadcast %cst_56 : f32 to vector<8x8xf32>
      %99 = arith.mulf %97, %98 : vector<8x8xf32>
      %c2 = arith.constant 2 : index
      %c0_57 = arith.constant 0 : index
      %c0_58 = arith.constant 0 : index
      %100 = vector.load %arg8[%c2, %c0_57, %c0_58] : memref<4x8x1xf32, #tpu.memory_space<vmem>>, vector<1x8x1xf32>
      %101 = vector.shape_cast %100 : vector<1x8x1xf32> to vector<8x1xf32>
      %cst_59 = arith.constant dense<0xFF800000> : vector<8xf32>
      %102 = vector.multi_reduction <maximumf>, %99, %cst_59 [1] : vector<8x8xf32> to vector<8xf32>
      %103 = vector.shape_cast %102 : vector<8xf32> to vector<8x1xf32>
      %104 = arith.maximumf %101, %103 : vector<8x1xf32>
      %105 = arith.subf %101, %104 : vector<8x1xf32>
      %106 = math.exp %105 : vector<8x1xf32>
      %107 = vector.broadcast %104 : vector<8x1xf32> to vector<8x8xf32>
      %108 = arith.subf %99, %107 : vector<8x8xf32>
      %109 = math.exp %108 : vector<8x8xf32>
      %c2_60 = arith.constant 2 : index
      %c0_61 = arith.constant 0 : index
      %c0_62 = arith.constant 0 : index
      %110 = vector.load %arg9[%c2_60, %c0_61, %c0_62] : memref<4x8x1xf32, #tpu.memory_space<vmem>>, vector<1x8x1xf32>
      %111 = vector.shape_cast %110 : vector<1x8x1xf32> to vector<8x1xf32>
      %112 = arith.mulf %106, %111 : vector<8x1xf32>
      %cst_63 = arith.constant dense<0.000000e+00> : vector<8xf32>
      %113 = vector.multi_reduction <add>, %109, %cst_63 [1] : vector<8x8xf32> to vector<8xf32>
      %114 = vector.shape_cast %113 : vector<8xf32> to vector<8x1xf32>
      %115 = arith.addf %112, %114 : vector<8x1xf32>
      %c2_64 = arith.constant 2 : index
      %c0_65 = arith.constant 0 : index
      %c0_66 = arith.constant 0 : index
      %116 = vector.load %arg9[%c2_64, %c0_65, %c0_66] : memref<4x8x1xf32, #tpu.memory_space<vmem>>, vector<1x8x1xf32>
      %117 = vector.shape_cast %116 : vector<1x8x1xf32> to vector<8x1xf32>
      %118 = vector.shape_cast %115 : vector<8x1xf32> to vector<1x8x1xf32>
      tpu.vector_store %arg9[%c2_64, %c0_65, %c0_66], %118 {strides = array<i32>} : memref<4x8x1xf32, #tpu.memory_space<vmem>>, vector<1x8x1xf32>,
      %c2_67 = arith.constant 2 : index
      %c0_68 = arith.constant 0 : index
      %c0_69 = arith.constant 0 : index
      %119 = vector.load %arg10[%c2_67, %c0_68, %c0_69] : memref<4x8x8xf32, #tpu.memory_space<vmem>>, vector<1x8x8xf32>
      %120 = vector.shape_cast %119 : vector<1x8x8xf32> to vector<8x8xf32>
      %121 = vector.broadcast %106 : vector<8x1xf32> to vector<8x8xf32>
      %122 = arith.mulf %121, %120 : vector<8x8xf32>
      %123 = arith.truncf %109 : vector<8x8xf32> to vector<8x8xbf16>
      %124 = vector.extract_strided_slice %18 {offsets = [0, 16], sizes = [8, 8], strides = [1, 1]} : vector<8x32xbf16> to vector<8x8xbf16>
      %cst_70 = arith.constant dense<0.000000e+00> : vector<8x8xf32>
      %125 = tpu.matmul %123, %124, %cst_70 {dimension_numbers = #tpu.dot_dimension_numbers<[1], [0], [0], [1], [0, 0, 1, 1], [], []>} : vector<8x8xbf16>, vector<8x8xbf16>, vector<8x8xf32> -> vector<8x8xf32>
      %126 = arith.addf %122, %125 : vector<8x8xf32>
      %c2_71 = arith.constant 2 : index
      %c0_72 = arith.constant 0 : index
      %c0_73 = arith.constant 0 : index
      %127 = vector.load %arg10[%c2_71, %c0_72, %c0_73] : memref<4x8x8xf32, #tpu.memory_space<vmem>>, vector<1x8x8xf32>
      %128 = vector.shape_cast %127 : vector<1x8x8xf32> to vector<8x8xf32>
      %129 = vector.shape_cast %126 : vector<8x8xf32> to vector<1x8x8xf32>
      tpu.vector_store %arg10[%c2_71, %c0_72, %c0_73], %129 {strides = array<i32>} : memref<4x8x8xf32, #tpu.memory_space<vmem>>, vector<1x8x8xf32>,
      %c2_74 = arith.constant 2 : index
      %c0_75 = arith.constant 0 : index
      %c0_76 = arith.constant 0 : index
      %130 = vector.load %arg8[%c2_74, %c0_75, %c0_76] : memref<4x8x1xf32, #tpu.memory_space<vmem>>, vector<1x8x1xf32>
      %131 = vector.shape_cast %130 : vector<1x8x1xf32> to vector<8x1xf32>
      %132 = vector.shape_cast %104 : vector<8x1xf32> to vector<1x8x1xf32>
      tpu.vector_store %arg8[%c2_74, %c0_75, %c0_76], %132 {strides = array<i32>} : memref<4x8x1xf32, #tpu.memory_space<vmem>>, vector<1x8x1xf32>,
      %133 = vector.extract_strided_slice %14 {offsets = [0, 24], sizes = [8, 8], strides = [1, 1]} : vector<8x32xbf16> to vector<8x8xbf16>
      %134 = vector.extract_strided_slice %16 {offsets = [0, 24], sizes = [8, 8], strides = [1, 1]} : vector<8x32xbf16> to vector<8x8xbf16>
      %cst_77 = arith.constant dense<0.000000e+00> : vector<8x8xf32>
      %135 = tpu.matmul %133, %134, %cst_77 {dimension_numbers = #tpu.dot_dimension_numbers<[1], [1], [0], [0], [0, 0, 1, 0], [], []>} : vector<8x8xbf16>, vector<8x8xbf16>, vector<8x8xf32> -> vector<8x8xf32>
      %cst_78 = arith.constant 0.353553385 : f32
      %136 = vector.broadcast %cst_78 : f32 to vector<8x8xf32>
      %137 = arith.mulf %135, %136 : vector<8x8xf32>
      %c3 = arith.constant 3 : index
      %c0_79 = arith.constant 0 : index
      %c0_80 = arith.constant 0 : index
      %138 = vector.load %arg8[%c3, %c0_79, %c0_80] : memref<4x8x1xf32, #tpu.memory_space<vmem>>, vector<1x8x1xf32>
      %139 = vector.shape_cast %138 : vector<1x8x1xf32> to vector<8x1xf32>
      %cst_81 = arith.constant dense<0xFF800000> : vector<8xf32>
      %140 = vector.multi_reduction <maximumf>, %137, %cst_81 [1] : vector<8x8xf32> to vector<8xf32>
      %141 = vector.shape_cast %140 : vector<8xf32> to vector<8x1xf32>
      %142 = arith.maximumf %139, %141 : vector<8x1xf32>
      %143 = arith.subf %139, %142 : vector<8x1xf32>
      %144 = math.exp %143 : vector<8x1xf32>
      %145 = vector.broadcast %142 : vector<8x1xf32> to vector<8x8xf32>
      %146 = arith.subf %137, %145 : vector<8x8xf32>
      %147 = math.exp %146 : vector<8x8xf32>
      %c3_82 = arith.constant 3 : index
      %c0_83 = arith.constant 0 : index
      %c0_84 = arith.constant 0 : index
      %148 = vector.load %arg9[%c3_82, %c0_83, %c0_84] : memref<4x8x1xf32, #tpu.memory_space<vmem>>, vector<1x8x1xf32>
      %149 = vector.shape_cast %148 : vector<1x8x1xf32> to vector<8x1xf32>
      %150 = arith.mulf %144, %149 : vector<8x1xf32>
      %cst_85 = arith.constant dense<0.000000e+00> : vector<8xf32>
      %151 = vector.multi_reduction <add>, %147, %cst_85 [1] : vector<8x8xf32> to vector<8xf32>
      %152 = vector.shape_cast %151 : vector<8xf32> to vector<8x1xf32>
      %153 = arith.addf %150, %152 : vector<8x1xf32>
      %c3_86 = arith.constant 3 : index
      %c0_87 = arith.constant 0 : index
      %c0_88 = arith.constant 0 : index
      %154 = vector.load %arg9[%c3_86, %c0_87, %c0_88] : memref<4x8x1xf32, #tpu.memory_space<vmem>>, vector<1x8x1xf32>
      %155 = vector.shape_cast %154 : vector<1x8x1xf32> to vector<8x1xf32>
      %156 = vector.shape_cast %153 : vector<8x1xf32> to vector<1x8x1xf32>
      tpu.vector_store %arg9[%c3_86, %c0_87, %c0_88], %156 {strides = array<i32>} : memref<4x8x1xf32, #tpu.memory_space<vmem>>, vector<1x8x1xf32>,
      %c3_89 = arith.constant 3 : index
      %c0_90 = arith.constant 0 : index
      %c0_91 = arith.constant 0 : index
      %157 = vector.load %arg10[%c3_89, %c0_90, %c0_91] : memref<4x8x8xf32, #tpu.memory_space<vmem>>, vector<1x8x8xf32>
      %158 = vector.shape_cast %157 : vector<1x8x8xf32> to vector<8x8xf32>
      %159 = vector.broadcast %144 : vector<8x1xf32> to vector<8x8xf32>
      %160 = arith.mulf %159, %158 : vector<8x8xf32>
      %161 = arith.truncf %147 : vector<8x8xf32> to vector<8x8xbf16>
      %162 = vector.extract_strided_slice %18 {offsets = [0, 24], sizes = [8, 8], strides = [1, 1]} : vector<8x32xbf16> to vector<8x8xbf16>
      %cst_92 = arith.constant dense<0.000000e+00> : vector<8x8xf32>
      %163 = tpu.matmul %161, %162, %cst_92 {dimension_numbers = #tpu.dot_dimension_numbers<[1], [0], [0], [1], [0, 0, 1, 1], [], []>} : vector<8x8xbf16>, vector<8x8xbf16>, vector<8x8xf32> -> vector<8x8xf32>
      %164 = arith.addf %160, %163 : vector<8x8xf32>
      %c3_93 = arith.constant 3 : index
      %c0_94 = arith.constant 0 : index
      %c0_95 = arith.constant 0 : index
      %165 = vector.load %arg10[%c3_93, %c0_94, %c0_95] : memref<4x8x8xf32, #tpu.memory_space<vmem>>, vector<1x8x8xf32>
      %166 = vector.shape_cast %165 : vector<1x8x8xf32> to vector<8x8xf32>
      %167 = vector.shape_cast %164 : vector<8x8xf32> to vector<1x8x8xf32>
      tpu.vector_store %arg10[%c3_93, %c0_94, %c0_95], %167 {strides = array<i32>} : memref<4x8x8xf32, #tpu.memory_space<vmem>>, vector<1x8x8xf32>,
      %c3_96 = arith.constant 3 : index
      %c0_97 = arith.constant 0 : index
      %c0_98 = arith.constant 0 : index
      %168 = vector.load %arg8[%c3_96, %c0_97, %c0_98] : memref<4x8x1xf32, #tpu.memory_space<vmem>>, vector<1x8x1xf32>
      %169 = vector.shape_cast %168 : vector<1x8x1xf32> to vector<8x1xf32>
      %170 = vector.shape_cast %142 : vector<8x1xf32> to vector<1x8x1xf32>
      tpu.vector_store %arg8[%c3_96, %c0_97, %c0_98], %170 {strides = array<i32>} : memref<4x8x1xf32, #tpu.memory_space<vmem>>, vector<1x8x1xf32>,
    } else {
    }
    %10 = arith.cmpi eq, %3, %1 : i32
    %11 = arith.extui %10 : i1 to i32
    %c0_i32_2 = arith.constant 0 : i32
    %12 = arith.cmpi ne, %11, %c0_i32_2 : i32
    scf.if %12 {
      %c0 = arith.constant 0 : index
      %c0_3 = arith.constant 0 : index
      %c0_4 = arith.constant 0 : index
      %13 = vector.load %arg4[%c0, %c0_3, %c0_4] : memref<1x8x32xbf16, #tpu.memory_space<vmem>>, vector<1x8x32xbf16>
      %14 = vector.shape_cast %13 : vector<1x8x32xbf16> to vector<8x32xbf16>
      %c0_5 = arith.constant 0 : index
      %c0_6 = arith.constant 0 : index
      %c0_7 = arith.constant 0 : index
      %15 = vector.load %arg5[%c0_5, %c0_6, %c0_7] : memref<1x8x32xbf16, #tpu.memory_space<vmem>>, vector<1x8x32xbf16>
      %16 = vector.shape_cast %15 : vector<1x8x32xbf16> to vector<8x32xbf16>
      %c0_8 = arith.constant 0 : index
      %c0_9 = arith.constant 0 : index
      %c0_10 = arith.constant 0 : index
      %17 = vector.load %arg6[%c0_8, %c0_9, %c0_10] : memref<1x8x32xbf16, #tpu.memory_space<vmem>>, vector<1x8x32xbf16>
      %18 = vector.shape_cast %17 : vector<1x8x32xbf16> to vector<8x32xbf16>
      %19 = tpu.iota {dimensions = array<i32: 0>} : vector<8x8xi32>
      %20 = tpu.iota {dimensions = array<i32: 1>} : vector<8x8xi32>
      %21 = arith.cmpi sge, %19, %20 : vector<8x8xi32>
      %22 = vector.extract_strided_slice %14 {offsets = [0, 0], sizes = [8, 8], strides = [1, 1]} : vector<8x32xbf16> to vector<8x8xbf16>
      %23 = vector.extract_strided_slice %16 {offsets = [0, 0], sizes = [8, 8], strides = [1, 1]} : vector<8x32xbf16> to vector<8x8xbf16>
      %cst = arith.constant dense<0.000000e+00> : vector<8x8xf32>
      %24 = tpu.matmul %22, %23, %cst {dimension_numbers = #tpu.dot_dimension_numbers<[1], [1], [0], [0], [0, 0, 1, 0], [], []>} : vector<8x8xbf16>, vector<8x8xbf16>, vector<8x8xf32> -> vector<8x8xf32>
      %cst_11 = arith.constant 0.353553385 : f32
      %25 = vector.broadcast %cst_11 : f32 to vector<8x8xf32>
      %26 = arith.mulf %24, %25 : vector<8x8xf32>
      %cst_12 = arith.constant -1.000000e+30 : f32
      %27 = vector.broadcast %cst_12 : f32 to vector<8x8xf32>
      %28 = arith.select %21, %26, %27 : vector<8x8xi1>, vector<8x8xf32>
      %c0_13 = arith.constant 0 : index
      %c0_14 = arith.constant 0 : index
      %c0_15 = arith.constant 0 : index
      %29 = vector.load %arg8[%c0_13, %c0_14, %c0_15] : memref<4x8x1xf32, #tpu.memory_space<vmem>>, vector<1x8x1xf32>
      %30 = vector.shape_cast %29 : vector<1x8x1xf32> to vector<8x1xf32>
      %cst_16 = arith.constant dense<0xFF800000> : vector<8xf32>
      %31 = vector.multi_reduction <maximumf>, %28, %cst_16 [1] : vector<8x8xf32> to vector<8xf32>
      %32 = vector.shape_cast %31 : vector<8xf32> to vector<8x1xf32>
      %33 = arith.maximumf %30, %32 : vector<8x1xf32>
      %34 = arith.subf %30, %33 : vector<8x1xf32>
      %35 = math.exp %34 : vector<8x1xf32>
      %36 = vector.broadcast %33 : vector<8x1xf32> to vector<8x8xf32>
      %37 = arith.subf %28, %36 : vector<8x8xf32>
      %38 = math.exp %37 : vector<8x8xf32>
      %c0_17 = arith.constant 0 : index
      %c0_18 = arith.constant 0 : index
      %c0_19 = arith.constant 0 : index
      %39 = vector.load %arg9[%c0_17, %c0_18, %c0_19] : memref<4x8x1xf32, #tpu.memory_space<vmem>>, vector<1x8x1xf32>
      %40 = vector.shape_cast %39 : vector<1x8x1xf32> to vector<8x1xf32>
      %41 = arith.mulf %35, %40 : vector<8x1xf32>
      %cst_20 = arith.constant dense<0.000000e+00> : vector<8xf32>
      %42 = vector.multi_reduction <add>, %38, %cst_20 [1] : vector<8x8xf32> to vector<8xf32>
      %43 = vector.shape_cast %42 : vector<8xf32> to vector<8x1xf32>
      %44 = arith.addf %41, %43 : vector<8x1xf32>
      %c0_21 = arith.constant 0 : index
      %c0_22 = arith.constant 0 : index
      %c0_23 = arith.constant 0 : index
      %45 = vector.load %arg9[%c0_21, %c0_22, %c0_23] : memref<4x8x1xf32, #tpu.memory_space<vmem>>, vector<1x8x1xf32>
      %46 = vector.shape_cast %45 : vector<1x8x1xf32> to vector<8x1xf32>
      %47 = vector.shape_cast %44 : vector<8x1xf32> to vector<1x8x1xf32>
      tpu.vector_store %arg9[%c0_21, %c0_22, %c0_23], %47 {strides = array<i32>} : memref<4x8x1xf32, #tpu.memory_space<vmem>>, vector<1x8x1xf32>,
      %c0_24 = arith.constant 0 : index
      %c0_25 = arith.constant 0 : index
      %c0_26 = arith.constant 0 : index
      %48 = vector.load %arg10[%c0_24, %c0_25, %c0_26] : memref<4x8x8xf32, #tpu.memory_space<vmem>>, vector<1x8x8xf32>
      %49 = vector.shape_cast %48 : vector<1x8x8xf32> to vector<8x8xf32>
      %50 = vector.broadcast %35 : vector<8x1xf32> to vector<8x8xf32>
      %51 = arith.mulf %50, %49 : vector<8x8xf32>
      %52 = arith.truncf %38 : vector<8x8xf32> to vector<8x8xbf16>
      %53 = vector.extract_strided_slice %18 {offsets = [0, 0], sizes = [8, 8], strides = [1, 1]} : vector<8x32xbf16> to vector<8x8xbf16>
      %cst_27 = arith.constant dense<0.000000e+00> : vector<8x8xf32>
      %54 = tpu.matmul %52, %53, %cst_27 {dimension_numbers = #tpu.dot_dimension_numbers<[1], [0], [0], [1], [0, 0, 1, 1], [], []>} : vector<8x8xbf16>, vector<8x8xbf16>, vector<8x8xf32> -> vector<8x8xf32>
      %55 = arith.addf %51, %54 : vector<8x8xf32>
      %c0_28 = arith.constant 0 : index
      %c0_29 = arith.constant 0 : index
      %c0_30 = arith.constant 0 : index
      %56 = vector.load %arg10[%c0_28, %c0_29, %c0_30] : memref<4x8x8xf32, #tpu.memory_space<vmem>>, vector<1x8x8xf32>
      %57 = vector.shape_cast %56 : vector<1x8x8xf32> to vector<8x8xf32>
      %58 = vector.shape_cast %55 : vector<8x8xf32> to vector<1x8x8xf32>
      tpu.vector_store %arg10[%c0_28, %c0_29, %c0_30], %58 {strides = array<i32>} : memref<4x8x8xf32, #tpu.memory_space<vmem>>, vector<1x8x8xf32>,
      %c0_31 = arith.constant 0 : index
      %c0_32 = arith.constant 0 : index
      %c0_33 = arith.constant 0 : index
      %59 = vector.load %arg8[%c0_31, %c0_32, %c0_33] : memref<4x8x1xf32, #tpu.memory_space<vmem>>, vector<1x8x1xf32>
      %60 = vector.shape_cast %59 : vector<1x8x1xf32> to vector<8x1xf32>
      %61 = vector.shape_cast %33 : vector<8x1xf32> to vector<1x8x1xf32>
      tpu.vector_store %arg8[%c0_31, %c0_32, %c0_33], %61 {strides = array<i32>} : memref<4x8x1xf32, #tpu.memory_space<vmem>>, vector<1x8x1xf32>,
      %62 = vector.extract_strided_slice %14 {offsets = [0, 8], sizes = [8, 8], strides = [1, 1]} : vector<8x32xbf16> to vector<8x8xbf16>
      %63 = vector.extract_strided_slice %16 {offsets = [0, 8], sizes = [8, 8], strides = [1, 1]} : vector<8x32xbf16> to vector<8x8xbf16>
      %cst_34 = arith.constant dense<0.000000e+00> : vector<8x8xf32>
      %64 = tpu.matmul %62, %63, %cst_34 {dimension_numbers = #tpu.dot_dimension_numbers<[1], [1], [0], [0], [0, 0, 1, 0], [], []>} : vector<8x8xbf16>, vector<8x8xbf16>, vector<8x8xf32> -> vector<8x8xf32>
      %cst_35 = arith.constant 0.353553385 : f32
      %65 = vector.broadcast %cst_35 : f32 to vector<8x8xf32>
      %66 = arith.mulf %64, %65 : vector<8x8xf32>
      %cst_36 = arith.constant -1.000000e+30 : f32
      %67 = vector.broadcast %cst_36 : f32 to vector<8x8xf32>
      %68 = arith.select %21, %66, %67 : vector<8x8xi1>, vector<8x8xf32>
      %c1 = arith.constant 1 : index
      %c0_37 = arith.constant 0 : index
      %c0_38 = arith.constant 0 : index
      %69 = vector.load %arg8[%c1, %c0_37, %c0_38] : memref<4x8x1xf32, #tpu.memory_space<vmem>>, vector<1x8x1xf32>
      %70 = vector.shape_cast %69 : vector<1x8x1xf32> to vector<8x1xf32>
      %cst_39 = arith.constant dense<0xFF800000> : vector<8xf32>
      %71 = vector.multi_reduction <maximumf>, %68, %cst_39 [1] : vector<8x8xf32> to vector<8xf32>
      %72 = vector.shape_cast %71 : vector<8xf32> to vector<8x1xf32>
      %73 = arith.maximumf %70, %72 : vector<8x1xf32>
      %74 = arith.subf %70, %73 : vector<8x1xf32>
      %75 = math.exp %74 : vector<8x1xf32>
      %76 = vector.broadcast %73 : vector<8x1xf32> to vector<8x8xf32>
      %77 = arith.subf %68, %76 : vector<8x8xf32>
      %78 = math.exp %77 : vector<8x8xf32>
      %c1_40 = arith.constant 1 : index
      %c0_41 = arith.constant 0 : index
      %c0_42 = arith.constant 0 : index
      %79 = vector.load %arg9[%c1_40, %c0_41, %c0_42] : memref<4x8x1xf32, #tpu.memory_space<vmem>>, vector<1x8x1xf32>
      %80 = vector.shape_cast %79 : vector<1x8x1xf32> to vector<8x1xf32>
      %81 = arith.mulf %75, %80 : vector<8x1xf32>
      %cst_43 = arith.constant dense<0.000000e+00> : vector<8xf32>
      %82 = vector.multi_reduction <add>, %78, %cst_43 [1] : vector<8x8xf32> to vector<8xf32>
      %83 = vector.shape_cast %82 : vector<8xf32> to vector<8x1xf32>
      %84 = arith.addf %81, %83 : vector<8x1xf32>
      %c1_44 = arith.constant 1 : index
      %c0_45 = arith.constant 0 : index
      %c0_46 = arith.constant 0 : index
      %85 = vector.load %arg9[%c1_44, %c0_45, %c0_46] : memref<4x8x1xf32, #tpu.memory_space<vmem>>, vector<1x8x1xf32>
      %86 = vector.shape_cast %85 : vector<1x8x1xf32> to vector<8x1xf32>
      %87 = vector.shape_cast %84 : vector<8x1xf32> to vector<1x8x1xf32>
      tpu.vector_store %arg9[%c1_44, %c0_45, %c0_46], %87 {strides = array<i32>} : memref<4x8x1xf32, #tpu.memory_space<vmem>>, vector<1x8x1xf32>,
      %c1_47 = arith.constant 1 : index
      %c0_48 = arith.constant 0 : index
      %c0_49 = arith.constant 0 : index
      %88 = vector.load %arg10[%c1_47, %c0_48, %c0_49] : memref<4x8x8xf32, #tpu.memory_space<vmem>>, vector<1x8x8xf32>
      %89 = vector.shape_cast %88 : vector<1x8x8xf32> to vector<8x8xf32>
      %90 = vector.broadcast %75 : vector<8x1xf32> to vector<8x8xf32>
      %91 = arith.mulf %90, %89 : vector<8x8xf32>
      %92 = arith.truncf %78 : vector<8x8xf32> to vector<8x8xbf16>
      %93 = vector.extract_strided_slice %18 {offsets = [0, 8], sizes = [8, 8], strides = [1, 1]} : vector<8x32xbf16> to vector<8x8xbf16>
      %cst_50 = arith.constant dense<0.000000e+00> : vector<8x8xf32>
      %94 = tpu.matmul %92, %93, %cst_50 {dimension_numbers = #tpu.dot_dimension_numbers<[1], [0], [0], [1], [0, 0, 1, 1], [], []>} : vector<8x8xbf16>, vector<8x8xbf16>, vector<8x8xf32> -> vector<8x8xf32>
      %95 = arith.addf %91, %94 : vector<8x8xf32>
      %c1_51 = arith.constant 1 : index
      %c0_52 = arith.constant 0 : index
      %c0_53 = arith.constant 0 : index
      %96 = vector.load %arg10[%c1_51, %c0_52, %c0_53] : memref<4x8x8xf32, #tpu.memory_space<vmem>>, vector<1x8x8xf32>
      %97 = vector.shape_cast %96 : vector<1x8x8xf32> to vector<8x8xf32>
      %98 = vector.shape_cast %95 : vector<8x8xf32> to vector<1x8x8xf32>
      tpu.vector_store %arg10[%c1_51, %c0_52, %c0_53], %98 {strides = array<i32>} : memref<4x8x8xf32, #tpu.memory_space<vmem>>, vector<1x8x8xf32>,
      %c1_54 = arith.constant 1 : index
      %c0_55 = arith.constant 0 : index
      %c0_56 = arith.constant 0 : index
      %99 = vector.load %arg8[%c1_54, %c0_55, %c0_56] : memref<4x8x1xf32, #tpu.memory_space<vmem>>, vector<1x8x1xf32>
      %100 = vector.shape_cast %99 : vector<1x8x1xf32> to vector<8x1xf32>
      %101 = vector.shape_cast %73 : vector<8x1xf32> to vector<1x8x1xf32>
      tpu.vector_store %arg8[%c1_54, %c0_55, %c0_56], %101 {strides = array<i32>} : memref<4x8x1xf32, #tpu.memory_space<vmem>>, vector<1x8x1xf32>,
      %102 = vector.extract_strided_slice %14 {offsets = [0, 16], sizes = [8, 8], strides = [1, 1]} : vector<8x32xbf16> to vector<8x8xbf16>
      %103 = vector.extract_strided_slice %16 {offsets = [0, 16], sizes = [8, 8], strides = [1, 1]} : vector<8x32xbf16> to vector<8x8xbf16>
      %cst_57 = arith.constant dense<0.000000e+00> : vector<8x8xf32>
      %104 = tpu.matmul %102, %103, %cst_57 {dimension_numbers = #tpu.dot_dimension_numbers<[1], [1], [0], [0], [0, 0, 1, 0], [], []>} : vector<8x8xbf16>, vector<8x8xbf16>, vector<8x8xf32> -> vector<8x8xf32>
      %cst_58 = arith.constant 0.353553385 : f32
      %105 = vector.broadcast %cst_58 : f32 to vector<8x8xf32>
      %106 = arith.mulf %104, %105 : vector<8x8xf32>
      %cst_59 = arith.constant -1.000000e+30 : f32
      %107 = vector.broadcast %cst_59 : f32 to vector<8x8xf32>
      %108 = arith.select %21, %106, %107 : vector<8x8xi1>, vector<8x8xf32>
      %c2 = arith.constant 2 : index
      %c0_60 = arith.constant 0 : index
      %c0_61 = arith.constant 0 : index
      %109 = vector.load %arg8[%c2, %c0_60, %c0_61] : memref<4x8x1xf32, #tpu.memory_space<vmem>>, vector<1x8x1xf32>
      %110 = vector.shape_cast %109 : vector<1x8x1xf32> to vector<8x1xf32>
      %cst_62 = arith.constant dense<0xFF800000> : vector<8xf32>
      %111 = vector.multi_reduction <maximumf>, %108, %cst_62 [1] : vector<8x8xf32> to vector<8xf32>
      %112 = vector.shape_cast %111 : vector<8xf32> to vector<8x1xf32>
      %113 = arith.maximumf %110, %112 : vector<8x1xf32>
      %114 = arith.subf %110, %113 : vector<8x1xf32>
      %115 = math.exp %114 : vector<8x1xf32>
      %116 = vector.broadcast %113 : vector<8x1xf32> to vector<8x8xf32>
      %117 = arith.subf %108, %116 : vector<8x8xf32>
      %118 = math.exp %117 : vector<8x8xf32>
      %c2_63 = arith.constant 2 : index
      %c0_64 = arith.constant 0 : index
      %c0_65 = arith.constant 0 : index
      %119 = vector.load %arg9[%c2_63, %c0_64, %c0_65] : memref<4x8x1xf32, #tpu.memory_space<vmem>>, vector<1x8x1xf32>
      %120 = vector.shape_cast %119 : vector<1x8x1xf32> to vector<8x1xf32>
      %121 = arith.mulf %115, %120 : vector<8x1xf32>
      %cst_66 = arith.constant dense<0.000000e+00> : vector<8xf32>
      %122 = vector.multi_reduction <add>, %118, %cst_66 [1] : vector<8x8xf32> to vector<8xf32>
      %123 = vector.shape_cast %122 : vector<8xf32> to vector<8x1xf32>
      %124 = arith.addf %121, %123 : vector<8x1xf32>
      %c2_67 = arith.constant 2 : index
      %c0_68 = arith.constant 0 : index
      %c0_69 = arith.constant 0 : index
      %125 = vector.load %arg9[%c2_67, %c0_68, %c0_69] : memref<4x8x1xf32, #tpu.memory_space<vmem>>, vector<1x8x1xf32>
      %126 = vector.shape_cast %125 : vector<1x8x1xf32> to vector<8x1xf32>
      %127 = vector.shape_cast %124 : vector<8x1xf32> to vector<1x8x1xf32>
      tpu.vector_store %arg9[%c2_67, %c0_68, %c0_69], %127 {strides = array<i32>} : memref<4x8x1xf32, #tpu.memory_space<vmem>>, vector<1x8x1xf32>,
      %c2_70 = arith.constant 2 : index
      %c0_71 = arith.constant 0 : index
      %c0_72 = arith.constant 0 : index
      %128 = vector.load %arg10[%c2_70, %c0_71, %c0_72] : memref<4x8x8xf32, #tpu.memory_space<vmem>>, vector<1x8x8xf32>
      %129 = vector.shape_cast %128 : vector<1x8x8xf32> to vector<8x8xf32>
      %130 = vector.broadcast %115 : vector<8x1xf32> to vector<8x8xf32>
      %131 = arith.mulf %130, %129 : vector<8x8xf32>
      %132 = arith.truncf %118 : vector<8x8xf32> to vector<8x8xbf16>
      %133 = vector.extract_strided_slice %18 {offsets = [0, 16], sizes = [8, 8], strides = [1, 1]} : vector<8x32xbf16> to vector<8x8xbf16>
      %cst_73 = arith.constant dense<0.000000e+00> : vector<8x8xf32>
      %134 = tpu.matmul %132, %133, %cst_73 {dimension_numbers = #tpu.dot_dimension_numbers<[1], [0], [0], [1], [0, 0, 1, 1], [], []>} : vector<8x8xbf16>, vector<8x8xbf16>, vector<8x8xf32> -> vector<8x8xf32>
      %135 = arith.addf %131, %134 : vector<8x8xf32>
      %c2_74 = arith.constant 2 : index
      %c0_75 = arith.constant 0 : index
      %c0_76 = arith.constant 0 : index
      %136 = vector.load %arg10[%c2_74, %c0_75, %c0_76] : memref<4x8x8xf32, #tpu.memory_space<vmem>>, vector<1x8x8xf32>
      %137 = vector.shape_cast %136 : vector<1x8x8xf32> to vector<8x8xf32>
      %138 = vector.shape_cast %135 : vector<8x8xf32> to vector<1x8x8xf32>
      tpu.vector_store %arg10[%c2_74, %c0_75, %c0_76], %138 {strides = array<i32>} : memref<4x8x8xf32, #tpu.memory_space<vmem>>, vector<1x8x8xf32>,
      %c2_77 = arith.constant 2 : index
      %c0_78 = arith.constant 0 : index
      %c0_79 = arith.constant 0 : index
      %139 = vector.load %arg8[%c2_77, %c0_78, %c0_79] : memref<4x8x1xf32, #tpu.memory_space<vmem>>, vector<1x8x1xf32>
      %140 = vector.shape_cast %139 : vector<1x8x1xf32> to vector<8x1xf32>
      %141 = vector.shape_cast %113 : vector<8x1xf32> to vector<1x8x1xf32>
      tpu.vector_store %arg8[%c2_77, %c0_78, %c0_79], %141 {strides = array<i32>} : memref<4x8x1xf32, #tpu.memory_space<vmem>>, vector<1x8x1xf32>,
      %142 = vector.extract_strided_slice %14 {offsets = [0, 24], sizes = [8, 8], strides = [1, 1]} : vector<8x32xbf16> to vector<8x8xbf16>
      %143 = vector.extract_strided_slice %16 {offsets = [0, 24], sizes = [8, 8], strides = [1, 1]} : vector<8x32xbf16> to vector<8x8xbf16>
      %cst_80 = arith.constant dense<0.000000e+00> : vector<8x8xf32>
      %144 = tpu.matmul %142, %143, %cst_80 {dimension_numbers = #tpu.dot_dimension_numbers<[1], [1], [0], [0], [0, 0, 1, 0], [], []>} : vector<8x8xbf16>, vector<8x8xbf16>, vector<8x8xf32> -> vector<8x8xf32>
      %cst_81 = arith.constant 0.353553385 : f32
      %145 = vector.broadcast %cst_81 : f32 to vector<8x8xf32>
      %146 = arith.mulf %144, %145 : vector<8x8xf32>
      %cst_82 = arith.constant -1.000000e+30 : f32
      %147 = vector.broadcast %cst_82 : f32 to vector<8x8xf32>
      %148 = arith.select %21, %146, %147 : vector<8x8xi1>, vector<8x8xf32>
      %c3 = arith.constant 3 : index
      %c0_83 = arith.constant 0 : index
      %c0_84 = arith.constant 0 : index
      %149 = vector.load %arg8[%c3, %c0_83, %c0_84] : memref<4x8x1xf32, #tpu.memory_space<vmem>>, vector<1x8x1xf32>
      %150 = vector.shape_cast %149 : vector<1x8x1xf32> to vector<8x1xf32>
      %cst_85 = arith.constant dense<0xFF800000> : vector<8xf32>
      %151 = vector.multi_reduction <maximumf>, %148, %cst_85 [1] : vector<8x8xf32> to vector<8xf32>
      %152 = vector.shape_cast %151 : vector<8xf32> to vector<8x1xf32>
      %153 = arith.maximumf %150, %152 : vector<8x1xf32>
      %154 = arith.subf %150, %153 : vector<8x1xf32>
      %155 = math.exp %154 : vector<8x1xf32>
      %156 = vector.broadcast %153 : vector<8x1xf32> to vector<8x8xf32>
      %157 = arith.subf %148, %156 : vector<8x8xf32>
      %158 = math.exp %157 : vector<8x8xf32>
      %c3_86 = arith.constant 3 : index
      %c0_87 = arith.constant 0 : index
      %c0_88 = arith.constant 0 : index
      %159 = vector.load %arg9[%c3_86, %c0_87, %c0_88] : memref<4x8x1xf32, #tpu.memory_space<vmem>>, vector<1x8x1xf32>
      %160 = vector.shape_cast %159 : vector<1x8x1xf32> to vector<8x1xf32>
      %161 = arith.mulf %155, %160 : vector<8x1xf32>
      %cst_89 = arith.constant dense<0.000000e+00> : vector<8xf32>
      %162 = vector.multi_reduction <add>, %158, %cst_89 [1] : vector<8x8xf32> to vector<8xf32>
      %163 = vector.shape_cast %162 : vector<8xf32> to vector<8x1xf32>
      %164 = arith.addf %161, %163 : vector<8x1xf32>
      %c3_90 = arith.constant 3 : index
      %c0_91 = arith.constant 0 : index
      %c0_92 = arith.constant 0 : index
      %165 = vector.load %arg9[%c3_90, %c0_91, %c0_92] : memref<4x8x1xf32, #tpu.memory_space<vmem>>, vector<1x8x1xf32>
      %166 = vector.shape_cast %165 : vector<1x8x1xf32> to vector<8x1xf32>
      %167 = vector.shape_cast %164 : vector<8x1xf32> to vector<1x8x1xf32>
      tpu.vector_store %arg9[%c3_90, %c0_91, %c0_92], %167 {strides = array<i32>} : memref<4x8x1xf32, #tpu.memory_space<vmem>>, vector<1x8x1xf32>,
      %c3_93 = arith.constant 3 : index
      %c0_94 = arith.constant 0 : index
      %c0_95 = arith.constant 0 : index
      %168 = vector.load %arg10[%c3_93, %c0_94, %c0_95] : memref<4x8x8xf32, #tpu.memory_space<vmem>>, vector<1x8x8xf32>
      %169 = vector.shape_cast %168 : vector<1x8x8xf32> to vector<8x8xf32>
      %170 = vector.broadcast %155 : vector<8x1xf32> to vector<8x8xf32>
      %171 = arith.mulf %170, %169 : vector<8x8xf32>
      %172 = arith.truncf %158 : vector<8x8xf32> to vector<8x8xbf16>
      %173 = vector.extract_strided_slice %18 {offsets = [0, 24], sizes = [8, 8], strides = [1, 1]} : vector<8x32xbf16> to vector<8x8xbf16>
      %cst_96 = arith.constant dense<0.000000e+00> : vector<8x8xf32>
      %174 = tpu.matmul %172, %173, %cst_96 {dimension_numbers = #tpu.dot_dimension_numbers<[1], [0], [0], [1], [0, 0, 1, 1], [], []>} : vector<8x8xbf16>, vector<8x8xbf16>, vector<8x8xf32> -> vector<8x8xf32>
      %175 = arith.addf %171, %174 : vector<8x8xf32>
      %c3_97 = arith.constant 3 : index
      %c0_98 = arith.constant 0 : index
      %c0_99 = arith.constant 0 : index
      %176 = vector.load %arg10[%c3_97, %c0_98, %c0_99] : memref<4x8x8xf32, #tpu.memory_space<vmem>>, vector<1x8x8xf32>
      %177 = vector.shape_cast %176 : vector<1x8x8xf32> to vector<8x8xf32>
      %178 = vector.shape_cast %175 : vector<8x8xf32> to vector<1x8x8xf32>
      tpu.vector_store %arg10[%c3_97, %c0_98, %c0_99], %178 {strides = array<i32>} : memref<4x8x8xf32, #tpu.memory_space<vmem>>, vector<1x8x8xf32>,
      %c3_100 = arith.constant 3 : index
      %c0_101 = arith.constant 0 : index
      %c0_102 = arith.constant 0 : index
      %179 = vector.load %arg8[%c3_100, %c0_101, %c0_102] : memref<4x8x1xf32, #tpu.memory_space<vmem>>, vector<1x8x1xf32>
      %180 = vector.shape_cast %179 : vector<1x8x1xf32> to vector<8x1xf32>
      %181 = vector.shape_cast %153 : vector<8x1xf32> to vector<1x8x1xf32>
      tpu.vector_store %arg8[%c3_100, %c0_101, %c0_102], %181 {strides = array<i32>} : memref<4x8x1xf32, #tpu.memory_space<vmem>>, vector<1x8x1xf32>,
      %c0_103 = arith.constant 0 : index
      %c0_104 = arith.constant 0 : index
      %c0_105 = arith.constant 0 : index
      %182 = vector.load %arg9[%c0_103, %c0_104, %c0_105] : memref<4x8x1xf32, #tpu.memory_space<vmem>>, vector<1x8x1xf32>
      %183 = vector.shape_cast %182 : vector<1x8x1xf32> to vector<8x1xf32>
      %184 = tpu.reciprocal %183 {approx = true} : vector<8x1xf32> -> vector<8x1xf32>
      %c0_106 = arith.constant 0 : index
      %c0_107 = arith.constant 0 : index
      %c0_108 = arith.constant 0 : index
      %185 = vector.load %arg10[%c0_106, %c0_107, %c0_108] : memref<4x8x8xf32, #tpu.memory_space<vmem>>, vector<1x8x8xf32>
      %186 = vector.shape_cast %185 : vector<1x8x8xf32> to vector<8x8xf32>
      %187 = vector.broadcast %184 : vector<8x1xf32> to vector<8x8xf32>
      %188 = arith.mulf %186, %187 : vector<8x8xf32>
      %189 = arith.truncf %188 : vector<8x8xf32> to vector<8x8xbf16>
      %c0_109 = arith.constant 0 : index
      %c0_110 = arith.constant 0 : index
      %c0_111 = arith.constant 0 : index
      %190 = vector.load %arg7[%c0_109, %c0_110, %c0_111] : memref<1x8x32xbf16, #tpu.memory_space<vmem>>, vector<1x8x8xbf16>
      %191 = vector.shape_cast %190 : vector<1x8x8xbf16> to vector<8x8xbf16>
      %192 = vector.shape_cast %189 : vector<8x8xbf16> to vector<1x8x8xbf16>
      tpu.vector_store %arg7[%c0_109, %c0_110, %c0_111], %192 {strides = array<i32>} : memref<1x8x32xbf16, #tpu.memory_space<vmem>>, vector<1x8x8xbf16>,
      %c1_112 = arith.constant 1 : index
      %c0_113 = arith.constant 0 : index
      %c0_114 = arith.constant 0 : index
      %193 = vector.load %arg9[%c1_112, %c0_113, %c0_114] : memref<4x8x1xf32, #tpu.memory_space<vmem>>, vector<1x8x1xf32>
      %194 = vector.shape_cast %193 : vector<1x8x1xf32> to vector<8x1xf32>
      %195 = tpu.reciprocal %194 {approx = true} : vector<8x1xf32> -> vector<8x1xf32>
      %c1_115 = arith.constant 1 : index
      %c0_116 = arith.constant 0 : index
      %c0_117 = arith.constant 0 : index
      %196 = vector.load %arg10[%c1_115, %c0_116, %c0_117] : memref<4x8x8xf32, #tpu.memory_space<vmem>>, vector<1x8x8xf32>
      %197 = vector.shape_cast %196 : vector<1x8x8xf32> to vector<8x8xf32>
      %198 = vector.broadcast %195 : vector<8x1xf32> to vector<8x8xf32>
      %199 = arith.mulf %197, %198 : vector<8x8xf32>
      %200 = arith.truncf %199 : vector<8x8xf32> to vector<8x8xbf16>
      %c0_118 = arith.constant 0 : index
      %c0_119 = arith.constant 0 : index
      %c8 = arith.constant 8 : index
      %201 = vector.load %arg7[%c0_118, %c0_119, %c8] : memref<1x8x32xbf16, #tpu.memory_space<vmem>>, vector<1x8x8xbf16>
      %202 = vector.shape_cast %201 : vector<1x8x8xbf16> to vector<8x8xbf16>
      %203 = vector.shape_cast %200 : vector<8x8xbf16> to vector<1x8x8xbf16>
      tpu.vector_store %arg7[%c0_118, %c0_119, %c8], %203 {strides = array<i32>} : memref<1x8x32xbf16, #tpu.memory_space<vmem>>, vector<1x8x8xbf16>,
      %c2_120 = arith.constant 2 : index
      %c0_121 = arith.constant 0 : index
      %c0_122 = arith.constant 0 : index
      %204 = vector.load %arg9[%c2_120, %c0_121, %c0_122] : memref<4x8x1xf32, #tpu.memory_space<vmem>>, vector<1x8x1xf32>
      %205 = vector.shape_cast %204 : vector<1x8x1xf32> to vector<8x1xf32>
      %206 = tpu.reciprocal %205 {approx = true} : vector<8x1xf32> -> vector<8x1xf32>
      %c2_123 = arith.constant 2 : index
      %c0_124 = arith.constant 0 : index
      %c0_125 = arith.constant 0 : index
      %207 = vector.load %arg10[%c2_123, %c0_124, %c0_125] : memref<4x8x8xf32, #tpu.memory_space<vmem>>, vector<1x8x8xf32>
      %208 = vector.shape_cast %207 : vector<1x8x8xf32> to vector<8x8xf32>
      %209 = vector.broadcast %206 : vector<8x1xf32> to vector<8x8xf32>
      %210 = arith.mulf %208, %209 : vector<8x8xf32>
      %211 = arith.truncf %210 : vector<8x8xf32> to vector<8x8xbf16>
      %c0_126 = arith.constant 0 : index
      %c0_127 = arith.constant 0 : index
      %c16 = arith.constant 16 : index
      %212 = vector.load %arg7[%c0_126, %c0_127, %c16] : memref<1x8x32xbf16, #tpu.memory_space<vmem>>, vector<1x8x8xbf16>
      %213 = vector.shape_cast %212 : vector<1x8x8xbf16> to vector<8x8xbf16>
      %214 = vector.shape_cast %211 : vector<8x8xbf16> to vector<1x8x8xbf16>
      tpu.vector_store %arg7[%c0_126, %c0_127, %c16], %214 {strides = array<i32>} : memref<1x8x32xbf16, #tpu.memory_space<vmem>>, vector<1x8x8xbf16>,
      %c3_128 = arith.constant 3 : index
      %c0_129 = arith.constant 0 : index
      %c0_130 = arith.constant 0 : index
      %215 = vector.load %arg9[%c3_128, %c0_129, %c0_130] : memref<4x8x1xf32, #tpu.memory_space<vmem>>, vector<1x8x1xf32>
      %216 = vector.shape_cast %215 : vector<1x8x1xf32> to vector<8x1xf32>
      %217 = tpu.reciprocal %216 {approx = true} : vector<8x1xf32> -> vector<8x1xf32>
      %c3_131 = arith.constant 3 : index
      %c0_132 = arith.constant 0 : index
      %c0_133 = arith.constant 0 : index
      %218 = vector.load %arg10[%c3_131, %c0_132, %c0_133] : memref<4x8x8xf32, #tpu.memory_space<vmem>>, vector<1x8x8xf32>
      %219 = vector.shape_cast %218 : vector<1x8x8xf32> to vector<8x8xf32>
      %220 = vector.broadcast %217 : vector<8x1xf32> to vector<8x8xf32>
      %221 = arith.mulf %219, %220 : vector<8x8xf32>
      %222 = arith.truncf %221 : vector<8x8xf32> to vector<8x8xbf16>
      %c0_134 = arith.constant 0 : index
      %c0_135 = arith.constant 0 : index
      %c24 = arith.constant 24 : index
      %223 = vector.load %arg7[%c0_134, %c0_135, %c24] : memref<1x8x32xbf16, #tpu.memory_space<vmem>>, vector<1x8x8xbf16>
      %224 = vector.shape_cast %223 : vector<1x8x8xbf16> to vector<8x8xbf16>
      %225 = vector.shape_cast %222 : vector<8x8xbf16> to vector<1x8x8xbf16>
      tpu.vector_store %arg7[%c0_134, %c0_135, %c24], %225 {strides = array<i32>} : memref<1x8x32xbf16, #tpu.memory_space<vmem>>, vector<1x8x8xbf16>,
    } else {
    }
    return
  }
  func.func @transform_0(%arg0: i32, %arg1: i32, %arg2: memref<1xi32, #tpu.memory_space<smem>>, %arg3: memref<1xi32, #tpu.memory_space<smem>>) -> (i32, i32, i32) {
    %0 = arith.index_cast %arg1 : i32 to index
    %1 = memref.load %arg2[%0] : memref<1xi32, #tpu.memory_space<smem>>
    %c0_i32 = arith.constant 0 : i32
    %c0_i32_0 = arith.constant 0 : i32
    return %arg0, %1, %c0_i32 : i32, i32, i32
  }
  func.func @transform_1(%arg0: i32, %arg1: i32, %arg2: memref<1xi32, #tpu.memory_space<smem>>, %arg3: memref<1xi32, #tpu.memory_space<smem>>) -> (i32, i32, i32) {
    %0 = arith.index_cast %arg1 : i32 to index
    %1 = memref.load %arg3[%0] : memref<1xi32, #tpu.memory_space<smem>>
    %c0_i32 = arith.constant 0 : i32
    %c0_i32_0 = arith.constant 0 : i32
    return %arg0, %1, %c0_i32 : i32, i32, i32
  }
  func.func @transform_2(%arg0: i32, %arg1: i32, %arg2: memref<1xi32, #tpu.memory_space<smem>>, %arg3: memref<1xi32, #tpu.memory_space<smem>>) -> (i32, i32, i32) {
    %0 = arith.index_cast %arg1 : i32 to index
    %1 = memref.load %arg3[%0] : memref<1xi32, #tpu.memory_space<smem>>
    %c0_i32 = arith.constant 0 : i32
    %c0_i32_0 = arith.constant 0 : i32
    return %arg0, %1, %c0_i32 : i32, i32, i32
  }
  func.func @transform_3(%arg0: i32, %arg1: i32, %arg2: memref<1xi32, #tpu.memory_space<smem>>, %arg3: memref<1xi32, #tpu.memory_space<smem>>) -> (i32, i32, i32) {
    %0 = arith.index_cast %arg1 : i32 to index
    %1 = memref.load %arg2[%0] : memref<1xi32, #tpu.memory_space<smem>>
    %c0_i32 = arith.constant 0 : i32
    %c0_i32_0 = arith.constant 0 : i32
    return %arg0, %1, %c0_i32 : i32, i32, i32
  }
}

module attributes {stable_mosaic.version = 11 : i64} {
  func.func @_res_linear_simple_kernel(%arg0: i32, %arg1: i32, %arg2: memref<16x32xbf16, #tpu.memory_space<vmem>>, %arg3: memref<32x32xbf16, #tpu.memory_space<vmem>>, %arg4: memref<1x32xf32, #tpu.memory_space<vmem>>, %arg5: memref<16x32xf32, #tpu.memory_space<vmem>>, %arg6: memref<16x32xf32, #tpu.memory_space<vmem>>) attributes {dimension_semantics = [#tpu.dimension_semantics<parallel>, #tpu.dimension_semantics<parallel>], iteration_bounds = array<i64: 1, 1>, scalar_prefetch = 0 : i64, scratch_operands = 0 : i64, tpu.core_type = #tpu.core_type<tc>, window_params = [{transform_indices = @transform_0, window_bounds = array<i64: 16, 32>}, {transform_indices = @transform_1, window_bounds = array<i64: 32, 32>}, {transform_indices = @transform_2, window_bounds = array<i64: 1, 32>}, {transform_indices = @transform_3, window_bounds = array<i64: 16, 32>}, {transform_indices = @transform_4, window_bounds = array<i64: 16, 32>}]} {
    %c0 = arith.constant 0 : index
    %c0_0 = arith.constant 0 : index
    %0 = vector.load %arg2[%c0, %c0_0] : memref<16x32xbf16, #tpu.memory_space<vmem>>, vector<16x32xbf16>
    %c0_1 = arith.constant 0 : index
    %c0_2 = arith.constant 0 : index
    %1 = vector.load %arg3[%c0_1, %c0_2] : memref<32x32xbf16, #tpu.memory_space<vmem>>, vector<32x32xbf16>
    %cst = arith.constant dense<0.000000e+00> : vector<16x32xf32>
    %2 = tpu.matmul %0, %1, %cst {dimension_numbers = #tpu.dot_dimension_numbers<[1], [0], [0], [1], [0, 0, 1, 1], [], []>} : vector<16x32xbf16>, vector<32x32xbf16>, vector<16x32xf32> -> vector<16x32xf32>
    %c0_3 = arith.constant 0 : index
    %c0_4 = arith.constant 0 : index
    %3 = vector.load %arg4[%c0_3, %c0_4] : memref<1x32xf32, #tpu.memory_space<vmem>>, vector<1x32xf32>
    %4 = vector.broadcast %3 : vector<1x32xf32> to vector<16x32xf32>
    %5 = arith.addf %2, %4 : vector<16x32xf32>
    %c0_5 = arith.constant 0 : index
    %c0_6 = arith.constant 0 : index
    %6 = vector.load %arg5[%c0_5, %c0_6] : memref<16x32xf32, #tpu.memory_space<vmem>>, vector<16x32xf32>
    %7 = arith.addf %5, %6 : vector<16x32xf32>
    %c0_7 = arith.constant 0 : index
    %c0_8 = arith.constant 0 : index
    %8 = vector.load %arg6[%c0_7, %c0_8] : memref<16x32xf32, #tpu.memory_space<vmem>>, vector<16x32xf32>
    tpu.vector_store %arg6[%c0_7, %c0_8], %7 {strides = array<i32>} : memref<16x32xf32, #tpu.memory_space<vmem>>, vector<16x32xf32>,
    return
  }
  func.func @transform_0(%arg0: i32, %arg1: i32) -> (i32, i32) {
    %c0_i32 = arith.constant 0 : i32
    %c0_i32_0 = arith.constant 0 : i32
    return %arg0, %c0_i32 : i32, i32
  }
  func.func @transform_1(%arg0: i32, %arg1: i32) -> (i32, i32) {
    %c0_i32 = arith.constant 0 : i32
    %c0_i32_0 = arith.constant 0 : i32
    return %c0_i32, %arg1 : i32, i32
  }
  func.func @transform_2(%arg0: i32, %arg1: i32) -> (i32, i32) {
    %c0_i32 = arith.constant 0 : i32
    %c0_i32_0 = arith.constant 0 : i32
    return %c0_i32, %arg1 : i32, i32
  }
  func.func @transform_3(%arg0: i32, %arg1: i32) -> (i32, i32) {
    %c0_i32 = arith.constant 0 : i32
    return %arg0, %arg1 : i32, i32
  }
  func.func @transform_4(%arg0: i32, %arg1: i32) -> (i32, i32) {
    %c0_i32 = arith.constant 0 : i32
    return %arg0, %arg1 : i32, i32
  }
}

module attributes {stable_mosaic.version = 11 : i64} {
  func.func @_res_linear_simple_kernel(%arg0: i32, %arg1: i32, %arg2: memref<16x128xbf16, #tpu.memory_space<vmem>>, %arg3: memref<128x32xbf16, #tpu.memory_space<vmem>>, %arg4: memref<1x32xf32, #tpu.memory_space<vmem>>, %arg5: memref<16x32xf32, #tpu.memory_space<vmem>>, %arg6: memref<16x32xf32, #tpu.memory_space<vmem>>) attributes {dimension_semantics = [#tpu.dimension_semantics<parallel>, #tpu.dimension_semantics<parallel>], iteration_bounds = array<i64: 1, 1>, scalar_prefetch = 0 : i64, scratch_operands = 0 : i64, tpu.core_type = #tpu.core_type<tc>, window_params = [{transform_indices = @transform_0, window_bounds = array<i64: 16, 128>}, {transform_indices = @transform_1, window_bounds = array<i64: 128, 32>}, {transform_indices = @transform_2, window_bounds = array<i64: 1, 32>}, {transform_indices = @transform_3, window_bounds = array<i64: 16, 32>}, {transform_indices = @transform_4, window_bounds = array<i64: 16, 32>}]} {
    %c0 = arith.constant 0 : index
    %c0_0 = arith.constant 0 : index
    %0 = vector.load %arg2[%c0, %c0_0] : memref<16x128xbf16, #tpu.memory_space<vmem>>, vector<16x128xbf16>
    %c0_1 = arith.constant 0 : index
    %c0_2 = arith.constant 0 : index
    %1 = vector.load %arg3[%c0_1, %c0_2] : memref<128x32xbf16, #tpu.memory_space<vmem>>, vector<128x32xbf16>
    %cst = arith.constant dense<0.000000e+00> : vector<16x32xf32>
    %2 = tpu.matmul %0, %1, %cst {dimension_numbers = #tpu.dot_dimension_numbers<[1], [0], [0], [1], [0, 0, 1, 1], [], []>} : vector<16x128xbf16>, vector<128x32xbf16>, vector<16x32xf32> -> vector<16x32xf32>
    %c0_3 = arith.constant 0 : index
    %c0_4 = arith.constant 0 : index
    %3 = vector.load %arg4[%c0_3, %c0_4] : memref<1x32xf32, #tpu.memory_space<vmem>>, vector<1x32xf32>
    %4 = vector.broadcast %3 : vector<1x32xf32> to vector<16x32xf32>
    %5 = arith.addf %2, %4 : vector<16x32xf32>
    %c0_5 = arith.constant 0 : index
    %c0_6 = arith.constant 0 : index
    %6 = vector.load %arg5[%c0_5, %c0_6] : memref<16x32xf32, #tpu.memory_space<vmem>>, vector<16x32xf32>
    %7 = arith.addf %5, %6 : vector<16x32xf32>
    %c0_7 = arith.constant 0 : index
    %c0_8 = arith.constant 0 : index
    %8 = vector.load %arg6[%c0_7, %c0_8] : memref<16x32xf32, #tpu.memory_space<vmem>>, vector<16x32xf32>
    tpu.vector_store %arg6[%c0_7, %c0_8], %7 {strides = array<i32>} : memref<16x32xf32, #tpu.memory_space<vmem>>, vector<16x32xf32>,
    return
  }
  func.func @transform_0(%arg0: i32, %arg1: i32) -> (i32, i32) {
    %c0_i32 = arith.constant 0 : i32
    %c0_i32_0 = arith.constant 0 : i32
    return %arg0, %c0_i32 : i32, i32
  }
  func.func @transform_1(%arg0: i32, %arg1: i32) -> (i32, i32) {
    %c0_i32 = arith.constant 0 : i32
    %c0_i32_0 = arith.constant 0 : i32
    return %c0_i32, %arg1 : i32, i32
  }
  func.func @transform_2(%arg0: i32, %arg1: i32) -> (i32, i32) {
    %c0_i32 = arith.constant 0 : i32
    %c0_i32_0 = arith.constant 0 : i32
    return %c0_i32, %arg1 : i32, i32
  }
  func.func @transform_3(%arg0: i32, %arg1: i32) -> (i32, i32) {
    %c0_i32 = arith.constant 0 : i32
    return %arg0, %arg1 : i32, i32
  }
  func.func @transform_4(%arg0: i32, %arg1: i32) -> (i32, i32) {
    %c0_i32 = arith.constant 0 : i32
    return %arg0, %arg1 : i32, i32
  }
}

module attributes {stable_mosaic.version = 11 : i64} {
  func.func @_ln_lmhead_kernel(%arg0: i32, %arg1: i32, %arg2: memref<16x32xf32, #tpu.memory_space<vmem>>, %arg3: memref<1x32xf32, #tpu.memory_space<vmem>>, %arg4: memref<1x32xf32, #tpu.memory_space<vmem>>, %arg5: memref<128x32xbf16, #tpu.memory_space<vmem>>, %arg6: memref<16x128xf32, #tpu.memory_space<vmem>>, %arg7: memref<16x32xbf16, #tpu.memory_space<vmem>>) attributes {dimension_semantics = [#tpu.dimension_semantics<parallel>, #tpu.dimension_semantics<arbitrary>], iteration_bounds = array<i64: 1, 1>, scalar_prefetch = 0 : i64, scratch_operands = 1 : i64, tpu.core_type = #tpu.core_type<tc>, window_params = [{transform_indices = @transform_0, window_bounds = array<i64: 16, 32>}, {pipeline_mode = #tpu.pipeline_mode<synchronous>, transform_indices = @transform_1, window_bounds = array<i64: 1, 32>}, {pipeline_mode = #tpu.pipeline_mode<synchronous>, transform_indices = @transform_2, window_bounds = array<i64: 1, 32>}, {transform_indices = @transform_3, window_bounds = array<i64: 128, 32>}, {transform_indices = @transform_4, window_bounds = array<i64: 16, 128>}]} {
    %c0_i32 = arith.constant 0 : i32
    %0 = arith.cmpi eq, %arg1, %c0_i32 : i32
    %1 = arith.extui %0 : i1 to i32
    %c0_i32_0 = arith.constant 0 : i32
    %2 = arith.cmpi ne, %1, %c0_i32_0 : i32
    scf.if %2 {
      %c0_6 = arith.constant 0 : index
      %c0_7 = arith.constant 0 : index
      %7 = vector.load %arg2[%c0_6, %c0_7] : memref<16x32xf32, #tpu.memory_space<vmem>>, vector<16x32xf32>
      %c0_8 = arith.constant 0 : index
      %c0_9 = arith.constant 0 : index
      %8 = vector.load %arg3[%c0_8, %c0_9] : memref<1x32xf32, #tpu.memory_space<vmem>>, vector<1x32xf32>
      %c0_10 = arith.constant 0 : index
      %c0_11 = arith.constant 0 : index
      %9 = vector.load %arg4[%c0_10, %c0_11] : memref<1x32xf32, #tpu.memory_space<vmem>>, vector<1x32xf32>
      %cst_12 = arith.constant dense<0.000000e+00> : vector<16xf32>
      %10 = vector.multi_reduction <add>, %7, %cst_12 [1] : vector<16x32xf32> to vector<16xf32>
      %11 = vector.shape_cast %10 : vector<16xf32> to vector<16x1xf32>
      %cst_13 = arith.constant 3.200000e+01 : f32
      %12 = vector.broadcast %cst_13 : f32 to vector<16x1xf32>
      %13 = arith.divf %11, %12 : vector<16x1xf32>
      %14 = vector.broadcast %13 : vector<16x1xf32> to vector<16x32xf32>
      %15 = arith.subf %7, %14 : vector<16x32xf32>
      %16 = arith.mulf %15, %15 : vector<16x32xf32>
      %cst_14 = arith.constant dense<0.000000e+00> : vector<16xf32>
      %17 = vector.multi_reduction <add>, %16, %cst_14 [1] : vector<16x32xf32> to vector<16xf32>
      %18 = vector.shape_cast %17 : vector<16xf32> to vector<16x1xf32>
      %cst_15 = arith.constant 3.200000e+01 : f32
      %19 = vector.broadcast %cst_15 : f32 to vector<16x1xf32>
      %20 = arith.divf %18, %19 : vector<16x1xf32>
      %21 = vector.broadcast %13 : vector<16x1xf32> to vector<16x32xf32>
      %22 = arith.subf %7, %21 : vector<16x32xf32>
      %cst_16 = arith.constant 9.99999974E-6 : f32
      %23 = vector.broadcast %cst_16 : f32 to vector<16x1xf32>
      %24 = arith.addf %20, %23 : vector<16x1xf32>
      %25 = math.rsqrt %24 : vector<16x1xf32>
      %26 = vector.broadcast %25 : vector<16x1xf32> to vector<16x32xf32>
      %27 = arith.mulf %22, %26 : vector<16x32xf32>
      %28 = vector.broadcast %8 : vector<1x32xf32> to vector<16x32xf32>
      %29 = arith.mulf %27, %28 : vector<16x32xf32>
      %30 = vector.broadcast %9 : vector<1x32xf32> to vector<16x32xf32>
      %31 = arith.addf %29, %30 : vector<16x32xf32>
      %32 = arith.truncf %31 : vector<16x32xf32> to vector<16x32xbf16>
      %c0_17 = arith.constant 0 : index
      %c0_18 = arith.constant 0 : index
      %33 = vector.load %arg7[%c0_17, %c0_18] : memref<16x32xbf16, #tpu.memory_space<vmem>>, vector<16x32xbf16>
      tpu.vector_store %arg7[%c0_17, %c0_18], %32 {strides = array<i32>} : memref<16x32xbf16, #tpu.memory_space<vmem>>, vector<16x32xbf16>,
    } else {
    }
    %c0 = arith.constant 0 : index
    %c0_1 = arith.constant 0 : index
    %3 = vector.load %arg7[%c0, %c0_1] : memref<16x32xbf16, #tpu.memory_space<vmem>>, vector<16x32xbf16>
    %c0_2 = arith.constant 0 : index
    %c0_3 = arith.constant 0 : index
    %4 = vector.load %arg5[%c0_2, %c0_3] : memref<128x32xbf16, #tpu.memory_space<vmem>>, vector<128x32xbf16>
    %cst = arith.constant dense<0.000000e+00> : vector<16x128xf32>
    %5 = tpu.matmul %3, %4, %cst {dimension_numbers = #tpu.dot_dimension_numbers<[1], [1], [0], [0], [0, 0, 1, 0], [], []>} : vector<16x32xbf16>, vector<128x32xbf16>, vector<16x128xf32> -> vector<16x128xf32>
    %c0_4 = arith.constant 0 : index
    %c0_5 = arith.constant 0 : index
    %6 = vector.load %arg6[%c0_4, %c0_5] : memref<16x128xf32, #tpu.memory_space<vmem>>, vector<16x128xf32>
    tpu.vector_store %arg6[%c0_4, %c0_5], %5 {strides = array<i32>} : memref<16x128xf32, #tpu.memory_space<vmem>>, vector<16x128xf32>,
    return
  }
  func.func @transform_0(%arg0: i32, %arg1: i32) -> (i32, i32) {
    %c0_i32 = arith.constant 0 : i32
    %c0_i32_0 = arith.constant 0 : i32
    return %arg0, %c0_i32 : i32, i32
  }
  func.func @transform_1(%arg0: i32, %arg1: i32) -> (i32, i32) {
    %c0_i32 = arith.constant 0 : i32
    %c0_i32_0 = arith.constant 0 : i32
    %c0_i32_1 = arith.constant 0 : i32
    return %c0_i32, %c0_i32_0 : i32, i32
  }
  func.func @transform_2(%arg0: i32, %arg1: i32) -> (i32, i32) {
    %c0_i32 = arith.constant 0 : i32
    %c0_i32_0 = arith.constant 0 : i32
    %c0_i32_1 = arith.constant 0 : i32
    return %c0_i32, %c0_i32_0 : i32, i32
  }
  func.func @transform_3(%arg0: i32, %arg1: i32) -> (i32, i32) {
    %c0_i32 = arith.constant 0 : i32
    %c0_i32_0 = arith.constant 0 : i32
    return %arg1, %c0_i32 : i32, i32
  }
  func.func @transform_4(%arg0: i32, %arg1: i32) -> (i32, i32) {
    %c0_i32 = arith.constant 0 : i32
    return %arg0, %arg1 : i32, i32
  }
}

</mosaic_0001>

<llo_original>
// kernel: _lambda_.13
$region0: #{_lambda_.13}
  #allocation0 [shape = 'u32[]', space=smem, size = 0x4, offset = 0x4, fixed_abs, tag = 'smem constant byte address 0x4 - core index']
  #allocation1 [shape = 'u32[144,128]{1,0:T(1,128)}', space=vmem, size = 0x12000, scoped, tag = 'internal scratch']
  %s0 = inlined_call_operand.vmem [shape: bf16[16,32], index: 0, kind: input, shape index: {}]
  %s1 = inlined_call_operand.vmem [shape: bf16[32,32], index: 1, kind: input, shape index: {}]
  %s2 = inlined_call_operand.vmem [shape: f32[1,32], index: 2, kind: input, shape index: {}]
  %s3 = inlined_call_operand.vmem [shape: f32[16,32], index: 3, kind: input, shape index: {}]
  %s4 = inlined_call_operand.vmem [shape: f32[16,32], index: 4, kind: output, shape index: {}]
  %s5 = sld [smem:[#allocation0]]
  $region26: #{_lambda_.13} parent=0
    _
  %s7 = ssub.s32 1, %s5
  %s8 = scalar_select 0, %s7, %s5
  // Predicated region
  $region2: #{_lambda_.13} parent=0 // pred_check
    _
  $region3: #{_lambda_.13} parent=0 // pred_check_branch
    %10 = sbr.rel (0) target = $region5
  $region4: #{_lambda_.13} parent=0 // pred_region
    _
  $region5: #{_lambda_.13} parent=0 // pred_fallthru
    _
  // Predicated region
  $region6: #{_lambda_.13} parent=0 // pred_check
    _
  $region7: #{_lambda_.13} parent=0 // pred_check_branch
    %12 = sbr.rel (0) target = $region9
  $region8: #{_lambda_.13} parent=0 // pred_region
    _
  $region9: #{_lambda_.13} parent=0 // pred_fallthru
    _
  // Predicated region
  $region10: #{_lambda_.13} parent=0 // pred_check
    _
  $region11: #{_lambda_.13} parent=0 // pred_check_branch
    %14 = sbr.rel (0) target = $region13
  $region12: #{_lambda_.13} parent=0 // pred_region
    _
  $region13: #{_lambda_.13} parent=0 // pred_fallthru
    _
  // Predicated region
  $region14: #{_lambda_.13} parent=0 // pred_check
    _
  $region15: #{_lambda_.13} parent=0 // pred_check_branch
    %16 = sbr.rel (0) target = $region17
  $region16: #{_lambda_.13} parent=0 // pred_region
    _
  $region17: #{_lambda_.13} parent=0 // pred_fallthru
    _
  %v18 = vld [vmem:[%s0] sm:$0xf]
  %v19 = vld [vmem:[%s0 + $0x4] sm:$0xf]
  %v20 = vld [vmem:[%s1] sm:$0xf]
  %v21 = vld [vmem:[%s1 + $0x4] sm:$0xf]
  %v22 = vld [vmem:[%s1 + $0x8] sm:$0xf]
  %v23 = vld [vmem:[%s1 + $0xc] sm:$0xf]
  %v24 = vld [vmem:[%s2] sm:$0x1]
  %v26 = vlaneseq
  %v27 = vshrl.u32 %v26, 7
  %v28 = vsub.s32 0, %v27
  %v29 = vrot.slane %v24, %v28
  %v33 = vunpack.c.l.b16 %v18
  %v34 = vunpack.c.l.b16 %v19
  %v35 = vpack.c.b16 %v34, %v33
  %v40 = vunpack.c.l.b16 %v20
  %v41 = vunpack.c.l.b16 %v21
  %v42 = vunpack.c.l.b16 %v22
  %v43 = vunpack.c.l.b16 %v23
  %v44 = vpack.c.b16 %v41, %v40
  %v45 = vpack.c.b16 %v43, %v42
  %vm48 = vcmask 261120
  %v50 = vsel %vm48, %v35, 0
  %52 = vmatprep.subr.bf16.mxu0 0
  %53 = vmatpush1.bf16.msra.mxu0 %v44
  %54 = vmatprep.subr.bf16.mxu0 0
  %55 = vmatpush1.bf16.msra.mxu0 %v45
  %56 = vmatprep.subr.bf16.mxu0 0
  %57 = vmatpush1.bf16.msra.mxu0 0
  %58 = vmatprep.subr.bf16.mxu0 0
  %59 = vmatpush1.bf16.msra.mxu0 0
  %60 = vmatprep.subr.bf16.mxu0 0
  %61 = vmatpush1.bf16.msra.mxu0 0
  %62 = vmatprep.subr.bf16.mxu0 0
  %63 = vmatpush1.bf16.msra.mxu0 0
  %64 = vmatprep.subr.bf16.mxu0 0
  %65 = vmatpush1.bf16.msra.mxu0 0
  %66 = vmatprep.subr.bf16.mxu0 0
  %67 = vmatpush1.bf16.msra.mxu0 0
  %68 = vmatprep.subr.bf16.mxu0 0
  %69 = vmatpush1.bf16.msra.mxu0 0
  %70 = vmatprep.subr.bf16.mxu0 0
  %71 = vmatpush1.bf16.msra.mxu0 0
  %72 = vmatprep.subr.bf16.mxu0 0
  %73 = vmatpush1.bf16.msra.mxu0 0
  %74 = vmatprep.subr.bf16.mxu0 0
  %75 = vmatpush1.bf16.msra.mxu0 0
  %76 = vmatprep.subr.bf16.mxu0 0
  %77 = vmatpush1.bf16.msra.mxu0 0
  %78 = vmatprep.subr.bf16.mxu0 0
  %79 = vmatpush1.bf16.msra.mxu0 0
  %80 = vmatprep.subr.bf16.mxu0 0
  %81 = vmatpush1.bf16.msra.mxu0 0
  %82 = vmatprep.subr.bf16.mxu0 0
  %83 = vmatpush1.bf16.msra.mxu0 0
  %84 = vmatprep.mubr.bf16.mxu0 0
  %85 = vmatmul.mubr.bf16.gmra.mrb[0].mxu0 %v50
  %v86 = vpop.f32.mrb[0].mxu0
  %v87 = vadd.f32 %v29, %v86
  %v88 = vpop.f32.mrb[0].mxu0
  %v89 = vpop.f32.mrb[0].mxu0
  %v90 = vadd.f32 %v29, %v89
  %v91 = vpop.f32.mrb[0].mxu0
  %92 = vdwg.mxu0
  %v93 = vld [vmem:[%s3] sm:$0xff]
  %v94 = vld [vmem:[%s3 + $0x8] sm:$0xff]
  %v95 = vadd.f32 %v87, %v93
  %v96 = vadd.f32 %v90, %v94
  %97 = vst.msk [vmem:[%s4] sm:$0xff] %vm48, %v95
  %98 = vst.msk [vmem:[%s4 + $0x8] sm:$0xff] %vm48, %v96
  // Predicated region
  $region18: #{_lambda_.13} parent=0 // pred_check
    _
  $region19: #{_lambda_.13} parent=0 // pred_check_branch
    %100 = sbr.rel (0) target = $region21
  $region20: #{_lambda_.13} parent=0 // pred_region
    _
  $region21: #{_lambda_.13} parent=0 // pred_fallthru
    _
  // Predicated region
  $region22: #{_lambda_.13} parent=0 // pred_check
    _
  $region23: #{_lambda_.13} parent=0 // pred_check_branch
    %102 = sbr.rel (0) target = $region25
  $region24: #{_lambda_.13} parent=0 // pred_region
    _
  $region25: #{_lambda_.13} parent=0 // pred_fallthru
    _

// kernel: _lambda_.14
$region0: #{_lambda_.14}
  #allocation0 [shape = 'u32[]', space=smem, size = 0x4, offset = 0x4, fixed_abs, tag = 'smem constant byte address 0x4 - core index']
  #allocation1 [shape = 'u32[144,128]{1,0:T(1,128)}', space=vmem, size = 0x12000, scoped, tag = 'internal scratch']
  %s0 = inlined_call_operand.vmem [shape: f32[16,32], index: 0, kind: input, shape index: {}]
  %s1 = inlined_call_operand.vmem [shape: f32[1,32], index: 1, kind: input, shape index: {}]
  %s2 = inlined_call_operand.vmem [shape: f32[1,32], index: 2, kind: input, shape index: {}]
  %s3 = inlined_call_operand.vmem [shape: bf16[32,128], index: 3, kind: input, shape index: {}]
  %s4 = inlined_call_operand.vmem [shape: f32[1,128], index: 4, kind: input, shape index: {}]
  %s5 = inlined_call_operand.vmem [shape: bf16[16,128], index: 5, kind: output, shape index: {}]
  %s6 = sld [smem:[#allocation0]]
  $region30: #{_lambda_.14} parent=0
    _
  %s8 = ssub.s32 1, %s6
  %s9 = scalar_select 0, %s8, %s6
  // Predicated region
  $region2: #{_lambda_.14} parent=0 // pred_check
    _
  $region3: #{_lambda_.14} parent=0 // pred_check_branch
    %11 = sbr.rel (0) target = $region5
  $region4: #{_lambda_.14} parent=0 // pred_region
    _
  $region5: #{_lambda_.14} parent=0 // pred_fallthru
    _
  // Predicated region
  $region6: #{_lambda_.14} parent=0 // pred_check
    _
  $region7: #{_lambda_.14} parent=0 // pred_check_branch
    %13 = sbr.rel (0) target = $region9
  $region8: #{_lambda_.14} parent=0 // pred_region
    _
  $region9: #{_lambda_.14} parent=0 // pred_fallthru
    _
  // Predicated region
  $region10: #{_lambda_.14} parent=0 // pred_check
    _
  $region11: #{_lambda_.14} parent=0 // pred_check_branch
    %15 = sbr.rel (0) target = $region13
  $region12: #{_lambda_.14} parent=0 // pred_region
    _
  $region13: #{_lambda_.14} parent=0 // pred_fallthru
    _
  // Predicated region
  $region14: #{_lambda_.14} parent=0 // pred_check
    _
  $region15: #{_lambda_.14} parent=0 // pred_check_branch
    %17 = sbr.rel (0) target = $region17
  $region16: #{_lambda_.14} parent=0 // pred_region
    _
  $region17: #{_lambda_.14} parent=0 // pred_fallthru
    _
  // Predicated region
  $region18: #{_lambda_.14} parent=0 // pred_check
    _
  $region19: #{_lambda_.14} parent=0 // pred_check_branch
    %19 = sbr.rel (0) target = $region21
  $region20: #{_lambda_.14} parent=0 // pred_region
    _
  $region21: #{_lambda_.14} parent=0 // pred_fallthru
    _
  %v21 = vld [vmem:[%s0] sm:$0xff]
  %v22 = vld [vmem:[%s0 + $0x8] sm:$0xff]
  %v23 = vld [vmem:[%s1] sm:$0x1]
  %v24 = vld [vmem:[%s2] sm:$0x1]
  %vm25 = vcmask 261120
  %v26 = vsel %vm25, %v21, 0.0
  %27 = vadd.xlane.f32.xlu0 %v26
  %v28 = vpop.xlane.xlu0 %27
  %v29 = vsel %vm25, %v22, 0.0
  %30 = vadd.xlane.f32.xlu0 %v29
  %v31 = vpop.xlane.xlu0 %30
  %v32 = vrcp.pop 32.0
  %v33 = vmul.f32 %v28, %v32
  %v34 = vmul.f32 %v31, %v32
  %v35 = vsub.f32 %v21, %v33
  %v36 = vsub.f32 %v22, %v34
  %v37 = vmul.f32 %v35, %v35
  %v38 = vmul.f32 %v36, %v36
  %v39 = vsel %vm25, %v37, 0.0
  %40 = vadd.xlane.f32.xlu0 %v39
  %v41 = vpop.xlane.xlu0 %40
  %v42 = vsel %vm25, %v38, 0.0
  %43 = vadd.xlane.f32.xlu0 %v42
  %v44 = vpop.xlane.xlu0 %43
  %v45 = vmul.f32 %v41, %v32
  %v46 = vmul.f32 %v44, %v32
  %v47 = vadd.f32 %v45, 1e-05
  %v48 = vadd.f32 %v46, 1e-05
  %v49 = vrsqrt.pop %v47
  %v50 = vrsqrt.pop %v48
  %v51 = vmul.f32 %v35, %v49
  %v52 = vmul.f32 %v36, %v50
  %v54 = vlaneseq
  %v55 = vshrl.u32 %v54, 7
  %v56 = vsub.s32 0, %v55
  %v57 = vrot.slane %v23, %v56
  %v59 = vmul.f32 %v51, %v57
  %v60 = vmul.f32 %v52, %v57
  %v62 = vlaneseq
  %v63 = vshrl.u32 %v62, 7
  %v64 = vsub.s32 0, %v63
  %v65 = vrot.slane %v24, %v64
  %v67 = vadd.f32 %v59, %v65
  %v68 = vadd.f32 %v60, %v65
  %v69 = vpack.c.bf16 %v68, %v67
  %v70 = vld [vmem:[%s3] sm:$0xf]
  %v71 = vld [vmem:[%s3 + $0x4] sm:$0xf]
  %v72 = vld [vmem:[%s3 + $0x8] sm:$0xf]
  %v73 = vld [vmem:[%s3 + $0xc] sm:$0xf]
  %v74 = vld [vmem:[%s4] sm:$0x1]
  %v76 = vlaneseq
  %v77 = vshrl.u32 %v76, 7
  %v78 = vsub.s32 0, %v77
  %v79 = vrot.slane %v74, %v78
  %v85 = vunpack.c.l.b16 %v70
  %v86 = vunpack.c.l.b16 %v71
  %v87 = vunpack.c.l.b16 %v72
  %v88 = vunpack.c.l.b16 %v73
  %v89 = vpack.c.b16 %v86, %v85
  %v90 = vpack.c.b16 %v88, %v87
  %v94 = vsel %vm25, %v69, 0
  %96 = vmatprep.subr.bf16.mxu0 0
  %97 = vmatpush1.bf16.msra.mxu0 %v89
  %98 = vmatprep.subr.bf16.mxu0 0
  %99 = vmatpush1.bf16.msra.mxu0 %v90
  %100 = vmatprep.subr.bf16.mxu0 0
  %101 = vmatpush1.bf16.msra.mxu0 0
  %102 = vmatprep.subr.bf16.mxu0 0
  %103 = vmatpush1.bf16.msra.mxu0 0
  %104 = vmatprep.subr.bf16.mxu0 0
  %105 = vmatpush1.bf16.msra.mxu0 0
  %106 = vmatprep.subr.bf16.mxu0 0
  %107 = vmatpush1.bf16.msra.mxu0 0
  %108 = vmatprep.subr.bf16.mxu0 0
  %109 = vmatpush1.bf16.msra.mxu0 0
  %110 = vmatprep.subr.bf16.mxu0 0
  %111 = vmatpush1.bf16.msra.mxu0 0
  %112 = vmatprep.subr.bf16.mxu0 0
  %113 = vmatpush1.bf16.msra.mxu0 0
  %114 = vmatprep.subr.bf16.mxu0 0
  %115 = vmatpush1.bf16.msra.mxu0 0
  %116 = vmatprep.subr.bf16.mxu0 0
  %117 = vmatpush1.bf16.msra.mxu0 0
  %118 = vmatprep.subr.bf16.mxu0 0
  %119 = vmatpush1.bf16.msra.mxu0 0
  %120 = vmatprep.subr.bf16.mxu0 0
  %121 = vmatpush1.bf16.msra.mxu0 0
  %122 = vmatprep.subr.bf16.mxu0 0
  %123 = vmatpush1.bf16.msra.mxu0 0
  %124 = vmatprep.subr.bf16.mxu0 0
  %125 = vmatpush1.bf16.msra.mxu0 0
  %126 = vmatprep.subr.bf16.mxu0 0
  %127 = vmatpush1.bf16.msra.mxu0 0
  %128 = vmatprep.mubr.bf16.mxu0 0
  %129 = vmatmul.mubr.bf16.gmra.mrb[0].mxu0 %v94
  %v130 = vpop.f32.mrb[0].mxu0
  %v131 = vadd.f32 %v79, %v130
  %v132 = vpop.f32.mrb[0].mxu0
  %v133 = vpop.f32.mrb[0].mxu0
  %v134 = vadd.f32 %v79, %v133
  %v135 = vpop.f32.mrb[0].mxu0
  %136 = vdwg.mxu0
  %v137 = vmul.f32 %v131, %v131
  %v138 = vmul.f32 %v134, %v134
  %v139 = vmul.f32 %v131, %v137
  %v140 = vmul.f32 %v134, %v138
  %v141 = vmul.f32 %v139, 0.044715
  %v142 = vmul.f32 %v140, 0.044715
  %v143 = vadd.f32 %v131, %v141
  %v144 = vadd.f32 %v134, %v142
  %v145 = vmul.f32 %v143, 0.7978846
  %v146 = vmul.f32 %v144, 0.7978846
  %v147 = vtanh.pop %v145
  %v148 = vtanh.pop %v146
  %v149 = vadd.f32 %v147, 1.0
  %v150 = vadd.f32 %v148, 1.0
  %v151 = vmul.f32 %v149, 0.5
  %v152 = vmul.f32 %v150, 0.5
  %v153 = vmul.f32 %v131, %v151
  %v154 = vmul.f32 %v134, %v152
  %v155 = vpack.c.bf16 %v154, %v153
  %v157 = vunpack.c.l.b16 %v155
  %v158 = vunpack.c.h.b16 %v155
  %v159 = vpack.c.b16 %v157, %v157
  %v160 = vpack.c.b16 %v158, %v158
  %163 = vst [vmem:[%s5] sm:$0xf] %v159
  %164 = vst [vmem:[%s5 + $0x4] sm:$0xf] %v160
  // Predicated region
  $region22: #{_lambda_.14} parent=0 // pred_check
    _
  $region23: #{_lambda_.14} parent=0 // pred_check_branch
    %166 = sbr.rel (0) target = $region25
  $region24: #{_lambda_.14} parent=0 // pred_region
    _
  $region25: #{_lambda_.14} parent=0 // pred_fallthru
    _
  // Predicated region
  $region26: #{_lambda_.14} parent=0 // pred_check
    _
  $region27: #{_lambda_.14} parent=0 // pred_check_branch
    %168 = sbr.rel (0) target = $region29
  $region28: #{_lambda_.14} parent=0 // pred_region
    _
  $region29: #{_lambda_.14} parent=0 // pred_fallthru
    _

// kernel: _lambda_.11
$region0: #{_lambda_.11}
  #allocation0 [shape = 'u32[]', space=smem, size = 0x4, offset = 0x4, fixed_abs, tag = 'smem constant byte address 0x4 - core index']
  #allocation1 [shape = 'u32[144,128]{1,0:T(1,128)}', space=vmem, size = 0x12000, scoped, tag = 'internal scratch']
  %s0 = inlined_call_operand.vmem [shape: f32[16,32], index: 0, kind: input, shape index: {}]
  %s1 = inlined_call_operand.vmem [shape: f32[1,32], index: 1, kind: input, shape index: {}]
  %s2 = inlined_call_operand.vmem [shape: f32[1,32], index: 2, kind: input, shape index: {}]
  %s3 = inlined_call_operand.vmem [shape: bf16[32,32], index: 3, kind: input, shape index: {}]
  %s4 = inlined_call_operand.vmem [shape: bf16[32,32], index: 4, kind: input, shape index: {}]
  %s5 = inlined_call_operand.vmem [shape: bf16[32,32], index: 5, kind: input, shape index: {}]
  %s6 = inlined_call_operand.vmem [shape: f32[1,32], index: 6, kind: input, shape index: {}]
  %s7 = inlined_call_operand.vmem [shape: f32[1,32], index: 7, kind: input, shape index: {}]
  %s8 = inlined_call_operand.vmem [shape: f32[1,32], index: 8, kind: input, shape index: {}]
  %s9 = inlined_call_operand.vmem [shape: bf16[16,32], index: 9, kind: output, shape index: {0}]
  %s10 = inlined_call_operand.vmem [shape: bf16[16,32], index: 10, kind: output, shape index: {1}]
  %s11 = inlined_call_operand.vmem [shape: bf16[16,32], index: 11, kind: output, shape index: {2}]
  %12 = xla_tuple %s9, %s10, %s11
  %s13 = sld [smem:[#allocation0]]
  $region62: #{_lambda_.11} parent=0
    _
  %s15 = ssub.s32 1, %s13
  %s16 = scalar_select 0, %s15, %s13
  // Predicated region
  $region2: #{_lambda_.11} parent=0 // pred_check
    _
  $region3: #{_lambda_.11} parent=0 // pred_check_branch
    %18 = sbr.rel (0) target = $region5
  $region4: #{_lambda_.11} parent=0 // pred_region
    _
  $region5: #{_lambda_.11} parent=0 // pred_fallthru
    _
  // Predicated region
  $region6: #{_lambda_.11} parent=0 // pred_check
    _
  $region7: #{_lambda_.11} parent=0 // pred_check_branch
    %20 = sbr.rel (0) target = $region9
  $region8: #{_lambda_.11} parent=0 // pred_region
    _
  $region9: #{_lambda_.11} parent=0 // pred_fallthru
    _
  // Predicated region
  $region10: #{_lambda_.11} parent=0 // pred_check
    _
  $region11: #{_lambda_.11} parent=0 // pred_check_branch
    %22 = sbr.rel (0) target = $region13
  $region12: #{_lambda_.11} parent=0 // pred_region
    _
  $region13: #{_lambda_.11} parent=0 // pred_fallthru
    _
  // Predicated region
  $region14: #{_lambda_.11} parent=0 // pred_check
    _
  $region15: #{_lambda_.11} parent=0 // pred_check_branch
    %24 = sbr.rel (0) target = $region17
  $region16: #{_lambda_.11} parent=0 // pred_region
    _
  $region17: #{_lambda_.11} parent=0 // pred_fallthru
    _
  // Predicated region
  $region18: #{_lambda_.11} parent=0 // pred_check
    _
  $region19: #{_lambda_.11} parent=0 // pred_check_branch
    %26 = sbr.rel (0) target = $region21
  $region20: #{_lambda_.11} parent=0 // pred_region
    _
  $region21: #{_lambda_.11} parent=0 // pred_fallthru
    _
  // Predicated region
  $region22: #{_lambda_.11} parent=0 // pred_check
    _
  $region23: #{_lambda_.11} parent=0 // pred_check_branch
    %28 = sbr.rel (0) target = $region25
  $region24: #{_lambda_.11} parent=0 // pred_region
    _
  $region25: #{_lambda_.11} parent=0 // pred_fallthru
    _
  // Predicated region
  $region26: #{_lambda_.11} parent=0 // pred_check
    _
  $region27: #{_lambda_.11} parent=0 // pred_check_branch
    %30 = sbr.rel (0) target = $region29
  $region28: #{_lambda_.11} parent=0 // pred_region
    _
  $region29: #{_lambda_.11} parent=0 // pred_fallthru
    _
  // Predicated region
  $region30: #{_lambda_.11} parent=0 // pred_check
    _
  $region31: #{_lambda_.11} parent=0 // pred_check_branch
    %32 = sbr.rel (0) target = $region33
  $region32: #{_lambda_.11} parent=0 // pred_region
    _
  $region33: #{_lambda_.11} parent=0 // pred_fallthru
    _
  // Predicated region
  $region34: #{_lambda_.11} parent=0 // pred_check
    _
  $region35: #{_lambda_.11} parent=0 // pred_check_branch
    %34 = sbr.rel (0) target = $region37
  $region36: #{_lambda_.11} parent=0 // pred_region
    _
  $region37: #{_lambda_.11} parent=0 // pred_fallthru
    _
  %v36 = vld [vmem:[%s0] sm:$0xff]
  %v37 = vld [vmem:[%s0 + $0x8] sm:$0xff]
  %v38 = vld [vmem:[%s1] sm:$0x1]
  %v39 = vld [vmem:[%s2] sm:$0x1]
  %vm40 = vcmask 261120
  %v41 = vsel %vm40, %v36, 0.0
  %42 = vadd.xlane.f32.xlu0 %v41
  %v43 = vpop.xlane.xlu0 %42
  %v44 = vsel %vm40, %v37, 0.0
  %45 = vadd.xlane.f32.xlu0 %v44
  %v46 = vpop.xlane.xlu0 %45
  %v47 = vrcp.pop 32.0
  %v48 = vmul.f32 %v43, %v47
  %v49 = vmul.f32 %v46, %v47
  %v50 = vsub.f32 %v36, %v48
  %v51 = vsub.f32 %v37, %v49
  %v52 = vmul.f32 %v50, %v50
  %v53 = vmul.f32 %v51, %v51
  %v54 = vsel %vm40, %v52, 0.0
  %55 = vadd.xlane.f32.xlu0 %v54
  %v56 = vpop.xlane.xlu0 %55
  %v57 = vsel %vm40, %v53, 0.0
  %58 = vadd.xlane.f32.xlu0 %v57
  %v59 = vpop.xlane.xlu0 %58
  %v60 = vmul.f32 %v56, %v47
  %v61 = vmul.f32 %v59, %v47
  %v62 = vadd.f32 %v60, 1e-05
  %v63 = vadd.f32 %v61, 1e-05
  %v64 = vrsqrt.pop %v62
  %v65 = vrsqrt.pop %v63
  %v66 = vmul.f32 %v50, %v64
  %v67 = vmul.f32 %v51, %v65
  %v69 = vlaneseq
  %v70 = vshrl.u32 %v69, 7
  %v71 = vsub.s32 0, %v70
  %v72 = vrot.slane %v38, %v71
  %v74 = vmul.f32 %v66, %v72
  %v75 = vmul.f32 %v67, %v72
  %v77 = vlaneseq
  %v78 = vshrl.u32 %v77, 7
  %v79 = vsub.s32 0, %v78
  %v80 = vrot.slane %v39, %v79
  %v82 = vadd.f32 %v74, %v80
  %v83 = vadd.f32 %v75, %v80
  %v84 = vpack.c.bf16 %v83, %v82
  %v85 = vld [vmem:[%s3] sm:$0xf]
  %v86 = vld [vmem:[%s3 + $0x4] sm:$0xf]
  %v87 = vld [vmem:[%s3 + $0x8] sm:$0xf]
  %v88 = vld [vmem:[%s3 + $0xc] sm:$0xf]
  %v89 = vld [vmem:[%s6] sm:$0x1]
  %v91 = vlaneseq
  %v92 = vshrl.u32 %v91, 7
  %v93 = vsub.s32 0, %v92
  %v94 = vrot.slane %v89, %v93
  %v100 = vunpack.c.l.b16 %v85
  %v101 = vunpack.c.l.b16 %v86
  %v102 = vunpack.c.l.b16 %v87
  %v103 = vunpack.c.l.b16 %v88
  %v104 = vpack.c.b16 %v101, %v100
  %v105 = vpack.c.b16 %v103, %v102
  %v109 = vsel %vm40, %v84, 0
  %111 = vmatprep.subr.bf16.mxu0 0
  %112 = vmatpush1.bf16.msra.mxu0 %v104
  %113 = vmatprep.subr.bf16.mxu0 0
  %114 = vmatpush1.bf16.msra.mxu0 %v105
  %115 = vmatprep.subr.bf16.mxu0 0
  %116 = vmatpush1.bf16.msra.mxu0 0
  %117 = vmatprep.subr.bf16.mxu0 0
  %118 = vmatpush1.bf16.msra.mxu0 0
  %119 = vmatprep.subr.bf16.mxu0 0
  %120 = vmatpush1.bf16.msra.mxu0 0
  %121 = vmatprep.subr.bf16.mxu0 0
  %122 = vmatpush1.bf16.msra.mxu0 0
  %123 = vmatprep.subr.bf16.mxu0 0
  %124 = vmatpush1.bf16.msra.mxu0 0
  %125 = vmatprep.subr.bf16.mxu0 0
  %126 = vmatpush1.bf16.msra.mxu0 0
  %127 = vmatprep.subr.bf16.mxu0 0
  %128 = vmatpush1.bf16.msra.mxu0 0
  %129 = vmatprep.subr.bf16.mxu0 0
  %130 = vmatpush1.bf16.msra.mxu0 0
  %131 = vmatprep.subr.bf16.mxu0 0
  %132 = vmatpush1.bf16.msra.mxu0 0
  %133 = vmatprep.subr.bf16.mxu0 0
  %134 = vmatpush1.bf16.msra.mxu0 0
  %135 = vmatprep.subr.bf16.mxu0 0
  %136 = vmatpush1.bf16.msra.mxu0 0
  %137 = vmatprep.subr.bf16.mxu0 0
  %138 = vmatpush1.bf16.msra.mxu0 0
  %139 = vmatprep.subr.bf16.mxu0 0
  %140 = vmatpush1.bf16.msra.mxu0 0
  %141 = vmatprep.subr.bf16.mxu0 0
  %142 = vmatpush1.bf16.msra.mxu0 0
  %143 = vmatprep.mubr.bf16.mxu0 0
  %144 = vmatmul.mubr.bf16.gmra.mrb[0].mxu0 %v109
  %v145 = vpop.f32.mrb[0].mxu0
  %v146 = vadd.f32 %v94, %v145
  %v147 = vpop.f32.mrb[0].mxu0
  %v148 = vpop.f32.mrb[0].mxu0
  %v149 = vadd.f32 %v94, %v148
  %v150 = vpop.f32.mrb[0].mxu0
  %151 = vdwg.mxu0
  %v152 = vpack.c.bf16 %v149, %v146
  %v154 = vunpack.c.l.b16 %v152
  %v155 = vunpack.c.h.b16 %v152
  %v156 = vpack.c.b16 %v154, %v154
  %v157 = vpack.c.b16 %v155, %v155
  %vm160 = vcmask 257024
  %161 = vst.msk [vmem:[%s9] sm:$0xf] %vm160, %v156
  %162 = vst.msk [vmem:[%s9 + $0x4] sm:$0xf] %vm160, %v157
  %v163 = vld [vmem:[%s4] sm:$0xf]
  %v164 = vld [vmem:[%s4 + $0x4] sm:$0xf]
  %v165 = vld [vmem:[%s4 + $0x8] sm:$0xf]
  %v166 = vld [vmem:[%s4 + $0xc] sm:$0xf]
  %v167 = vld [vmem:[%s7] sm:$0x1]
  %v169 = vlaneseq
  %v170 = vshrl.u32 %v169, 7
  %v171 = vsub.s32 0, %v170
  %v172 = vrot.slane %v167, %v171
  %v178 = vunpack.c.l.b16 %v163
  %v179 = vunpack.c.l.b16 %v164
  %v180 = vunpack.c.l.b16 %v165
  %v181 = vunpack.c.l.b16 %v166
  %v182 = vpack.c.b16 %v179, %v178
  %v183 = vpack.c.b16 %v181, %v180
  %186 = vmatprep.subr.bf16.mxu0 0
  %187 = vmatpush1.bf16.msra.mxu0 %v182
  %188 = vmatprep.subr.bf16.mxu0 0
  %189 = vmatpush1.bf16.msra.mxu0 %v183
  %190 = vmatprep.subr.bf16.mxu0 0
  %191 = vmatpush1.bf16.msra.mxu0 0
  %192 = vmatprep.subr.bf16.mxu0 0
  %193 = vmatpush1.bf16.msra.mxu0 0
  %194 = vmatprep.subr.bf16.mxu0 0
  %195 = vmatpush1.bf16.msra.mxu0 0
  %196 = vmatprep.subr.bf16.mxu0 0
  %197 = vmatpush1.bf16.msra.mxu0 0
  %198 = vmatprep.subr.bf16.mxu0 0
  %199 = vmatpush1.bf16.msra.mxu0 0
  %200 = vmatprep.subr.bf16.mxu0 0
  %201 = vmatpush1.bf16.msra.mxu0 0
  %202 = vmatprep.subr.bf16.mxu0 0
  %203 = vmatpush1.bf16.msra.mxu0 0
  %204 = vmatprep.subr.bf16.mxu0 0
  %205 = vmatpush1.bf16.msra.mxu0 0
  %206 = vmatprep.subr.bf16.mxu0 0
  %207 = vmatpush1.bf16.msra.mxu0 0
  %208 = vmatprep.subr.bf16.mxu0 0
  %209 = vmatpush1.bf16.msra.mxu0 0
  %210 = vmatprep.subr.bf16.mxu0 0
  %211 = vmatpush1.bf16.msra.mxu0 0
  %212 = vmatprep.subr.bf16.mxu0 0
  %213 = vmatpush1.bf16.msra.mxu0 0
  %214 = vmatprep.subr.bf16.mxu0 0
  %215 = vmatpush1.bf16.msra.mxu0 0
  %216 = vmatprep.subr.bf16.mxu0 0
  %217 = vmatpush1.bf16.msra.mxu0 0
  %218 = vmatprep.mubr.bf16.mxu0 0
  %219 = vmatmul.mubr.bf16.gmra.mrb[0].mxu0 %v109
  %v220 = vpop.f32.mrb[0].mxu0
  %v221 = vadd.f32 %v172, %v220
  %v222 = vpop.f32.mrb[0].mxu0
  %v223 = vpop.f32.mrb[0].mxu0
  %v224 = vadd.f32 %v172, %v223
  %v225 = vpop.f32.mrb[0].mxu0
  %226 = vdwg.mxu0
  %v227 = vpack.c.bf16 %v224, %v221
  %v229 = vunpack.c.l.b16 %v227
  %v230 = vunpack.c.h.b16 %v227
  %v231 = vpack.c.b16 %v229, %v229
  %v232 = vpack.c.b16 %v230, %v230
  %235 = vst.msk [vmem:[%s10] sm:$0xf] %vm160, %v231
  %236 = vst.msk [vmem:[%s10 + $0x4] sm:$0xf] %vm160, %v232
  %v237 = vld [vmem:[%s5] sm:$0xf]
  %v238 = vld [vmem:[%s5 + $0x4] sm:$0xf]
  %v239 = vld [vmem:[%s5 + $0x8] sm:$0xf]
  %v240 = vld [vmem:[%s5 + $0xc] sm:$0xf]
  %v241 = vld [vmem:[%s8] sm:$0x1]
  %v243 = vlaneseq
  %v244 = vshrl.u32 %v243, 7
  %v245 = vsub.s32 0, %v244
  %v246 = vrot.slane %v241, %v245
  %v252 = vunpack.c.l.b16 %v237
  %v253 = vunpack.c.l.b16 %v238
  %v254 = vunpack.c.l.b16 %v239
  %v255 = vunpack.c.l.b16 %v240
  %v256 = vpack.c.b16 %v253, %v252
  %v257 = vpack.c.b16 %v255, %v254
  %260 = vmatprep.subr.bf16.mxu0 0
  %261 = vmatpush1.bf16.msra.mxu0 %v256
  %262 = vmatprep.subr.bf16.mxu0 0
  %263 = vmatpush1.bf16.msra.mxu0 %v257
  %264 = vmatprep.subr.bf16.mxu0 0
  %265 = vmatpush1.bf16.msra.mxu0 0
  %266 = vmatprep.subr.bf16.mxu0 0
  %267 = vmatpush1.bf16.msra.mxu0 0
  %268 = vmatprep.subr.bf16.mxu0 0
  %269 = vmatpush1.bf16.msra.mxu0 0
  %270 = vmatprep.subr.bf16.mxu0 0
  %271 = vmatpush1.bf16.msra.mxu0 0
  %272 = vmatprep.subr.bf16.mxu0 0
  %273 = vmatpush1.bf16.msra.mxu0 0
  %274 = vmatprep.subr.bf16.mxu0 0
  %275 = vmatpush1.bf16.msra.mxu0 0
  %276 = vmatprep.subr.bf16.mxu0 0
  %277 = vmatpush1.bf16.msra.mxu0 0
  %278 = vmatprep.subr.bf16.mxu0 0
  %279 = vmatpush1.bf16.msra.mxu0 0
  %280 = vmatprep.subr.bf16.mxu0 0
  %281 = vmatpush1.bf16.msra.mxu0 0
  %282 = vmatprep.subr.bf16.mxu0 0
  %283 = vmatpush1.bf16.msra.mxu0 0
  %284 = vmatprep.subr.bf16.mxu0 0
  %285 = vmatpush1.bf16.msra.mxu0 0
  %286 = vmatprep.subr.bf16.mxu0 0
  %287 = vmatpush1.bf16.msra.mxu0 0
  %288 = vmatprep.subr.bf16.mxu0 0
  %289 = vmatpush1.bf16.msra.mxu0 0
  %290 = vmatprep.subr.bf16.mxu0 0
  %291 = vmatpush1.bf16.msra.mxu0 0
  %292 = vmatprep.mubr.bf16.mxu0 0
  %293 = vmatmul.mubr.bf16.gmra.mrb[0].mxu0 %v109
  %v294 = vpop.f32.mrb[0].mxu0
  %v295 = vadd.f32 %v246, %v294
  %v296 = vpop.f32.mrb[0].mxu0
  %v297 = vpop.f32.mrb[0].mxu0
  %v298 = vadd.f32 %v246, %v297
  %v299 = vpop.f32.mrb[0].mxu0
  %300 = vdwg.mxu0
  %v301 = vpack.c.bf16 %v298, %v295
  %v303 = vunpack.c.l.b16 %v301
  %v304 = vunpack.c.h.b16 %v301
  %v305 = vpack.c.b16 %v303, %v303
  %v306 = vpack.c.b16 %v304, %v304
  %309 = vst.msk [vmem:[%s11] sm:$0xf] %vm160, %v305
  %310 = vst.msk [vmem:[%s11 + $0x4] sm:$0xf] %vm160, %v306
  // Predicated region
  $region38: #{_lambda_.11} parent=0 // pred_check
    _
  $region39: #{_lambda_.11} parent=0 // pred_check_branch
    %312 = sbr.rel (0) target = $region41
  $region40: #{_lambda_.11} parent=0 // pred_region
    _
  $region41: #{_lambda_.11} parent=0 // pred_fallthru
    _
  // Predicated region
  $region42: #{_lambda_.11} parent=0 // pred_check
    _
  $region43: #{_lambda_.11} parent=0 // pred_check_branch
    %314 = sbr.rel (0) target = $region45
  $region44: #{_lambda_.11} parent=0 // pred_region
    _
  $region45: #{_lambda_.11} parent=0 // pred_fallthru
    _
  // Predicated region
  $region46: #{_lambda_.11} parent=0 // pred_check
    _
  $region47: #{_lambda_.11} parent=0 // pred_check_branch
    %316 = sbr.rel (0) target = $region49
  $region48: #{_lambda_.11} parent=0 // pred_region
    _
  $region49: #{_lambda_.11} parent=0 // pred_fallthru
    _
  // Predicated region
  $region50: #{_lambda_.11} parent=0 // pred_check
    _
  $region51: #{_lambda_.11} parent=0 // pred_check_branch
    %318 = sbr.rel (0) target = $region53
  $region52: #{_lambda_.11} parent=0 // pred_region
    _
  $region53: #{_lambda_.11} parent=0 // pred_fallthru
    _
  // Predicated region
  $region54: #{_lambda_.11} parent=0 // pred_check
    _
  $region55: #{_lambda_.11} parent=0 // pred_check_branch
    %320 = sbr.rel (0) target = $region57
  $region56: #{_lambda_.11} parent=0 // pred_region
    _
  $region57: #{_lambda_.11} parent=0 // pred_fallthru
    _
  // Predicated region
  $region58: #{_lambda_.11} parent=0 // pred_check
    _
  $region59: #{_lambda_.11} parent=0 // pred_check_branch
    %322 = sbr.rel (0) target = $region61
  $region60: #{_lambda_.11} parent=0 // pred_region
    _
  $region61: #{_lambda_.11} parent=0 // pred_fallthru
    _

// kernel: _lambda_.15
$region0: #{_lambda_.15}
  #allocation0 [shape = 'u32[]', space=smem, size = 0x4, offset = 0x4, fixed_abs, tag = 'smem constant byte address 0x4 - core index']
  #allocation1 [shape = 'u32[144,128]{1,0:T(1,128)}', space=vmem, size = 0x12000, scoped, tag = 'internal scratch']
  %s0 = inlined_call_operand.vmem [shape: bf16[16,128], index: 0, kind: input, shape index: {}]
  %s1 = inlined_call_operand.vmem [shape: bf16[128,32], index: 1, kind: input, shape index: {}]
  %s2 = inlined_call_operand.vmem [shape: f32[1,32], index: 2, kind: input, shape index: {}]
  %s3 = inlined_call_operand.vmem [shape: f32[16,32], index: 3, kind: input, shape index: {}]
  %s4 = inlined_call_operand.vmem [shape: f32[16,32], index: 4, kind: output, shape index: {}]
  %s5 = sld [smem:[#allocation0]]
  $region26: #{_lambda_.15} parent=0
    _
  %s7 = ssub.s32 1, %s5
  %s8 = scalar_select 0, %s7, %s5
  // Predicated region
  $region2: #{_lambda_.15} parent=0 // pred_check
    _
  $region3: #{_lambda_.15} parent=0 // pred_check_branch
    %10 = sbr.rel (0) target = $region5
  $region4: #{_lambda_.15} parent=0 // pred_region
    _
  $region5: #{_lambda_.15} parent=0 // pred_fallthru
    _
  // Predicated region
  $region6: #{_lambda_.15} parent=0 // pred_check
    _
  $region7: #{_lambda_.15} parent=0 // pred_check_branch
    %12 = sbr.rel (0) target = $region9
  $region8: #{_lambda_.15} parent=0 // pred_region
    _
  $region9: #{_lambda_.15} parent=0 // pred_fallthru
    _
  // Predicated region
  $region10: #{_lambda_.15} parent=0 // pred_check
    _
  $region11: #{_lambda_.15} parent=0 // pred_check_branch
    %14 = sbr.rel (0) target = $region13
  $region12: #{_lambda_.15} parent=0 // pred_region
    _
  $region13: #{_lambda_.15} parent=0 // pred_fallthru
    _
  // Predicated region
  $region14: #{_lambda_.15} parent=0 // pred_check
    _
  $region15: #{_lambda_.15} parent=0 // pred_check_branch
    %16 = sbr.rel (0) target = $region17
  $region16: #{_lambda_.15} parent=0 // pred_region
    _
  $region17: #{_lambda_.15} parent=0 // pred_fallthru
    _
  %v18 = vld [vmem:[%s0] sm:$0xf]
  %v19 = vld [vmem:[%s0 + $0x4] sm:$0xf]
  %v20 = vld [vmem:[%s1] sm:$0xf]
  %v21 = vld [vmem:[%s1 + $0x4] sm:$0xf]
  %v22 = vld [vmem:[%s1 + $0x8] sm:$0xf]
  %v23 = vld [vmem:[%s1 + $0xc] sm:$0xf]
  %v24 = vld [vmem:[%s1 + $0x10] sm:$0xf]
  %v25 = vld [vmem:[%s1 + $0x14] sm:$0xf]
  %v26 = vld [vmem:[%s1 + $0x18] sm:$0xf]
  %v27 = vld [vmem:[%s1 + $0x1c] sm:$0xf]
  %v28 = vld [vmem:[%s1 + $0x20] sm:$0xf]
  %v29 = vld [vmem:[%s1 + $0x24] sm:$0xf]
  %v30 = vld [vmem:[%s1 + $0x28] sm:$0xf]
  %v31 = vld [vmem:[%s1 + $0x2c] sm:$0xf]
  %v32 = vld [vmem:[%s1 + $0x30] sm:$0xf]
  %v33 = vld [vmem:[%s1 + $0x34] sm:$0xf]
  %v34 = vld [vmem:[%s1 + $0x38] sm:$0xf]
  %v35 = vld [vmem:[%s1 + $0x3c] sm:$0xf]
  %v36 = vld [vmem:[%s2] sm:$0x1]
  %v38 = vlaneseq
  %v39 = vshrl.u32 %v38, 7
  %v40 = vsub.s32 0, %v39
  %v41 = vrot.slane %v36, %v40
  %v45 = vunpack.c.l.b16 %v18
  %v46 = vunpack.c.l.b16 %v19
  %v47 = vpack.c.b16 %v46, %v45
  %v65 = vunpack.c.l.b16 %v20
  %v66 = vunpack.c.l.b16 %v21
  %v67 = vunpack.c.l.b16 %v22
  %v68 = vunpack.c.l.b16 %v23
  %v69 = vunpack.c.l.b16 %v24
  %v70 = vunpack.c.l.b16 %v25
  %v71 = vunpack.c.l.b16 %v26
  %v72 = vunpack.c.l.b16 %v27
  %v73 = vunpack.c.l.b16 %v28
  %v74 = vunpack.c.l.b16 %v29
  %v75 = vunpack.c.l.b16 %v30
  %v76 = vunpack.c.l.b16 %v31
  %v77 = vunpack.c.l.b16 %v32
  %v78 = vunpack.c.l.b16 %v33
  %v79 = vunpack.c.l.b16 %v34
  %v80 = vunpack.c.l.b16 %v35
  %v81 = vpack.c.b16 %v66, %v65
  %v82 = vpack.c.b16 %v68, %v67
  %v83 = vpack.c.b16 %v70, %v69
  %v84 = vpack.c.b16 %v72, %v71
  %v85 = vpack.c.b16 %v74, %v73
  %v86 = vpack.c.b16 %v76, %v75
  %v87 = vpack.c.b16 %v78, %v77
  %v88 = vpack.c.b16 %v80, %v79
  %97 = vmatprep.subr.bf16.mxu0 0
  %98 = vmatpush1.bf16.msra.mxu0 %v81
  %99 = vmatprep.subr.bf16.mxu0 0
  %100 = vmatpush1.bf16.msra.mxu0 %v82
  %101 = vmatprep.subr.bf16.mxu0 0
  %102 = vmatpush1.bf16.msra.mxu0 %v83
  %103 = vmatprep.subr.bf16.mxu0 0
  %104 = vmatpush1.bf16.msra.mxu0 %v84
  %105 = vmatprep.subr.bf16.mxu0 0
  %106 = vmatpush1.bf16.msra.mxu0 %v85
  %107 = vmatprep.subr.bf16.mxu0 0
  %108 = vmatpush1.bf16.msra.mxu0 %v86
  %109 = vmatprep.subr.bf16.mxu0 0
  %110 = vmatpush1.bf16.msra.mxu0 %v87
  %111 = vmatprep.subr.bf16.mxu0 0
  %112 = vmatpush1.bf16.msra.mxu0 %v88
  %113 = vmatprep.subr.bf16.mxu0 0
  %114 = vmatpush1.bf16.msra.mxu0 0
  %115 = vmatprep.subr.bf16.mxu0 0
  %116 = vmatpush1.bf16.msra.mxu0 0
  %117 = vmatprep.subr.bf16.mxu0 0
  %118 = vmatpush1.bf16.msra.mxu0 0
  %119 = vmatprep.subr.bf16.mxu0 0
  %120 = vmatpush1.bf16.msra.mxu0 0
  %121 = vmatprep.subr.bf16.mxu0 0
  %122 = vmatpush1.bf16.msra.mxu0 0
  %123 = vmatprep.subr.bf16.mxu0 0
  %124 = vmatpush1.bf16.msra.mxu0 0
  %125 = vmatprep.subr.bf16.mxu0 0
  %126 = vmatpush1.bf16.msra.mxu0 0
  %127 = vmatprep.subr.bf16.mxu0 0
  %128 = vmatpush1.bf16.msra.mxu0 0
  %129 = vmatprep.mubr.bf16.mxu0 0
  %130 = vmatmul.mubr.bf16.gmra.mrb[0].mxu0 %v47
  %v131 = vpop.f32.mrb[0].mxu0
  %v132 = vadd.f32 %v41, %v131
  %v133 = vpop.f32.mrb[0].mxu0
  %v134 = vpop.f32.mrb[0].mxu0
  %v135 = vadd.f32 %v41, %v134
  %v136 = vpop.f32.mrb[0].mxu0
  %137 = vdwg.mxu0
  %v138 = vld [vmem:[%s3] sm:$0xff]
  %v139 = vld [vmem:[%s3 + $0x8] sm:$0xff]
  %v140 = vadd.f32 %v132, %v138
  %v141 = vadd.f32 %v135, %v139
  %vm142 = vcmask 261120
  %143 = vst.msk [vmem:[%s4] sm:$0xff] %vm142, %v140
  %144 = vst.msk [vmem:[%s4 + $0x8] sm:$0xff] %vm142, %v141
  // Predicated region
  $region18: #{_lambda_.15} parent=0 // pred_check
    _
  $region19: #{_lambda_.15} parent=0 // pred_check_branch
    %146 = sbr.rel (0) target = $region21
  $region20: #{_lambda_.15} parent=0 // pred_region
    _
  $region21: #{_lambda_.15} parent=0 // pred_fallthru
    _
  // Predicated region
  $region22: #{_lambda_.15} parent=0 // pred_check
    _
  $region23: #{_lambda_.15} parent=0 // pred_check_branch
    %148 = sbr.rel (0) target = $region25
  $region24: #{_lambda_.15} parent=0 // pred_region
    _
  $region25: #{_lambda_.15} parent=0 // pred_fallthru
    _

// kernel: _lambda_.12
$region0: #{_lambda_.12}
  #allocation0 [shape = 'u32[]', space=smem, size = 0x4, offset = 0x4, fixed_abs, tag = 'smem constant byte address 0x4 - core index']
  #allocation1 [shape = 'u32[144,128]{1,0:T(1,128)}', space=vmem, size = 0x12000, scoped, tag = 'internal scratch']
  #allocation2 [shape = 'f32[4,8,1]{2,1,0:T(8,128)}', space=vmem, size = 0x4000, scoped, tag = 'scratch operand']
  #allocation3 [shape = 'f32[4,8,1]{2,1,0:T(8,128)}', space=vmem, size = 0x4000, scoped, tag = 'scratch operand']
  #allocation4 [shape = 'f32[4,8,8]{2,1,0:T(8,128)}', space=vmem, size = 0x4000, scoped, tag = 'scratch operand']
  #allocation5 [shape = 's32[1]{0}', space=sflag, size = 0x4, scoped, tag = 'scoped memory for _lambda_.12']
  #allocation6 [shape = 's32[1]{0:T(128)S(6)}', space=smem, size = 0x200, scoped, tag = 'prefetched SMEM operand 0']
  #allocation7 [shape = 's32[1]{0:T(128)S(6)}', space=smem, size = 0x200, scoped, tag = 'prefetched SMEM operand 1']
  %s0 = inlined_call_operand.<no memory space> [shape: s32[1], index: 0, kind: input, shape index: {}, may-alias: {0,1}]
  %s1 = inlined_call_operand.<no memory space> [shape: s32[1], index: 1, kind: input, shape index: {}, may-alias: {0,1}]
  %s2 = inlined_call_operand.vmem [shape: bf16[2,8,32], index: 2, kind: input, shape index: {}]
  %s3 = inlined_call_operand.vmem [shape: bf16[2,8,32], index: 3, kind: input, shape index: {}]
  %s4 = inlined_call_operand.vmem [shape: bf16[2,8,32], index: 4, kind: input, shape index: {}]
  %s5 = inlined_call_operand.vmem [shape: bf16[2,8,32], index: 5, kind: output, shape index: {}]
  %s6 = sld [smem:[#allocation0]]
  $region57: #{_lambda_.12} parent=0
    _
  %s8 = ssub.s32 1, %s6
  %s9 = scalar_select 0, %s8, %s6
  %10 = sst [smem:[#allocation6]] %s0
  %11 = sst [smem:[#allocation7]] %s1
  loop: start=0, step=1, limit=4
  $region2: #{_lambda_.12} parent=0 // loop_pre_header
    _
  $region3: #{_lambda_.12} parent=0 // loop_header
    %s13 = sphi 0, %s17
    %p14 = scmp.ge.s32.totalorder %s13, 4
    %s20 = sphi 0, %s32
    %s21 = sphi 0, %s28
    %s22 = sphi 0, %s20
    %s23 = sphi 0, %s21
    %s24 = sphi 0, %s22
    %s25 = sphi 0, %s23
    %s39 = sphi 0, %s41
    %s42 = sphi 0, %s39
    %s43 = sphi 0, %s42
    %s59 = sphi 0, %s43
    %s69 = sphi 0, %s71
    %s72 = sphi 0, %s69
    %s73 = sphi 0, %s72
    %s89 = sphi 0, %s73
    %s99 = sphi 0, %s101
    %s102 = sphi 0, %s99
    %s103 = sphi 0, %s102
    %s119 = sphi 0, %s103
    %s129 = sphi 0, %s131
    %s132 = sphi 0, %s129
    %s133 = sphi 0, %s132
    %s149 = sphi 0, %s133
  $region4: #{_lambda_.12} parent=0 // loop_header_branch
    %16 = sbr.rel (%p14) target = $region8
  $region5: #{_lambda_.12} parent=0 // loop_body
    %s18 = ssub.s32 %s13, 1
    %s19 = ssub.s32 %s13, 2
    %s26 = sadd.s32 1, %s21
    %p27 = scmp.ge.s32.totalorder %s26, 1
    %s28 = scalar_select %p27, 0, %s26
    %s29 = sadd.s32 1, %s20
    %s30 = scalar_select %p27, %s29, %s20
    %p31 = scmp.ge.s32.totalorder %s30, 2
    %s32 = scalar_select %p31, 0, %s30
    %s33 = sld [smem:[#allocation6 + %s21]]
    %s34 = sld [smem:[#allocation6 + %s28]]
    %s35 = ssub.s32 %s20, %s32
    %s36 = ssub.s32 %s33, %s34
    %s37 = sor.u32 %s35, %s36
    %p38 = scmp.eq.s32.totalorder %s37, 0
    %s40 = sadd.s32 %s39, 1
    %s41 = scalar_select %p38, %s39, %s40
    %p44 = pneg %p38
    %p45 = scmp.eq.s32.totalorder %s13, 1
    %p46 = por %p44, %p45
    %p47 = scmp.ne.s32.totalorder %s39, %s42
    %p48 = scmp.eq.s32.totalorder %s13, 0
    %p49 = por %p47, %p48
    %p50 = scmp.ne.s32.totalorder %s39, %s42
    %p51 = scmp.eq.s32.totalorder %s18, 1
    %p52 = por %p50, %p51
    %p53 = scmp.ne.s32.totalorder %s42, %s43
    %p54 = scmp.eq.s32.totalorder %s18, 0
    %p55 = por %p53, %p54
    %p56 = scmp.ne.s32.totalorder %s42, %s43
    %p57 = scmp.eq.s32.totalorder %s19, 1
    %p58 = por %p56, %p57
    %p60 = scmp.ne.s32.totalorder %s43, %s59
    %p61 = scmp.eq.s32.totalorder %s19, 0
    %p62 = por %p60, %p61
    %s63 = sld [smem:[#allocation7 + %s21]]
    %s64 = sld [smem:[#allocation7 + %s28]]
    %s65 = ssub.s32 %s20, %s32
    %s66 = ssub.s32 %s63, %s64
    %s67 = sor.u32 %s65, %s66
    %p68 = scmp.eq.s32.totalorder %s67, 0
    %s70 = sadd.s32 %s69, 1
    %s71 = scalar_select %p68, %s69, %s70
    %p74 = pneg %p68
    %p75 = scmp.eq.s32.totalorder %s13, 1
    %p76 = por %p74, %p75
    %p77 = scmp.ne.s32.totalorder %s69, %s72
    %p78 = scmp.eq.s32.totalorder %s13, 0
    %p79 = por %p77, %p78
    %p80 = scmp.ne.s32.totalorder %s69, %s72
    %p81 = scmp.eq.s32.totalorder %s18, 1
    %p82 = por %p80, %p81
    %p83 = scmp.ne.s32.totalorder %s72, %s73
    %p84 = scmp.eq.s32.totalorder %s18, 0
    %p85 = por %p83, %p84
    %p86 = scmp.ne.s32.totalorder %s72, %s73
    %p87 = scmp.eq.s32.totalorder %s19, 1
    %p88 = por %p86, %p87
    %p90 = scmp.ne.s32.totalorder %s73, %s89
    %p91 = scmp.eq.s32.totalorder %s19, 0
    %p92 = por %p90, %p91
    %s93 = sld [smem:[#allocation7 + %s21]]
    %s94 = sld [smem:[#allocation7 + %s28]]
    %s95 = ssub.s32 %s20, %s32
    %s96 = ssub.s32 %s93, %s94
    %s97 = sor.u32 %s95, %s96
    %p98 = scmp.eq.s32.totalorder %s97, 0
    %s100 = sadd.s32 %s99, 1
    %s101 = scalar_select %p98, %s99, %s100
    %p104 = pneg %p98
    %p105 = scmp.eq.s32.totalorder %s13, 1
    %p106 = por %p104, %p105
    %p107 = scmp.ne.s32.totalorder %s99, %s102
    %p108 = scmp.eq.s32.totalorder %s13, 0
    %p109 = por %p107, %p108
    %p110 = scmp.ne.s32.totalorder %s99, %s102
    %p111 = scmp.eq.s32.totalorder %s18, 1
    %p112 = por %p110, %p111
    %p113 = scmp.ne.s32.totalorder %s102, %s103
    %p114 = scmp.eq.s32.totalorder %s18, 0
    %p115 = por %p113, %p114
    %p116 = scmp.ne.s32.totalorder %s102, %s103
    %p117 = scmp.eq.s32.totalorder %s19, 1
    %p118 = por %p116, %p117
    %p120 = scmp.ne.s32.totalorder %s103, %s119
    %p121 = scmp.eq.s32.totalorder %s19, 0
    %p122 = por %p120, %p121
    %s123 = sld [smem:[#allocation6 + %s21]]
    %s124 = sld [smem:[#allocation6 + %s28]]
    %s125 = ssub.s32 %s20, %s32
    %s126 = ssub.s32 %s123, %s124
    %s127 = sor.u32 %s125, %s126
    %p128 = scmp.eq.s32.totalorder %s127, 0
    %s130 = sadd.s32 %s129, 1
    %s131 = scalar_select %p128, %s129, %s130
    %p134 = pneg %p128
    %p135 = scmp.eq.s32.totalorder %s13, 1
    %p136 = por %p134, %p135
    %p137 = scmp.ne.s32.totalorder %s129, %s132
    %p138 = scmp.eq.s32.totalorder %s13, 0
    %p139 = por %p137, %p138
    %p140 = scmp.ne.s32.totalorder %s129, %s132
    %p141 = scmp.eq.s32.totalorder %s18, 1
    %p142 = por %p140, %p141
    %p143 = scmp.ne.s32.totalorder %s132, %s133
    %p144 = scmp.eq.s32.totalorder %s18, 0
    %p145 = por %p143, %p144
    %p146 = scmp.ne.s32.totalorder %s132, %s133
    %p147 = scmp.eq.s32.totalorder %s19, 1
    %p148 = por %p146, %p147
    %p150 = scmp.ne.s32.totalorder %s133, %s149
    %p151 = scmp.eq.s32.totalorder %s19, 0
    %p152 = por %p150, %p151
    %p153 = scmp.le.s32.totalorder 1, %s13
    %p154 = scmp.lt.s32.totalorder %s13, 3
    %p155 = pnand %p153, %p154
    %p156 = pneg %p155
    // Predicated region
    $region9: #{_lambda_.12} parent=5 // pred_check
      _
    $region10: #{_lambda_.12} parent=5 // pred_check_branch
      %158 = sbr.rel (%p155) target = $region12
    $region11: #{_lambda_.12} parent=5 // pred_region
      %s159 = ssub.s32 %s13, 1
    $region12: #{_lambda_.12} parent=5 // pred_fallthru
      _
    %p160 = scmp.lt.s32.totalorder %s13, 2
    // Predicated region
    $region13: #{_lambda_.12} parent=5 // pred_check
      %p161 = pneg %p160
    $region14: #{_lambda_.12} parent=5 // pred_check_branch
      %163 = sbr.rel (%p161) target = $region16
    $region15: #{_lambda_.12} parent=5 // pred_region
      // Predicated region
      $region17: #{_lambda_.12} parent=15 // pred_check
        %p164 = pneg %p49
      $region18: #{_lambda_.12} parent=15 // pred_check_branch
        %166 = sbr.rel (%p164) target = $region20
      $region19: #{_lambda_.12} parent=15 // pred_region
        %s167 = sld [smem:[#allocation6 + %s21]]
        %p168 = scmp.lt.s32.totalorder %s20, 1
        %s169 = scalar_select %p168, %s20, 1
        %p170 = scmp.lt.s32.totalorder %s167, 0
        %s171 = scalar_select %p170, %s167, 0
        %s172 = sadd.s32 %s171, %s169
        %s173 = smul.addr %s172, 4
        %s174 = scalar_lea.vmem %s2, %s173
        %s175 = sld [smem:[#allocation6 + %s21]]
      $region20: #{_lambda_.12} parent=15 // pred_fallthru
        _
      // Predicated region
      $region21: #{_lambda_.12} parent=15 // pred_check
        %p176 = pneg %p79
      $region22: #{_lambda_.12} parent=15 // pred_check_branch
        %178 = sbr.rel (%p176) target = $region24
      $region23: #{_lambda_.12} parent=15 // pred_region
        %s179 = sld [smem:[#allocation7 + %s21]]
        %p180 = scmp.lt.s32.totalorder %s20, 1
        %s181 = scalar_select %p180, %s20, 1
        %p182 = scmp.lt.s32.totalorder %s179, 0
        %s183 = scalar_select %p182, %s179, 0
        %s184 = sadd.s32 %s183, %s181
        %s185 = smul.addr %s184, 4
        %s186 = scalar_lea.vmem %s3, %s185
        %s187 = sld [smem:[#allocation7 + %s21]]
      $region24: #{_lambda_.12} parent=15 // pred_fallthru
        _
      // Predicated region
      $region25: #{_lambda_.12} parent=15 // pred_check
        %p188 = pneg %p109
      $region26: #{_lambda_.12} parent=15 // pred_check_branch
        %190 = sbr.rel (%p188) target = $region28
      $region27: #{_lambda_.12} parent=15 // pred_region
        %s191 = sld [smem:[#allocation7 + %s21]]
        %p192 = scmp.lt.s32.totalorder %s20, 1
        %s193 = scalar_select %p192, %s20, 1
        %p194 = scmp.lt.s32.totalorder %s191, 0
        %s195 = scalar_select %p194, %s191, 0
        %s196 = sadd.s32 %s195, %s193
        %s197 = smul.addr %s196, 4
        %s198 = scalar_lea.vmem %s4, %s197
        %s199 = sld [smem:[#allocation7 + %s21]]
      $region28: #{_lambda_.12} parent=15 // pred_fallthru
        _
    $region16: #{_lambda_.12} parent=5 // pred_fallthru
      _
    %p200 = scmp.le.s32.totalorder 1, %s13
    %p201 = scmp.lt.s32.totalorder %s13, 3
    %p202 = pnand %p200, %p201
    %p203 = pneg %p202
    // Predicated region
    $region29: #{_lambda_.12} parent=5 // pred_check
      _
    $region30: #{_lambda_.12} parent=5 // pred_check_branch
      %205 = sbr.rel (%p202) target = $region32
    $region31: #{_lambda_.12} parent=5 // pred_region
      %s206 = ssub.s32 %s13, 1
      %s207 = sld [smem:[#allocation6 + %s23]]
      %p208 = scmp.lt.s32.totalorder %s22, 1
      %s209 = scalar_select %p208, %s22, 1
      %p210 = scmp.lt.s32.totalorder %s207, 0
      %s211 = scalar_select %p210, %s207, 0
      %s212 = sadd.s32 %s211, %s209
      %s213 = smul.addr %s212, 4
      %s214 = scalar_lea.vmem %s2, %s213
      %p215 = pneg %p55
      %p216 = pneg %p52
      %s217 = sld [smem:[#allocation7 + %s23]]
      %p218 = scmp.lt.s32.totalorder %s22, 1
      %s219 = scalar_select %p218, %s22, 1
      %p220 = scmp.lt.s32.totalorder %s217, 0
      %s221 = scalar_select %p220, %s217, 0
      %s222 = sadd.s32 %s221, %s219
      %s223 = smul.addr %s222, 4
      %s224 = scalar_lea.vmem %s3, %s223
      %p225 = pneg %p85
      %p226 = pneg %p82
      %s227 = sld [smem:[#allocation7 + %s23]]
      %p228 = scmp.lt.s32.totalorder %s22, 1
      %s229 = scalar_select %p228, %s22, 1
      %p230 = scmp.lt.s32.totalorder %s227, 0
      %s231 = scalar_select %p230, %s227, 0
      %s232 = sadd.s32 %s231, %s229
      %s233 = smul.addr %s232, 4
      %s234 = scalar_lea.vmem %s4, %s233
      %p235 = pneg %p115
      %p236 = pneg %p112
      %p237 = pneg %p145
      %p238 = pneg %p142
      %s239 = sld [smem:[#allocation6 + %s23]]
      %p240 = scmp.lt.s32.totalorder %s22, 1
      %s241 = scalar_select %p240, %s22, 1
      %p242 = scmp.lt.s32.totalorder %s239, 0
      %s243 = scalar_select %p242, %s239, 0
      %s244 = sadd.s32 %s243, %s241
      %s245 = smul.addr %s244, 4
      %s246 = scalar_lea.vmem %s5, %s245
      %s247 = sld [smem:[#allocation6 + %s23]]
      %p248 = scmp.lt.s32.totalorder %s22, 1
      %s249 = scalar_select %p248, %s22, 1
      %p250 = scmp.lt.s32.totalorder %s247, 0
      %s251 = scalar_select %p250, %s247, 0
      %s252 = sadd.s32 %s251, %s249
      %s253 = smul.addr %s252, 4
      %s254 = scalar_lea.vmem %s2, %s253
      %s255 = sld [smem:[#allocation6 + %s23]]
      %s256 = sld [smem:[#allocation7 + %s23]]
      %p257 = scmp.lt.s32.totalorder %s22, 1
      %s258 = scalar_select %p257, %s22, 1
      %p259 = scmp.lt.s32.totalorder %s256, 0
      %s260 = scalar_select %p259, %s256, 0
      %s261 = sadd.s32 %s260, %s258
      %s262 = smul.addr %s261, 4
      %s263 = scalar_lea.vmem %s3, %s262
      %s264 = sld [smem:[#allocation7 + %s23]]
      %s265 = sld [smem:[#allocation7 + %s23]]
      %p266 = scmp.lt.s32.totalorder %s22, 1
      %s267 = scalar_select %p266, %s22, 1
      %p268 = scmp.lt.s32.totalorder %s265, 0
      %s269 = scalar_select %p268, %s265, 0
      %s270 = sadd.s32 %s269, %s267
      %s271 = smul.addr %s270, 4
      %s272 = scalar_lea.vmem %s4, %s271
      %s273 = sld [smem:[#allocation7 + %s23]]
      %s274 = sld [smem:[#allocation6 + %s23]]
      %p275 = scmp.lt.s32.totalorder %s22, 1
      %s276 = scalar_select %p275, %s22, 1
      %p277 = scmp.lt.s32.totalorder %s274, 0
      %s278 = scalar_select %p277, %s274, 0
      %s279 = sadd.s32 %s278, %s276
      %s280 = smul.addr %s279, 4
      %s281 = scalar_lea.vmem %s5, %s280
      %s282 = sld [smem:[#allocation6 + %s23]]
      %s284 = sld [smem:[#allocation6 + %s23]]
      %s285 = sld [smem:[#allocation7 + %s23]]
      %p286 = scmp.eq.s32.totalorder %s285, 0
      // Predicated region
      $region33: #{_lambda_.12} parent=31 // pred_check
        %p287 = pneg %p286
      $region34: #{_lambda_.12} parent=31 // pred_check_branch
        %289 = sbr.rel (%p287) target = $region36
      $region35: #{_lambda_.12} parent=31 // pred_region
        %vm290 = vcmask 7168
        %291 = vst.msk [vmem:[#allocation2] sm:$0xff] %vm290, -inf
        %292 = vst.msk [vmem:[#allocation2 + $0x8] sm:$0xff] %vm290, -inf
        %293 = vst.msk [vmem:[#allocation2 + $0x10] sm:$0xff] %vm290, -inf
        %294 = vst.msk [vmem:[#allocation2 + $0x18] sm:$0xff] %vm290, -inf
        %295 = vst.msk [vmem:[#allocation3] sm:$0xff] %vm290, 0.0
        %296 = vst.msk [vmem:[#allocation3 + $0x8] sm:$0xff] %vm290, 0.0
        %297 = vst.msk [vmem:[#allocation3 + $0x10] sm:$0xff] %vm290, 0.0
        %298 = vst.msk [vmem:[#allocation3 + $0x18] sm:$0xff] %vm290, 0.0
        %vm299 = vcmask 64512
        %300 = vst.msk [vmem:[#allocation4] sm:$0xff] %vm299, 0.0
        %301 = vst.msk [vmem:[#allocation4 + $0x8] sm:$0xff] %vm299, 0.0
        %302 = vst.msk [vmem:[#allocation4 + $0x10] sm:$0xff] %vm299, 0.0
        %303 = vst.msk [vmem:[#allocation4 + $0x18] sm:$0xff] %vm299, 0.0
      $region36: #{_lambda_.12} parent=31 // pred_fallthru
        _
      %p304 = scmp.lt.s32.totalorder %s285, %s284
      // Predicated region
      $region37: #{_lambda_.12} parent=31 // pred_check
        %p305 = pneg %p304
      $region38: #{_lambda_.12} parent=31 // pred_check_branch
        %307 = sbr.rel (%p305) target = $region40
      $region39: #{_lambda_.12} parent=31 // pred_region
        %v308 = vld [vmem:[%s254] sm:$0xf]
        %v309 = vld [vmem:[%s263] sm:$0xf]
        %v310 = vld [vmem:[%s272] sm:$0xf]
        %vm311 = vcmask 64512
        %v313 = vsel %vm311, %v308, 0
        %v316 = vsel %vm311, %v309, 0
        %318 = vmatprep.subr.bf16.mxu0 0
        %319 = vmatpush1.bf16.xpose.msra.mxu0 %v316
        %320 = vmatprep.subr.bf16.mxu0 0
        %321 = vmatpush1.bf16.xpose.msra.mxu0 0
        %322 = vmatprep.subr.bf16.mxu0 0
        %323 = vmatpush1.bf16.xpose.msra.mxu0 0
        %324 = vmatprep.subr.bf16.mxu0 0
        %325 = vmatpush1.bf16.xpose.msra.mxu0 0
        %326 = vmatprep.subr.bf16.mxu0 0
        %327 = vmatpush1.bf16.xpose.msra.mxu0 0
        %328 = vmatprep.subr.bf16.mxu0 0
        %329 = vmatpush1.bf16.xpose.msra.mxu0 0
        %330 = vmatprep.subr.bf16.mxu0 0
        %331 = vmatpush1.bf16.xpose.msra.mxu0 0
        %332 = vmatprep.subr.bf16.mxu0 0
        %333 = vmatpush1.bf16.xpose.msra.mxu0 0
        %334 = vmatprep.subr.bf16.mxu0 0
        %335 = vmatpush1.bf16.xpose.msra.mxu0 0
        %336 = vmatprep.subr.bf16.mxu0 0
        %337 = vmatpush1.bf16.xpose.msra.mxu0 0
        %338 = vmatprep.subr.bf16.mxu0 0
        %339 = vmatpush1.bf16.xpose.msra.mxu0 0
        %340 = vmatprep.subr.bf16.mxu0 0
        %341 = vmatpush1.bf16.xpose.msra.mxu0 0
        %342 = vmatprep.subr.bf16.mxu0 0
        %343 = vmatpush1.bf16.xpose.msra.mxu0 0
        %344 = vmatprep.subr.bf16.mxu0 0
        %345 = vmatpush1.bf16.xpose.msra.mxu0 0
        %346 = vmatprep.subr.bf16.mxu0 0
        %347 = vmatpush1.bf16.xpose.msra.mxu0 0
        %348 = vmatprep.subr.bf16.mxu0 0
        %349 = vmatpush1.bf16.xpose.msra.mxu0 0
        %350 = vmatprep.mubr.bf16.mxu0 0
        %351 = vmatmul.mubr.bf16.gmra.mrb[0].mxu0 %v313
        %v352 = vpop.f32.mrb[0].mxu0
        %v353 = vadd.f32 0.0, %v352
        %v354 = vpop.f32.mrb[0].mxu0
        %v355 = vpop.f32.mrb[0].mxu0
        %v356 = vpop.f32.mrb[0].mxu0
        %357 = vdwg.mxu0
        %v358 = vmul.f32 %v353, 0.35355338
        %v359 = vld [vmem:[#allocation2] sm:$0xff]
        %v360 = vsel %vm311, %v358, -inf
        %361 = vmax.xlane.f32.xlu0 %v360
        %v362 = vpop.xlane.xlu0 %361
        %v363 = vmax.f32 %v359, %v362
        %v364 = vsub.f32 %v359, %v363
        %v365 = vmul.f32 %v364, 1.442695
        %v366 = vpow.pop %v365
        %368 = vset.pattern.permute.xlu0 0
        %369 = vperm.xlu0 %368, %v363
        %v370 = vpop.permute.xlu0 %369
        %v372 = vsub.f32 %v358, %v370
        %v373 = vmul.f32 %v372, 1.442695
        %v374 = vpow.pop %v373
        %v375 = vld [vmem:[#allocation3] sm:$0xff]
        %v376 = vmul.f32 %v366, %v375
        %v377 = vsel %vm311, %v374, 0.0
        %378 = vadd.xlane.f32.xlu0 %v377
        %v379 = vpop.xlane.xlu0 %378
        %v380 = vadd.f32 %v376, %v379
        %vm381 = vcmask 7168
        %382 = vst.msk [vmem:[#allocation3] sm:$0xff] %vm381, %v380
        %v383 = vld [vmem:[#allocation4] sm:$0xff]
        %385 = vset.pattern.permute.xlu0 0
        %386 = vperm.xlu0 %385, %v366
        %v387 = vpop.permute.xlu0 %386
        %v389 = vmul.f32 %v387, %v383
        %v390 = vpack.c.bf16 %v374, %v374
        %v392 = vsel %vm311, %v390, 0
        %vm394 = vcmask 1043456
        %v396 = vsel %vm394, %v310, 0
        %398 = vmatprep.subr.bf16.mxu0 0
        %399 = vmatpush1.bf16.msra.mxu0 %v396
        %400 = vmatprep.subr.bf16.mxu0 0
        %401 = vmatpush1.bf16.msra.mxu0 0
        %402 = vmatprep.subr.bf16.mxu0 0
        %403 = vmatpush1.bf16.msra.mxu0 0
        %404 = vmatprep.subr.bf16.mxu0 0
        %405 = vmatpush1.bf16.msra.mxu0 0
        %406 = vmatprep.subr.bf16.mxu0 0
        %407 = vmatpush1.bf16.msra.mxu0 0
        %408 = vmatprep.subr.bf16.mxu0 0
        %409 = vmatpush1.bf16.msra.mxu0 0
        %410 = vmatprep.subr.bf16.mxu0 0
        %411 = vmatpush1.bf16.msra.mxu0 0
        %412 = vmatprep.subr.bf16.mxu0 0
        %413 = vmatpush1.bf16.msra.mxu0 0
        %414 = vmatprep.subr.bf16.mxu0 0
        %415 = vmatpush1.bf16.msra.mxu0 0
        %416 = vmatprep.subr.bf16.mxu0 0
        %417 = vmatpush1.bf16.msra.mxu0 0
        %418 = vmatprep.subr.bf16.mxu0 0
        %419 = vmatpush1.bf16.msra.mxu0 0
        %420 = vmatprep.subr.bf16.mxu0 0
        %421 = vmatpush1.bf16.msra.mxu0 0
        %422 = vmatprep.subr.bf16.mxu0 0
        %423 = vmatpush1.bf16.msra.mxu0 0
        %424 = vmatprep.subr.bf16.mxu0 0
        %425 = vmatpush1.bf16.msra.mxu0 0
        %426 = vmatprep.subr.bf16.mxu0 0
        %427 = vmatpush1.bf16.msra.mxu0 0
        %428 = vmatprep.subr.bf16.mxu0 0
        %429 = vmatpush1.bf16.msra.mxu0 0
        %430 = vmatprep.mubr.bf16.mxu0 0
        %431 = vmatmul.mubr.bf16.gmra.mrb[0].mxu0 %v392
        %v432 = vpop.f32.mrb[0].mxu0
        %v433 = vadd.f32 0.0, %v432
        %v434 = vpop.f32.mrb[0].mxu0
        %v435 = vpop.f32.mrb[0].mxu0
        %v436 = vpop.f32.mrb[0].mxu0
        %437 = vdwg.mxu0
        %v438 = vadd.f32 %v389, %v433
        %439 = vst.msk [vmem:[#allocation4] sm:$0xff] %vm311, %v438
        %440 = vst.msk [vmem:[#allocation2] sm:$0xff] %vm381, %v363
        %v442 = vunpack.c.l.b16 %v308
        %v443 = vpack.c.b16 %v442, %v442
        %444 = vrot.lane.b32.xlu0 %v443, 120
        %v445 = vpop.permute.xlu0 %444
        %v447 = vunpack.c.l.b16 %v309
        %v448 = vpack.c.b16 %v447, %v447
        %449 = vrot.lane.b32.xlu0 %v448, 120
        %v450 = vpop.permute.xlu0 %449
        %v452 = vsel %vm311, %v445, 0
        %v455 = vsel %vm311, %v450, 0
        %457 = vmatprep.subr.bf16.mxu0 0
        %458 = vmatpush1.bf16.xpose.msra.mxu0 %v455
        %459 = vmatprep.subr.bf16.mxu0 0
        %460 = vmatpush1.bf16.xpose.msra.mxu0 0
        %461 = vmatprep.subr.bf16.mxu0 0
        %462 = vmatpush1.bf16.xpose.msra.mxu0 0
        %463 = vmatprep.subr.bf16.mxu0 0
        %464 = vmatpush1.bf16.xpose.msra.mxu0 0
        %465 = vmatprep.subr.bf16.mxu0 0
        %466 = vmatpush1.bf16.xpose.msra.mxu0 0
        %467 = vmatprep.subr.bf16.mxu0 0
        %468 = vmatpush1.bf16.xpose.msra.mxu0 0
        %469 = vmatprep.subr.bf16.mxu0 0
        %470 = vmatpush1.bf16.xpose.msra.mxu0 0
        %471 = vmatprep.subr.bf16.mxu0 0
        %472 = vmatpush1.bf16.xpose.msra.mxu0 0
        %473 = vmatprep.subr.bf16.mxu0 0
        %474 = vmatpush1.bf16.xpose.msra.mxu0 0
        %475 = vmatprep.subr.bf16.mxu0 0
        %476 = vmatpush1.bf16.xpose.msra.mxu0 0
        %477 = vmatprep.subr.bf16.mxu0 0
        %478 = vmatpush1.bf16.xpose.msra.mxu0 0
        %479 = vmatprep.subr.bf16.mxu0 0
        %480 = vmatpush1.bf16.xpose.msra.mxu0 0
        %481 = vmatprep.subr.bf16.mxu0 0
        %482 = vmatpush1.bf16.xpose.msra.mxu0 0
        %483 = vmatprep.subr.bf16.mxu0 0
        %484 = vmatpush1.bf16.xpose.msra.mxu0 0
        %485 = vmatprep.subr.bf16.mxu0 0
        %486 = vmatpush1.bf16.xpose.msra.mxu0 0
        %487 = vmatprep.subr.bf16.mxu0 0
        %488 = vmatpush1.bf16.xpose.msra.mxu0 0
        %489 = vmatprep.mubr.bf16.mxu0 0
        %490 = vmatmul.mubr.bf16.gmra.mrb[0].mxu0 %v452
        %v491 = vpop.f32.mrb[0].mxu0
        %v492 = vadd.f32 0.0, %v491
        %v493 = vpop.f32.mrb[0].mxu0
        %v494 = vpop.f32.mrb[0].mxu0
        %v495 = vpop.f32.mrb[0].mxu0
        %496 = vdwg.mxu0
        %v497 = vmul.f32 %v492, 0.35355338
        %s498 = scalar_lea.vmem [#allocation2], 8
        %v499 = vld [vmem:[%s498] sm:$0xff]
        %v500 = vsel %vm311, %v497, -inf
        %501 = vmax.xlane.f32.xlu0 %v500
        %v502 = vpop.xlane.xlu0 %501
        %v503 = vmax.f32 %v499, %v502
        %v504 = vsub.f32 %v499, %v503
        %v505 = vmul.f32 %v504, 1.442695
        %v506 = vpow.pop %v505
        %508 = vset.pattern.permute.xlu0 0
        %509 = vperm.xlu0 %508, %v503
        %v510 = vpop.permute.xlu0 %509
        %v512 = vsub.f32 %v497, %v510
        %v513 = vmul.f32 %v512, 1.442695
        %v514 = vpow.pop %v513
        %s515 = scalar_lea.vmem [#allocation3], 8
        %v516 = vld [vmem:[%s515] sm:$0xff]
        %v517 = vmul.f32 %v506, %v516
        %v518 = vsel %vm311, %v514, 0.0
        %519 = vadd.xlane.f32.xlu0 %v518
        %v520 = vpop.xlane.xlu0 %519
        %v521 = vadd.f32 %v517, %v520
        %522 = vst.msk [vmem:[%s515] sm:$0xff] %vm381, %v521
        %s523 = scalar_lea.vmem [#allocation4], 8
        %v524 = vld [vmem:[%s523] sm:$0xff]
        %526 = vset.pattern.permute.xlu0 0
        %527 = vperm.xlu0 %526, %v506
        %v528 = vpop.permute.xlu0 %527
        %v530 = vmul.f32 %v528, %v524
        %v531 = vpack.c.bf16 %v514, %v514
        %v533 = vunpack.c.l.b16 %v310
        %v534 = vpack.c.b16 %v533, %v533
        %535 = vrot.lane.b32.xlu0 %v534, 120
        %v536 = vpop.permute.xlu0 %535
        %v538 = vsel %vm311, %v531, 0
        %v541 = vsel %vm394, %v536, 0
        %543 = vmatprep.subr.bf16.mxu0 0
        %544 = vmatpush1.bf16.msra.mxu0 %v541
        %545 = vmatprep.subr.bf16.mxu0 0
        %546 = vmatpush1.bf16.msra.mxu0 0
        %547 = vmatprep.subr.bf16.mxu0 0
        %548 = vmatpush1.bf16.msra.mxu0 0
        %549 = vmatprep.subr.bf16.mxu0 0
        %550 = vmatpush1.bf16.msra.mxu0 0
        %551 = vmatprep.subr.bf16.mxu0 0
        %552 = vmatpush1.bf16.msra.mxu0 0
        %553 = vmatprep.subr.bf16.mxu0 0
        %554 = vmatpush1.bf16.msra.mxu0 0
        %555 = vmatprep.subr.bf16.mxu0 0
        %556 = vmatpush1.bf16.msra.mxu0 0
        %557 = vmatprep.subr.bf16.mxu0 0
        %558 = vmatpush1.bf16.msra.mxu0 0
        %559 = vmatprep.subr.bf16.mxu0 0
        %560 = vmatpush1.bf16.msra.mxu0 0
        %561 = vmatprep.subr.bf16.mxu0 0
        %562 = vmatpush1.bf16.msra.mxu0 0
        %563 = vmatprep.subr.bf16.mxu0 0
        %564 = vmatpush1.bf16.msra.mxu0 0
        %565 = vmatprep.subr.bf16.mxu0 0
        %566 = vmatpush1.bf16.msra.mxu0 0
        %567 = vmatprep.subr.bf16.mxu0 0
        %568 = vmatpush1.bf16.msra.mxu0 0
        %569 = vmatprep.subr.bf16.mxu0 0
        %570 = vmatpush1.bf16.msra.mxu0 0
        %571 = vmatprep.subr.bf16.mxu0 0
        %572 = vmatpush1.bf16.msra.mxu0 0
        %573 = vmatprep.subr.bf16.mxu0 0
        %574 = vmatpush1.bf16.msra.mxu0 0
        %575 = vmatprep.mubr.bf16.mxu0 0
        %576 = vmatmul.mubr.bf16.gmra.mrb[0].mxu0 %v538
        %v577 = vpop.f32.mrb[0].mxu0
        %v578 = vadd.f32 0.0, %v577
        %v579 = vpop.f32.mrb[0].mxu0
        %v580 = vpop.f32.mrb[0].mxu0
        %v581 = vpop.f32.mrb[0].mxu0
        %582 = vdwg.mxu0
        %v583 = vadd.f32 %v530, %v578
        %584 = vst.msk [vmem:[%s523] sm:$0xff] %vm311, %v583
        %585 = vst.msk [vmem:[%s498] sm:$0xff] %vm381, %v503
        %586 = vrot.lane.b32.xlu0 %v443, 112
        %v587 = vpop.permute.xlu0 %586
        %588 = vrot.lane.b32.xlu0 %v448, 112
        %v589 = vpop.permute.xlu0 %588
        %v591 = vsel %vm311, %v587, 0
        %v594 = vsel %vm311, %v589, 0
        %596 = vmatprep.subr.bf16.mxu0 0
        %597 = vmatpush1.bf16.xpose.msra.mxu0 %v594
        %598 = vmatprep.subr.bf16.mxu0 0
        %599 = vmatpush1.bf16.xpose.msra.mxu0 0
        %600 = vmatprep.subr.bf16.mxu0 0
        %601 = vmatpush1.bf16.xpose.msra.mxu0 0
        %602 = vmatprep.subr.bf16.mxu0 0
        %603 = vmatpush1.bf16.xpose.msra.mxu0 0
        %604 = vmatprep.subr.bf16.mxu0 0
        %605 = vmatpush1.bf16.xpose.msra.mxu0 0
        %606 = vmatprep.subr.bf16.mxu0 0
        %607 = vmatpush1.bf16.xpose.msra.mxu0 0
        %608 = vmatprep.subr.bf16.mxu0 0
        %609 = vmatpush1.bf16.xpose.msra.mxu0 0
        %610 = vmatprep.subr.bf16.mxu0 0
        %611 = vmatpush1.bf16.xpose.msra.mxu0 0
        %612 = vmatprep.subr.bf16.mxu0 0
        %613 = vmatpush1.bf16.xpose.msra.mxu0 0
        %614 = vmatprep.subr.bf16.mxu0 0
        %615 = vmatpush1.bf16.xpose.msra.mxu0 0
        %616 = vmatprep.subr.bf16.mxu0 0
        %617 = vmatpush1.bf16.xpose.msra.mxu0 0
        %618 = vmatprep.subr.bf16.mxu0 0
        %619 = vmatpush1.bf16.xpose.msra.mxu0 0
        %620 = vmatprep.subr.bf16.mxu0 0
        %621 = vmatpush1.bf16.xpose.msra.mxu0 0
        %622 = vmatprep.subr.bf16.mxu0 0
        %623 = vmatpush1.bf16.xpose.msra.mxu0 0
        %624 = vmatprep.subr.bf16.mxu0 0
        %625 = vmatpush1.bf16.xpose.msra.mxu0 0
        %626 = vmatprep.subr.bf16.mxu0 0
        %627 = vmatpush1.bf16.xpose.msra.mxu0 0
        %628 = vmatprep.mubr.bf16.mxu0 0
        %629 = vmatmul.mubr.bf16.gmra.mrb[0].mxu0 %v591
        %v630 = vpop.f32.mrb[0].mxu0
        %v631 = vadd.f32 0.0, %v630
        %v632 = vpop.f32.mrb[0].mxu0
        %v633 = vpop.f32.mrb[0].mxu0
        %v634 = vpop.f32.mrb[0].mxu0
        %635 = vdwg.mxu0
        %v636 = vmul.f32 %v631, 0.35355338
        %s637 = scalar_lea.vmem [#allocation2], 16
        %v638 = vld [vmem:[%s637] sm:$0xff]
        %v639 = vsel %vm311, %v636, -inf
        %640 = vmax.xlane.f32.xlu0 %v639
        %v641 = vpop.xlane.xlu0 %640
        %v642 = vmax.f32 %v638, %v641
        %v643 = vsub.f32 %v638, %v642
        %v644 = vmul.f32 %v643, 1.442695
        %v645 = vpow.pop %v644
        %647 = vset.pattern.permute.xlu0 0
        %648 = vperm.xlu0 %647, %v642
        %v649 = vpop.permute.xlu0 %648
        %v651 = vsub.f32 %v636, %v649
        %v652 = vmul.f32 %v651, 1.442695
        %v653 = vpow.pop %v652
        %s654 = scalar_lea.vmem [#allocation3], 16
        %v655 = vld [vmem:[%s654] sm:$0xff]
        %v656 = vmul.f32 %v645, %v655
        %v657 = vsel %vm311, %v653, 0.0
        %658 = vadd.xlane.f32.xlu0 %v657
        %v659 = vpop.xlane.xlu0 %658
        %v660 = vadd.f32 %v656, %v659
        %661 = vst.msk [vmem:[%s654] sm:$0xff] %vm381, %v660
        %s662 = scalar_lea.vmem [#allocation4], 16
        %v663 = vld [vmem:[%s662] sm:$0xff]
        %665 = vset.pattern.permute.xlu0 0
        %666 = vperm.xlu0 %665, %v645
        %v667 = vpop.permute.xlu0 %666
        %v669 = vmul.f32 %v667, %v663
        %v670 = vpack.c.bf16 %v653, %v653
        %671 = vrot.lane.b32.xlu0 %v534, 112
        %v672 = vpop.permute.xlu0 %671
        %v674 = vsel %vm311, %v670, 0
        %v677 = vsel %vm394, %v672, 0
        %679 = vmatprep.subr.bf16.mxu0 0
        %680 = vmatpush1.bf16.msra.mxu0 %v677
        %681 = vmatprep.subr.bf16.mxu0 0
        %682 = vmatpush1.bf16.msra.mxu0 0
        %683 = vmatprep.subr.bf16.mxu0 0
        %684 = vmatpush1.bf16.msra.mxu0 0
        %685 = vmatprep.subr.bf16.mxu0 0
        %686 = vmatpush1.bf16.msra.mxu0 0
        %687 = vmatprep.subr.bf16.mxu0 0
        %688 = vmatpush1.bf16.msra.mxu0 0
        %689 = vmatprep.subr.bf16.mxu0 0
        %690 = vmatpush1.bf16.msra.mxu0 0
        %691 = vmatprep.subr.bf16.mxu0 0
        %692 = vmatpush1.bf16.msra.mxu0 0
        %693 = vmatprep.subr.bf16.mxu0 0
        %694 = vmatpush1.bf16.msra.mxu0 0
        %695 = vmatprep.subr.bf16.mxu0 0
        %696 = vmatpush1.bf16.msra.mxu0 0
        %697 = vmatprep.subr.bf16.mxu0 0
        %698 = vmatpush1.bf16.msra.mxu0 0
        %699 = vmatprep.subr.bf16.mxu0 0
        %700 = vmatpush1.bf16.msra.mxu0 0
        %701 = vmatprep.subr.bf16.mxu0 0
        %702 = vmatpush1.bf16.msra.mxu0 0
        %703 = vmatprep.subr.bf16.mxu0 0
        %704 = vmatpush1.bf16.msra.mxu0 0
        %705 = vmatprep.subr.bf16.mxu0 0
        %706 = vmatpush1.bf16.msra.mxu0 0
        %707 = vmatprep.subr.bf16.mxu0 0
        %708 = vmatpush1.bf16.msra.mxu0 0
        %709 = vmatprep.subr.bf16.mxu0 0
        %710 = vmatpush1.bf16.msra.mxu0 0
        %711 = vmatprep.mubr.bf16.mxu0 0
        %712 = vmatmul.mubr.bf16.gmra.mrb[0].mxu0 %v674
        %v713 = vpop.f32.mrb[0].mxu0
        %v714 = vadd.f32 0.0, %v713
        %v715 = vpop.f32.mrb[0].mxu0
        %v716 = vpop.f32.mrb[0].mxu0
        %v717 = vpop.f32.mrb[0].mxu0
        %718 = vdwg.mxu0
        %v719 = vadd.f32 %v669, %v714
        %720 = vst.msk [vmem:[%s662] sm:$0xff] %vm311, %v719
        %721 = vst.msk [vmem:[%s637] sm:$0xff] %vm381, %v642
        %722 = vrot.lane.b32.xlu0 %v443, 104
        %v723 = vpop.permute.xlu0 %722
        %724 = vrot.lane.b32.xlu0 %v448, 104
        %v725 = vpop.permute.xlu0 %724
        %v727 = vsel %vm311, %v723, 0
        %v730 = vsel %vm311, %v725, 0
        %732 = vmatprep.subr.bf16.mxu0 0
        %733 = vmatpush1.bf16.xpose.msra.mxu0 %v730
        %734 = vmatprep.subr.bf16.mxu0 0
        %735 = vmatpush1.bf16.xpose.msra.mxu0 0
        %736 = vmatprep.subr.bf16.mxu0 0
        %737 = vmatpush1.bf16.xpose.msra.mxu0 0
        %738 = vmatprep.subr.bf16.mxu0 0
        %739 = vmatpush1.bf16.xpose.msra.mxu0 0
        %740 = vmatprep.subr.bf16.mxu0 0
        %741 = vmatpush1.bf16.xpose.msra.mxu0 0
        %742 = vmatprep.subr.bf16.mxu0 0
        %743 = vmatpush1.bf16.xpose.msra.mxu0 0
        %744 = vmatprep.subr.bf16.mxu0 0
        %745 = vmatpush1.bf16.xpose.msra.mxu0 0
        %746 = vmatprep.subr.bf16.mxu0 0
        %747 = vmatpush1.bf16.xpose.msra.mxu0 0
        %748 = vmatprep.subr.bf16.mxu0 0
        %749 = vmatpush1.bf16.xpose.msra.mxu0 0
        %750 = vmatprep.subr.bf16.mxu0 0
        %751 = vmatpush1.bf16.xpose.msra.mxu0 0
        %752 = vmatprep.subr.bf16.mxu0 0
        %753 = vmatpush1.bf16.xpose.msra.mxu0 0
        %754 = vmatprep.subr.bf16.mxu0 0
        %755 = vmatpush1.bf16.xpose.msra.mxu0 0
        %756 = vmatprep.subr.bf16.mxu0 0
        %757 = vmatpush1.bf16.xpose.msra.mxu0 0
        %758 = vmatprep.subr.bf16.mxu0 0
        %759 = vmatpush1.bf16.xpose.msra.mxu0 0
        %760 = vmatprep.subr.bf16.mxu0 0
        %761 = vmatpush1.bf16.xpose.msra.mxu0 0
        %762 = vmatprep.subr.bf16.mxu0 0
        %763 = vmatpush1.bf16.xpose.msra.mxu0 0
        %764 = vmatprep.mubr.bf16.mxu0 0
        %765 = vmatmul.mubr.bf16.gmra.mrb[0].mxu0 %v727
        %v766 = vpop.f32.mrb[0].mxu0
        %v767 = vadd.f32 0.0, %v766
        %v768 = vpop.f32.mrb[0].mxu0
        %v769 = vpop.f32.mrb[0].mxu0
        %v770 = vpop.f32.mrb[0].mxu0
        %771 = vdwg.mxu0
        %v772 = vmul.f32 %v767, 0.35355338
        %s773 = scalar_lea.vmem [#allocation2], 24
        %v774 = vld [vmem:[%s773] sm:$0xff]
        %v775 = vsel %vm311, %v772, -inf
        %776 = vmax.xlane.f32.xlu0 %v775
        %v777 = vpop.xlane.xlu0 %776
        %v778 = vmax.f32 %v774, %v777
        %v779 = vsub.f32 %v774, %v778
        %v780 = vmul.f32 %v779, 1.442695
        %v781 = vpow.pop %v780
        %783 = vset.pattern.permute.xlu0 0
        %784 = vperm.xlu0 %783, %v778
        %v785 = vpop.permute.xlu0 %784
        %v787 = vsub.f32 %v772, %v785
        %v788 = vmul.f32 %v787, 1.442695
        %v789 = vpow.pop %v788
        %s790 = scalar_lea.vmem [#allocation3], 24
        %v791 = vld [vmem:[%s790] sm:$0xff]
        %v792 = vmul.f32 %v781, %v791
        %v793 = vsel %vm311, %v789, 0.0
        %794 = vadd.xlane.f32.xlu0 %v793
        %v795 = vpop.xlane.xlu0 %794
        %v796 = vadd.f32 %v792, %v795
        %797 = vst.msk [vmem:[%s790] sm:$0xff] %vm381, %v796
        %s798 = scalar_lea.vmem [#allocation4], 24
        %v799 = vld [vmem:[%s798] sm:$0xff]
        %801 = vset.pattern.permute.xlu0 0
        %802 = vperm.xlu0 %801, %v781
        %v803 = vpop.permute.xlu0 %802
        %v805 = vmul.f32 %v803, %v799
        %v806 = vpack.c.bf16 %v789, %v789
        %807 = vrot.lane.b32.xlu0 %v534, 104
        %v808 = vpop.permute.xlu0 %807
        %v810 = vsel %vm311, %v806, 0
        %v813 = vsel %vm394, %v808, 0
        %815 = vmatprep.subr.bf16.mxu0 0
        %816 = vmatpush1.bf16.msra.mxu0 %v813
        %817 = vmatprep.subr.bf16.mxu0 0
        %818 = vmatpush1.bf16.msra.mxu0 0
        %819 = vmatprep.subr.bf16.mxu0 0
        %820 = vmatpush1.bf16.msra.mxu0 0
        %821 = vmatprep.subr.bf16.mxu0 0
        %822 = vmatpush1.bf16.msra.mxu0 0
        %823 = vmatprep.subr.bf16.mxu0 0
        %824 = vmatpush1.bf16.msra.mxu0 0
        %825 = vmatprep.subr.bf16.mxu0 0
        %826 = vmatpush1.bf16.msra.mxu0 0
        %827 = vmatprep.subr.bf16.mxu0 0
        %828 = vmatpush1.bf16.msra.mxu0 0
        %829 = vmatprep.subr.bf16.mxu0 0
        %830 = vmatpush1.bf16.msra.mxu0 0
        %831 = vmatprep.subr.bf16.mxu0 0
        %832 = vmatpush1.bf16.msra.mxu0 0
        %833 = vmatprep.subr.bf16.mxu0 0
        %834 = vmatpush1.bf16.msra.mxu0 0
        %835 = vmatprep.subr.bf16.mxu0 0
        %836 = vmatpush1.bf16.msra.mxu0 0
        %837 = vmatprep.subr.bf16.mxu0 0
        %838 = vmatpush1.bf16.msra.mxu0 0
        %839 = vmatprep.subr.bf16.mxu0 0
        %840 = vmatpush1.bf16.msra.mxu0 0
        %841 = vmatprep.subr.bf16.mxu0 0
        %842 = vmatpush1.bf16.msra.mxu0 0
        %843 = vmatprep.subr.bf16.mxu0 0
        %844 = vmatpush1.bf16.msra.mxu0 0
        %845 = vmatprep.subr.bf16.mxu0 0
        %846 = vmatpush1.bf16.msra.mxu0 0
        %847 = vmatprep.mubr.bf16.mxu0 0
        %848 = vmatmul.mubr.bf16.gmra.mrb[0].mxu0 %v810
        %v849 = vpop.f32.mrb[0].mxu0
        %v850 = vadd.f32 0.0, %v849
        %v851 = vpop.f32.mrb[0].mxu0
        %v852 = vpop.f32.mrb[0].mxu0
        %v853 = vpop.f32.mrb[0].mxu0
        %854 = vdwg.mxu0
        %v855 = vadd.f32 %v805, %v850
        %856 = vst.msk [vmem:[%s798] sm:$0xff] %vm311, %v855
        %857 = vst.msk [vmem:[%s773] sm:$0xff] %vm381, %v778
      $region40: #{_lambda_.12} parent=31 // pred_fallthru
        _
      %p858 = scmp.eq.s32.totalorder %s285, %s284
      // Predicated region
      $region41: #{_lambda_.12} parent=31 // pred_check
        %p859 = pneg %p858
      $region42: #{_lambda_.12} parent=31 // pred_check_branch
        %861 = sbr.rel (%p859) target = $region44
      $region43: #{_lambda_.12} parent=31 // pred_region
        %v862 = vld [vmem:[%s254] sm:$0xf]
        %v863 = vld [vmem:[%s263] sm:$0xf]
        %v864 = vld [vmem:[%s272] sm:$0xf]
        %v865 = vlaneseq
        %v866 = vshrl.u32 %v865, 7
        %v867 = vlaneseq
        %v868 = vand.u32 %v867, 127
        %vm869 = vcmp.ge.s32.totalorder %v866, %v868
        %vm870 = vcmask 64512
        %v872 = vsel %vm870, %v862, 0
        %v875 = vsel %vm870, %v863, 0
        %877 = vmatprep.subr.bf16.mxu0 0
        %878 = vmatpush1.bf16.xpose.msra.mxu0 %v875
        %879 = vmatprep.subr.bf16.mxu0 0
        %880 = vmatpush1.bf16.xpose.msra.mxu0 0
        %881 = vmatprep.subr.bf16.mxu0 0
        %882 = vmatpush1.bf16.xpose.msra.mxu0 0
        %883 = vmatprep.subr.bf16.mxu0 0
        %884 = vmatpush1.bf16.xpose.msra.mxu0 0
        %885 = vmatprep.subr.bf16.mxu0 0
        %886 = vmatpush1.bf16.xpose.msra.mxu0 0
        %887 = vmatprep.subr.bf16.mxu0 0
        %888 = vmatpush1.bf16.xpose.msra.mxu0 0
        %889 = vmatprep.subr.bf16.mxu0 0
        %890 = vmatpush1.bf16.xpose.msra.mxu0 0
        %891 = vmatprep.subr.bf16.mxu0 0
        %892 = vmatpush1.bf16.xpose.msra.mxu0 0
        %893 = vmatprep.subr.bf16.mxu0 0
        %894 = vmatpush1.bf16.xpose.msra.mxu0 0
        %895 = vmatprep.subr.bf16.mxu0 0
        %896 = vmatpush1.bf16.xpose.msra.mxu0 0
        %897 = vmatprep.subr.bf16.mxu0 0
        %898 = vmatpush1.bf16.xpose.msra.mxu0 0
        %899 = vmatprep.subr.bf16.mxu0 0
        %900 = vmatpush1.bf16.xpose.msra.mxu0 0
        %901 = vmatprep.subr.bf16.mxu0 0
        %902 = vmatpush1.bf16.xpose.msra.mxu0 0
        %903 = vmatprep.subr.bf16.mxu0 0
        %904 = vmatpush1.bf16.xpose.msra.mxu0 0
        %905 = vmatprep.subr.bf16.mxu0 0
        %906 = vmatpush1.bf16.xpose.msra.mxu0 0
        %907 = vmatprep.subr.bf16.mxu0 0
        %908 = vmatpush1.bf16.xpose.msra.mxu0 0
        %909 = vmatprep.mubr.bf16.mxu0 0
        %910 = vmatmul.mubr.bf16.gmra.mrb[0].mxu0 %v872
        %v911 = vpop.f32.mrb[0].mxu0
        %v912 = vadd.f32 0.0, %v911
        %v913 = vpop.f32.mrb[0].mxu0
        %v914 = vpop.f32.mrb[0].mxu0
        %v915 = vpop.f32.mrb[0].mxu0
        %916 = vdwg.mxu0
        %v917 = vmul.f32 %v912, 0.35355338
        %v918 = vsel %vm869, %v917, -1e+30
        %v919 = vld [vmem:[#allocation2] sm:$0xff]
        %v920 = vsel %vm870, %v918, -inf
        %921 = vmax.xlane.f32.xlu0 %v920
        %v922 = vpop.xlane.xlu0 %921
        %v923 = vmax.f32 %v919, %v922
        %v924 = vsub.f32 %v919, %v923
        %v925 = vmul.f32 %v924, 1.442695
        %v926 = vpow.pop %v925
        %928 = vset.pattern.permute.xlu0 0
        %929 = vperm.xlu0 %928, %v923
        %v930 = vpop.permute.xlu0 %929
        %v932 = vsub.f32 %v918, %v930
        %v933 = vmul.f32 %v932, 1.442695
        %v934 = vpow.pop %v933
        %v935 = vld [vmem:[#allocation3] sm:$0xff]
        %v936 = vmul.f32 %v926, %v935
        %v937 = vsel %vm870, %v934, 0.0
        %938 = vadd.xlane.f32.xlu0 %v937
        %v939 = vpop.xlane.xlu0 %938
        %v940 = vadd.f32 %v936, %v939
        %vm941 = vcmask 7168
        %942 = vst.msk [vmem:[#allocation3] sm:$0xff] %vm941, %v940
        %v943 = vld [vmem:[#allocation4] sm:$0xff]
        %945 = vset.pattern.permute.xlu0 0
        %946 = vperm.xlu0 %945, %v926
        %v947 = vpop.permute.xlu0 %946
        %v949 = vmul.f32 %v947, %v943
        %v950 = vpack.c.bf16 %v934, %v934
        %v952 = vsel %vm870, %v950, 0
        %vm954 = vcmask 1043456
        %v956 = vsel %vm954, %v864, 0
        %958 = vmatprep.subr.bf16.mxu0 0
        %959 = vmatpush1.bf16.msra.mxu0 %v956
        %960 = vmatprep.subr.bf16.mxu0 0
        %961 = vmatpush1.bf16.msra.mxu0 0
        %962 = vmatprep.subr.bf16.mxu0 0
        %963 = vmatpush1.bf16.msra.mxu0 0
        %964 = vmatprep.subr.bf16.mxu0 0
        %965 = vmatpush1.bf16.msra.mxu0 0
        %966 = vmatprep.subr.bf16.mxu0 0
        %967 = vmatpush1.bf16.msra.mxu0 0
        %968 = vmatprep.subr.bf16.mxu0 0
        %969 = vmatpush1.bf16.msra.mxu0 0
        %970 = vmatprep.subr.bf16.mxu0 0
        %971 = vmatpush1.bf16.msra.mxu0 0
        %972 = vmatprep.subr.bf16.mxu0 0
        %973 = vmatpush1.bf16.msra.mxu0 0
        %974 = vmatprep.subr.bf16.mxu0 0
        %975 = vmatpush1.bf16.msra.mxu0 0
        %976 = vmatprep.subr.bf16.mxu0 0
        %977 = vmatpush1.bf16.msra.mxu0 0
        %978 = vmatprep.subr.bf16.mxu0 0
        %979 = vmatpush1.bf16.msra.mxu0 0
        %980 = vmatprep.subr.bf16.mxu0 0
        %981 = vmatpush1.bf16.msra.mxu0 0
        %982 = vmatprep.subr.bf16.mxu0 0
        %983 = vmatpush1.bf16.msra.mxu0 0
        %984 = vmatprep.subr.bf16.mxu0 0
        %985 = vmatpush1.bf16.msra.mxu0 0
        %986 = vmatprep.subr.bf16.mxu0 0
        %987 = vmatpush1.bf16.msra.mxu0 0
        %988 = vmatprep.subr.bf16.mxu0 0
        %989 = vmatpush1.bf16.msra.mxu0 0
        %990 = vmatprep.mubr.bf16.mxu0 0
        %991 = vmatmul.mubr.bf16.gmra.mrb[0].mxu0 %v952
        %v992 = vpop.f32.mrb[0].mxu0
        %v993 = vadd.f32 0.0, %v992
        %v994 = vpop.f32.mrb[0].mxu0
        %v995 = vpop.f32.mrb[0].mxu0
        %v996 = vpop.f32.mrb[0].mxu0
        %997 = vdwg.mxu0
        %v998 = vadd.f32 %v949, %v993
        %999 = vst.msk [vmem:[#allocation4] sm:$0xff] %vm870, %v998
        %1000 = vst.msk [vmem:[#allocation2] sm:$0xff] %vm941, %v923
        %v1002 = vunpack.c.l.b16 %v862
        %v1003 = vpack.c.b16 %v1002, %v1002
        %1004 = vrot.lane.b32.xlu0 %v1003, 120
        %v1005 = vpop.permute.xlu0 %1004
        %v1007 = vunpack.c.l.b16 %v863
        %v1008 = vpack.c.b16 %v1007, %v1007
        %1009 = vrot.lane.b32.xlu0 %v1008, 120
        %v1010 = vpop.permute.xlu0 %1009
        %v1012 = vsel %vm870, %v1005, 0
        %v1015 = vsel %vm870, %v1010, 0
        %1017 = vmatprep.subr.bf16.mxu0 0
        %1018 = vmatpush1.bf16.xpose.msra.mxu0 %v1015
        %1019 = vmatprep.subr.bf16.mxu0 0
        %1020 = vmatpush1.bf16.xpose.msra.mxu0 0
        %1021 = vmatprep.subr.bf16.mxu0 0
        %1022 = vmatpush1.bf16.xpose.msra.mxu0 0
        %1023 = vmatprep.subr.bf16.mxu0 0
        %1024 = vmatpush1.bf16.xpose.msra.mxu0 0
        %1025 = vmatprep.subr.bf16.mxu0 0
        %1026 = vmatpush1.bf16.xpose.msra.mxu0 0
        %1027 = vmatprep.subr.bf16.mxu0 0
        %1028 = vmatpush1.bf16.xpose.msra.mxu0 0
        %1029 = vmatprep.subr.bf16.mxu0 0
        %1030 = vmatpush1.bf16.xpose.msra.mxu0 0
        %1031 = vmatprep.subr.bf16.mxu0 0
        %1032 = vmatpush1.bf16.xpose.msra.mxu0 0
        %1033 = vmatprep.subr.bf16.mxu0 0
        %1034 = vmatpush1.bf16.xpose.msra.mxu0 0
        %1035 = vmatprep.subr.bf16.mxu0 0
        %1036 = vmatpush1.bf16.xpose.msra.mxu0 0
        %1037 = vmatprep.subr.bf16.mxu0 0
        %1038 = vmatpush1.bf16.xpose.msra.mxu0 0
        %1039 = vmatprep.subr.bf16.mxu0 0
        %1040 = vmatpush1.bf16.xpose.msra.mxu0 0
        %1041 = vmatprep.subr.bf16.mxu0 0
        %1042 = vmatpush1.bf16.xpose.msra.mxu0 0
        %1043 = vmatprep.subr.bf16.mxu0 0
        %1044 = vmatpush1.bf16.xpose.msra.mxu0 0
        %1045 = vmatprep.subr.bf16.mxu0 0
        %1046 = vmatpush1.bf16.xpose.msra.mxu0 0
        %1047 = vmatprep.subr.bf16.mxu0 0
        %1048 = vmatpush1.bf16.xpose.msra.mxu0 0
        %1049 = vmatprep.mubr.bf16.mxu0 0
        %1050 = vmatmul.mubr.bf16.gmra.mrb[0].mxu0 %v1012
        %v1051 = vpop.f32.mrb[0].mxu0
        %v1052 = vadd.f32 0.0, %v1051
        %v1053 = vpop.f32.mrb[0].mxu0
        %v1054 = vpop.f32.mrb[0].mxu0
        %v1055 = vpop.f32.mrb[0].mxu0
        %1056 = vdwg.mxu0
        %v1057 = vmul.f32 %v1052, 0.35355338
        %v1058 = vsel %vm869, %v1057, -1e+30
        %s1059 = scalar_lea.vmem [#allocation2], 8
        %v1060 = vld [vmem:[%s1059] sm:$0xff]
        %v1061 = vsel %vm870, %v1058, -inf
        %1062 = vmax.xlane.f32.xlu0 %v1061
        %v1063 = vpop.xlane.xlu0 %1062
        %v1064 = vmax.f32 %v1060, %v1063
        %v1065 = vsub.f32 %v1060, %v1064
        %v1066 = vmul.f32 %v1065, 1.442695
        %v1067 = vpow.pop %v1066
        %1069 = vset.pattern.permute.xlu0 0
        %1070 = vperm.xlu0 %1069, %v1064
        %v1071 = vpop.permute.xlu0 %1070
        %v1073 = vsub.f32 %v1058, %v1071
        %v1074 = vmul.f32 %v1073, 1.442695
        %v1075 = vpow.pop %v1074
        %s1076 = scalar_lea.vmem [#allocation3], 8
        %v1077 = vld [vmem:[%s1076] sm:$0xff]
        %v1078 = vmul.f32 %v1067, %v1077
        %v1079 = vsel %vm870, %v1075, 0.0
        %1080 = vadd.xlane.f32.xlu0 %v1079
        %v1081 = vpop.xlane.xlu0 %1080
        %v1082 = vadd.f32 %v1078, %v1081
        %1083 = vst.msk [vmem:[%s1076] sm:$0xff] %vm941, %v1082
        %s1084 = scalar_lea.vmem [#allocation4], 8
        %v1085 = vld [vmem:[%s1084] sm:$0xff]
        %1087 = vset.pattern.permute.xlu0 0
        %1088 = vperm.xlu0 %1087, %v1067
        %v1089 = vpop.permute.xlu0 %1088
        %v1091 = vmul.f32 %v1089, %v1085
        %v1092 = vpack.c.bf16 %v1075, %v1075
        %v1094 = vunpack.c.l.b16 %v864
        %v1095 = vpack.c.b16 %v1094, %v1094
        %1096 = vrot.lane.b32.xlu0 %v1095, 120
        %v1097 = vpop.permute.xlu0 %1096
        %v1099 = vsel %vm870, %v1092, 0
        %v1102 = vsel %vm954, %v1097, 0
        %1104 = vmatprep.subr.bf16.mxu0 0
        %1105 = vmatpush1.bf16.msra.mxu0 %v1102
        %1106 = vmatprep.subr.bf16.mxu0 0
        %1107 = vmatpush1.bf16.msra.mxu0 0
        %1108 = vmatprep.subr.bf16.mxu0 0
        %1109 = vmatpush1.bf16.msra.mxu0 0
        %1110 = vmatprep.subr.bf16.mxu0 0
        %1111 = vmatpush1.bf16.msra.mxu0 0
        %1112 = vmatprep.subr.bf16.mxu0 0
        %1113 = vmatpush1.bf16.msra.mxu0 0
        %1114 = vmatprep.subr.bf16.mxu0 0
        %1115 = vmatpush1.bf16.msra.mxu0 0
        %1116 = vmatprep.subr.bf16.mxu0 0
        %1117 = vmatpush1.bf16.msra.mxu0 0
        %1118 = vmatprep.subr.bf16.mxu0 0
        %1119 = vmatpush1.bf16.msra.mxu0 0
        %1120 = vmatprep.subr.bf16.mxu0 0
        %1121 = vmatpush1.bf16.msra.mxu0 0
        %1122 = vmatprep.subr.bf16.mxu0 0
        %1123 = vmatpush1.bf16.msra.mxu0 0
        %1124 = vmatprep.subr.bf16.mxu0 0
        %1125 = vmatpush1.bf16.msra.mxu0 0
        %1126 = vmatprep.subr.bf16.mxu0 0
        %1127 = vmatpush1.bf16.msra.mxu0 0
        %1128 = vmatprep.subr.bf16.mxu0 0
        %1129 = vmatpush1.bf16.msra.mxu0 0
        %1130 = vmatprep.subr.bf16.mxu0 0
        %1131 = vmatpush1.bf16.msra.mxu0 0
        %1132 = vmatprep.subr.bf16.mxu0 0
        %1133 = vmatpush1.bf16.msra.mxu0 0
        %1134 = vmatprep.subr.bf16.mxu0 0
        %1135 = vmatpush1.bf16.msra.mxu0 0
        %1136 = vmatprep.mubr.bf16.mxu0 0
        %1137 = vmatmul.mubr.bf16.gmra.mrb[0].mxu0 %v1099
        %v1138 = vpop.f32.mrb[0].mxu0
        %v1139 = vadd.f32 0.0, %v1138
        %v1140 = vpop.f32.mrb[0].mxu0
        %v1141 = vpop.f32.mrb[0].mxu0
        %v1142 = vpop.f32.mrb[0].mxu0
        %1143 = vdwg.mxu0
        %v1144 = vadd.f32 %v1091, %v1139
        %1145 = vst.msk [vmem:[%s1084] sm:$0xff] %vm870, %v1144
        %1146 = vst.msk [vmem:[%s1059] sm:$0xff] %vm941, %v1064
        %1147 = vrot.lane.b32.xlu0 %v1003, 112
        %v1148 = vpop.permute.xlu0 %1147
        %1149 = vrot.lane.b32.xlu0 %v1008, 112
        %v1150 = vpop.permute.xlu0 %1149
        %v1152 = vsel %vm870, %v1148, 0
        %v1155 = vsel %vm870, %v1150, 0
        %1157 = vmatprep.subr.bf16.mxu0 0
        %1158 = vmatpush1.bf16.xpose.msra.mxu0 %v1155
        %1159 = vmatprep.subr.bf16.mxu0 0
        %1160 = vmatpush1.bf16.xpose.msra.mxu0 0
        %1161 = vmatprep.subr.bf16.mxu0 0
        %1162 = vmatpush1.bf16.xpose.msra.mxu0 0
        %1163 = vmatprep.subr.bf16.mxu0 0
        %1164 = vmatpush1.bf16.xpose.msra.mxu0 0
        %1165 = vmatprep.subr.bf16.mxu0 0
        %1166 = vmatpush1.bf16.xpose.msra.mxu0 0
        %1167 = vmatprep.subr.bf16.mxu0 0
        %1168 = vmatpush1.bf16.xpose.msra.mxu0 0
        %1169 = vmatprep.subr.bf16.mxu0 0
        %1170 = vmatpush1.bf16.xpose.msra.mxu0 0
        %1171 = vmatprep.subr.bf16.mxu0 0
        %1172 = vmatpush1.bf16.xpose.msra.mxu0 0
        %1173 = vmatprep.subr.bf16.mxu0 0
        %1174 = vmatpush1.bf16.xpose.msra.mxu0 0
        %1175 = vmatprep.subr.bf16.mxu0 0
        %1176 = vmatpush1.bf16.xpose.msra.mxu0 0
        %1177 = vmatprep.subr.bf16.mxu0 0
        %1178 = vmatpush1.bf16.xpose.msra.mxu0 0
        %1179 = vmatprep.subr.bf16.mxu0 0
        %1180 = vmatpush1.bf16.xpose.msra.mxu0 0
        %1181 = vmatprep.subr.bf16.mxu0 0
        %1182 = vmatpush1.bf16.xpose.msra.mxu0 0
        %1183 = vmatprep.subr.bf16.mxu0 0
        %1184 = vmatpush1.bf16.xpose.msra.mxu0 0
        %1185 = vmatprep.subr.bf16.mxu0 0
        %1186 = vmatpush1.bf16.xpose.msra.mxu0 0
        %1187 = vmatprep.subr.bf16.mxu0 0
        %1188 = vmatpush1.bf16.xpose.msra.mxu0 0
        %1189 = vmatprep.mubr.bf16.mxu0 0
        %1190 = vmatmul.mubr.bf16.gmra.mrb[0].mxu0 %v1152
        %v1191 = vpop.f32.mrb[0].mxu0
        %v1192 = vadd.f32 0.0, %v1191
        %v1193 = vpop.f32.mrb[0].mxu0
        %v1194 = vpop.f32.mrb[0].mxu0
        %v1195 = vpop.f32.mrb[0].mxu0
        %1196 = vdwg.mxu0
        %v1197 = vmul.f32 %v1192, 0.35355338
        %v1198 = vsel %vm869, %v1197, -1e+30
        %s1199 = scalar_lea.vmem [#allocation2], 16
        %v1200 = vld [vmem:[%s1199] sm:$0xff]
        %v1201 = vsel %vm870, %v1198, -inf
        %1202 = vmax.xlane.f32.xlu0 %v1201
        %v1203 = vpop.xlane.xlu0 %1202
        %v1204 = vmax.f32 %v1200, %v1203
        %v1205 = vsub.f32 %v1200, %v1204
        %v1206 = vmul.f32 %v1205, 1.442695
        %v1207 = vpow.pop %v1206
        %1209 = vset.pattern.permute.xlu0 0
        %1210 = vperm.xlu0 %1209, %v1204
        %v1211 = vpop.permute.xlu0 %1210
        %v1213 = vsub.f32 %v1198, %v1211
        %v1214 = vmul.f32 %v1213, 1.442695
        %v1215 = vpow.pop %v1214
        %s1216 = scalar_lea.vmem [#allocation3], 16
        %v1217 = vld [vmem:[%s1216] sm:$0xff]
        %v1218 = vmul.f32 %v1207, %v1217
        %v1219 = vsel %vm870, %v1215, 0.0
        %1220 = vadd.xlane.f32.xlu0 %v1219
        %v1221 = vpop.xlane.xlu0 %1220
        %v1222 = vadd.f32 %v1218, %v1221
        %1223 = vst.msk [vmem:[%s1216] sm:$0xff] %vm941, %v1222
        %s1224 = scalar_lea.vmem [#allocation4], 16
        %v1225 = vld [vmem:[%s1224] sm:$0xff]
        %1227 = vset.pattern.permute.xlu0 0
        %1228 = vperm.xlu0 %1227, %v1207
        %v1229 = vpop.permute.xlu0 %1228
        %v1231 = vmul.f32 %v1229, %v1225
        %v1232 = vpack.c.bf16 %v1215, %v1215
        %1233 = vrot.lane.b32.xlu0 %v1095, 112
        %v1234 = vpop.permute.xlu0 %1233
        %v1236 = vsel %vm870, %v1232, 0
        %v1239 = vsel %vm954, %v1234, 0
        %1241 = vmatprep.subr.bf16.mxu0 0
        %1242 = vmatpush1.bf16.msra.mxu0 %v1239
        %1243 = vmatprep.subr.bf16.mxu0 0
        %1244 = vmatpush1.bf16.msra.mxu0 0
        %1245 = vmatprep.subr.bf16.mxu0 0
        %1246 = vmatpush1.bf16.msra.mxu0 0
        %1247 = vmatprep.subr.bf16.mxu0 0
        %1248 = vmatpush1.bf16.msra.mxu0 0
        %1249 = vmatprep.subr.bf16.mxu0 0
        %1250 = vmatpush1.bf16.msra.mxu0 0
        %1251 = vmatprep.subr.bf16.mxu0 0
        %1252 = vmatpush1.bf16.msra.mxu0 0
        %1253 = vmatprep.subr.bf16.mxu0 0
        %1254 = vmatpush1.bf16.msra.mxu0 0
        %1255 = vmatprep.subr.bf16.mxu0 0
        %1256 = vmatpush1.bf16.msra.mxu0 0
        %1257 = vmatprep.subr.bf16.mxu0 0
        %1258 = vmatpush1.bf16.msra.mxu0 0
        %1259 = vmatprep.subr.bf16.mxu0 0
        %1260 = vmatpush1.bf16.msra.mxu0 0
        %1261 = vmatprep.subr.bf16.mxu0 0
        %1262 = vmatpush1.bf16.msra.mxu0 0
        %1263 = vmatprep.subr.bf16.mxu0 0
        %1264 = vmatpush1.bf16.msra.mxu0 0
        %1265 = vmatprep.subr.bf16.mxu0 0
        %1266 = vmatpush1.bf16.msra.mxu0 0
        %1267 = vmatprep.subr.bf16.mxu0 0
        %1268 = vmatpush1.bf16.msra.mxu0 0
        %1269 = vmatprep.subr.bf16.mxu0 0
        %1270 = vmatpush1.bf16.msra.mxu0 0
        %1271 = vmatprep.subr.bf16.mxu0 0
        %1272 = vmatpush1.bf16.msra.mxu0 0
        %1273 = vmatprep.mubr.bf16.mxu0 0
        %1274 = vmatmul.mubr.bf16.gmra.mrb[0].mxu0 %v1236
        %v1275 = vpop.f32.mrb[0].mxu0
        %v1276 = vadd.f32 0.0, %v1275
        %v1277 = vpop.f32.mrb[0].mxu0
        %v1278 = vpop.f32.mrb[0].mxu0
        %v1279 = vpop.f32.mrb[0].mxu0
        %1280 = vdwg.mxu0
        %v1281 = vadd.f32 %v1231, %v1276
        %1282 = vst.msk [vmem:[%s1224] sm:$0xff] %vm870, %v1281
        %1283 = vst.msk [vmem:[%s1199] sm:$0xff] %vm941, %v1204
        %1284 = vrot.lane.b32.xlu0 %v1003, 104
        %v1285 = vpop.permute.xlu0 %1284
        %1286 = vrot.lane.b32.xlu0 %v1008, 104
        %v1287 = vpop.permute.xlu0 %1286
        %v1289 = vsel %vm870, %v1285, 0
        %v1292 = vsel %vm870, %v1287, 0
        %1294 = vmatprep.subr.bf16.mxu0 0
        %1295 = vmatpush1.bf16.xpose.msra.mxu0 %v1292
        %1296 = vmatprep.subr.bf16.mxu0 0
        %1297 = vmatpush1.bf16.xpose.msra.mxu0 0
        %1298 = vmatprep.subr.bf16.mxu0 0
        %1299 = vmatpush1.bf16.xpose.msra.mxu0 0
        %1300 = vmatprep.subr.bf16.mxu0 0
        %1301 = vmatpush1.bf16.xpose.msra.mxu0 0
        %1302 = vmatprep.subr.bf16.mxu0 0
        %1303 = vmatpush1.bf16.xpose.msra.mxu0 0
        %1304 = vmatprep.subr.bf16.mxu0 0
        %1305 = vmatpush1.bf16.xpose.msra.mxu0 0
        %1306 = vmatprep.subr.bf16.mxu0 0
        %1307 = vmatpush1.bf16.xpose.msra.mxu0 0
        %1308 = vmatprep.subr.bf16.mxu0 0
        %1309 = vmatpush1.bf16.xpose.msra.mxu0 0
        %1310 = vmatprep.subr.bf16.mxu0 0
        %1311 = vmatpush1.bf16.xpose.msra.mxu0 0
        %1312 = vmatprep.subr.bf16.mxu0 0
        %1313 = vmatpush1.bf16.xpose.msra.mxu0 0
        %1314 = vmatprep.subr.bf16.mxu0 0
        %1315 = vmatpush1.bf16.xpose.msra.mxu0 0
        %1316 = vmatprep.subr.bf16.mxu0 0
        %1317 = vmatpush1.bf16.xpose.msra.mxu0 0
        %1318 = vmatprep.subr.bf16.mxu0 0
        %1319 = vmatpush1.bf16.xpose.msra.mxu0 0
        %1320 = vmatprep.subr.bf16.mxu0 0
        %1321 = vmatpush1.bf16.xpose.msra.mxu0 0
        %1322 = vmatprep.subr.bf16.mxu0 0
        %1323 = vmatpush1.bf16.xpose.msra.mxu0 0
        %1324 = vmatprep.subr.bf16.mxu0 0
        %1325 = vmatpush1.bf16.xpose.msra.mxu0 0
        %1326 = vmatprep.mubr.bf16.mxu0 0
        %1327 = vmatmul.mubr.bf16.gmra.mrb[0].mxu0 %v1289
        %v1328 = vpop.f32.mrb[0].mxu0
        %v1329 = vadd.f32 0.0, %v1328
        %v1330 = vpop.f32.mrb[0].mxu0
        %v1331 = vpop.f32.mrb[0].mxu0
        %v1332 = vpop.f32.mrb[0].mxu0
        %1333 = vdwg.mxu0
        %v1334 = vmul.f32 %v1329, 0.35355338
        %v1335 = vsel %vm869, %v1334, -1e+30
        %s1336 = scalar_lea.vmem [#allocation2], 24
        %v1337 = vld [vmem:[%s1336] sm:$0xff]
        %v1338 = vsel %vm870, %v1335, -inf
        %1339 = vmax.xlane.f32.xlu0 %v1338
        %v1340 = vpop.xlane.xlu0 %1339
        %v1341 = vmax.f32 %v1337, %v1340
        %v1342 = vsub.f32 %v1337, %v1341
        %v1343 = vmul.f32 %v1342, 1.442695
        %v1344 = vpow.pop %v1343
        %1346 = vset.pattern.permute.xlu0 0
        %1347 = vperm.xlu0 %1346, %v1341
        %v1348 = vpop.permute.xlu0 %1347
        %v1350 = vsub.f32 %v1335, %v1348
        %v1351 = vmul.f32 %v1350, 1.442695
        %v1352 = vpow.pop %v1351
        %s1353 = scalar_lea.vmem [#allocation3], 24
        %v1354 = vld [vmem:[%s1353] sm:$0xff]
        %v1355 = vmul.f32 %v1344, %v1354
        %v1356 = vsel %vm870, %v1352, 0.0
        %1357 = vadd.xlane.f32.xlu0 %v1356
        %v1358 = vpop.xlane.xlu0 %1357
        %v1359 = vadd.f32 %v1355, %v1358
        %1360 = vst.msk [vmem:[%s1353] sm:$0xff] %vm941, %v1359
        %s1361 = scalar_lea.vmem [#allocation4], 24
        %v1362 = vld [vmem:[%s1361] sm:$0xff]
        %1364 = vset.pattern.permute.xlu0 0
        %1365 = vperm.xlu0 %1364, %v1344
        %v1366 = vpop.permute.xlu0 %1365
        %v1368 = vmul.f32 %v1366, %v1362
        %v1369 = vpack.c.bf16 %v1352, %v1352
        %1370 = vrot.lane.b32.xlu0 %v1095, 104
        %v1371 = vpop.permute.xlu0 %1370
        %v1373 = vsel %vm870, %v1369, 0
        %v1376 = vsel %vm954, %v1371, 0
        %1378 = vmatprep.subr.bf16.mxu0 0
        %1379 = vmatpush1.bf16.msra.mxu0 %v1376
        %1380 = vmatprep.subr.bf16.mxu0 0
        %1381 = vmatpush1.bf16.msra.mxu0 0
        %1382 = vmatprep.subr.bf16.mxu0 0
        %1383 = vmatpush1.bf16.msra.mxu0 0
        %1384 = vmatprep.subr.bf16.mxu0 0
        %1385 = vmatpush1.bf16.msra.mxu0 0
        %1386 = vmatprep.subr.bf16.mxu0 0
        %1387 = vmatpush1.bf16.msra.mxu0 0
        %1388 = vmatprep.subr.bf16.mxu0 0
        %1389 = vmatpush1.bf16.msra.mxu0 0
        %1390 = vmatprep.subr.bf16.mxu0 0
        %1391 = vmatpush1.bf16.msra.mxu0 0
        %1392 = vmatprep.subr.bf16.mxu0 0
        %1393 = vmatpush1.bf16.msra.mxu0 0
        %1394 = vmatprep.subr.bf16.mxu0 0
        %1395 = vmatpush1.bf16.msra.mxu0 0
        %1396 = vmatprep.subr.bf16.mxu0 0
        %1397 = vmatpush1.bf16.msra.mxu0 0
        %1398 = vmatprep.subr.bf16.mxu0 0
        %1399 = vmatpush1.bf16.msra.mxu0 0
        %1400 = vmatprep.subr.bf16.mxu0 0
        %1401 = vmatpush1.bf16.msra.mxu0 0
        %1402 = vmatprep.subr.bf16.mxu0 0
        %1403 = vmatpush1.bf16.msra.mxu0 0
        %1404 = vmatprep.subr.bf16.mxu0 0
        %1405 = vmatpush1.bf16.msra.mxu0 0
        %1406 = vmatprep.subr.bf16.mxu0 0
        %1407 = vmatpush1.bf16.msra.mxu0 0
        %1408 = vmatprep.subr.bf16.mxu0 0
        %1409 = vmatpush1.bf16.msra.mxu0 0
        %1410 = vmatprep.mubr.bf16.mxu0 0
        %1411 = vmatmul.mubr.bf16.gmra.mrb[0].mxu0 %v1373
        %v1412 = vpop.f32.mrb[0].mxu0
        %v1413 = vadd.f32 0.0, %v1412
        %v1414 = vpop.f32.mrb[0].mxu0
        %v1415 = vpop.f32.mrb[0].mxu0
        %v1416 = vpop.f32.mrb[0].mxu0
        %1417 = vdwg.mxu0
        %v1418 = vadd.f32 %v1368, %v1413
        %1419 = vst.msk [vmem:[%s1361] sm:$0xff] %vm870, %v1418
        %1420 = vst.msk [vmem:[%s1336] sm:$0xff] %vm941, %v1341
        %v1421 = vld [vmem:[#allocation3] sm:$0xff]
        %v1422 = vrcp.pop %v1421
        %v1423 = vld [vmem:[#allocation4] sm:$0xff]
        %1425 = vset.pattern.permute.xlu0 0
        %1426 = vperm.xlu0 %1425, %v1422
        %v1427 = vpop.permute.xlu0 %1426
        %v1429 = vmul.f32 %v1423, %v1427
        %v1430 = vpack.c.bf16 %v1429, %v1429
        %vm1431 = vcmask 60416
        %1432 = vst.msk [vmem:[%s281] sm:$0xf] %vm1431, %v1430
        %v1433 = vld [vmem:[%s1076] sm:$0xff]
        %v1434 = vrcp.pop %v1433
        %v1435 = vld [vmem:[%s1084] sm:$0xff]
        %1437 = vset.pattern.permute.xlu0 0
        %1438 = vperm.xlu0 %1437, %v1434
        %v1439 = vpop.permute.xlu0 %1438
        %v1441 = vmul.f32 %v1435, %v1439
        %v1442 = vpack.c.bf16 %v1441, %v1441
        %v1444 = vunpack.c.l.b16 %v1442
        %v1445 = vpack.c.b16 %v1444, %v1444
        %1446 = vrot.lane.b32.xlu0 %v1445, 8
        %v1447 = vpop.permute.xlu0 %1446
        %vm1449 = vcmask 126016
        %1450 = vst.msk [vmem:[%s281] sm:$0xf] %vm1449, %v1447
        %v1451 = vld [vmem:[%s1216] sm:$0xff]
        %v1452 = vrcp.pop %v1451
        %v1453 = vld [vmem:[%s1224] sm:$0xff]
        %1455 = vset.pattern.permute.xlu0 0
        %1456 = vperm.xlu0 %1455, %v1452
        %v1457 = vpop.permute.xlu0 %1456
        %v1459 = vmul.f32 %v1453, %v1457
        %v1460 = vpack.c.bf16 %v1459, %v1459
        %v1462 = vunpack.c.l.b16 %v1460
        %v1463 = vpack.c.b16 %v1462, %v1462
        %1464 = vrot.lane.b32.xlu0 %v1463, 16
        %v1465 = vpop.permute.xlu0 %1464
        %vm1467 = vcmask 191616
        %1468 = vst.msk [vmem:[%s281] sm:$0xf] %vm1467, %v1465
        %v1469 = vld [vmem:[%s1353] sm:$0xff]
        %v1470 = vrcp.pop %v1469
        %v1471 = vld [vmem:[%s1361] sm:$0xff]
        %1473 = vset.pattern.permute.xlu0 0
        %1474 = vperm.xlu0 %1473, %v1470
        %v1475 = vpop.permute.xlu0 %1474
        %v1477 = vmul.f32 %v1471, %v1475
        %v1478 = vpack.c.bf16 %v1477, %v1477
        %v1480 = vunpack.c.l.b16 %v1478
        %v1481 = vpack.c.b16 %v1480, %v1480
        %1482 = vrot.lane.b32.xlu0 %v1481, 24
        %v1483 = vpop.permute.xlu0 %1482
        %vm1485 = vcmask 257216
        %1486 = vst.msk [vmem:[%s281] sm:$0xf] %vm1485, %v1483
      $region44: #{_lambda_.12} parent=31 // pred_fallthru
        _
      %s1487 = sld [smem:[#allocation6 + %s23]]
      %p1488 = scmp.lt.s32.totalorder %s22, 1
      %s1489 = scalar_select %p1488, %s22, 1
      %p1490 = scmp.lt.s32.totalorder %s1487, 0
      %s1491 = scalar_select %p1490, %s1487, 0
      %s1492 = sadd.s32 %s1491, %s1489
      %s1493 = smul.addr %s1492, 4
      %s1494 = scalar_lea.vmem %s5, %s1493
      // Predicated region
      $region45: #{_lambda_.12} parent=31 // pred_check
        %p1495 = pneg %p142
      $region46: #{_lambda_.12} parent=31 // pred_check_branch
        %1497 = sbr.rel (%p1495) target = $region48
      $region47: #{_lambda_.12} parent=31 // pred_region
        %s1498 = sld [smem:[#allocation6 + %s23]]
      $region48: #{_lambda_.12} parent=31 // pred_fallthru
        _
    $region32: #{_lambda_.12} parent=5 // pred_fallthru
      _
    %p1499 = scmp.le.s32.totalorder 2, %s13
    // Predicated region
    $region49: #{_lambda_.12} parent=5 // pred_check
      %p1500 = pneg %p1499
    $region50: #{_lambda_.12} parent=5 // pred_check_branch
      %1502 = sbr.rel (%p1500) target = $region52
    $region51: #{_lambda_.12} parent=5 // pred_region
      %s1503 = ssub.s32 %s13, 2
      // Predicated region
      $region53: #{_lambda_.12} parent=51 // pred_check
        %p1504 = pneg %p148
      $region54: #{_lambda_.12} parent=51 // pred_check_branch
        %1506 = sbr.rel (%p1504) target = $region56
      $region55: #{_lambda_.12} parent=51 // pred_region
        %s1507 = sld [smem:[#allocation6 + %s25]]
        %p1508 = scmp.lt.s32.totalorder %s24, 1
        %s1509 = scalar_select %p1508, %s24, 1
        %p1510 = scmp.lt.s32.totalorder %s1507, 0
        %s1511 = scalar_select %p1510, %s1507, 0
        %s1512 = sadd.s32 %s1511, %s1509
        %s1513 = smul.addr %s1512, 4
        %s1514 = scalar_lea.vmem %s5, %s1513
      $region56: #{_lambda_.12} parent=51 // pred_fallthru
        _
    $region52: #{_lambda_.12} parent=5 // pred_fallthru
      _
  $region6: #{_lambda_.12} parent=0 // loop_footer
    %s17 = sadd.s32 1, %s13
  $region7: #{_lambda_.12} parent=0 // loop_footer_branch
    %12 = sbr.rel target = $region3
  $region8: #{_lambda_.12} parent=0 // loop_exit
    _

// kernel: _lambda_.21
$region0: #{_lambda_.21}
  #allocation0 [shape = 'u32[]', space=smem, size = 0x4, offset = 0x4, fixed_abs, tag = 'smem constant byte address 0x4 - core index']
  #allocation1 [shape = 'u32[144,128]{1,0:T(1,128)}', space=vmem, size = 0x12000, scoped, tag = 'internal scratch']
  #allocation2 [shape = 'bf16[16,32]{1,0:T(16,128)(2,1)}', space=vmem, size = 0x1000, scoped, tag = 'scratch operand']
  %s0 = inlined_call_operand.vmem [shape: f32[16,32], index: 0, kind: input, shape index: {}]
  %s1 = inlined_call_operand.vmem [shape: f32[1,32], index: 1, kind: input, shape index: {}]
  %s2 = inlined_call_operand.vmem [shape: f32[1,32], index: 2, kind: input, shape index: {}]
  %s3 = inlined_call_operand.vmem [shape: bf16[128,32], index: 3, kind: input, shape index: {}]
  %s4 = inlined_call_operand.hbm [shape: f32[16,128], index: 4, kind: output, shape index: {}]
  %s5 = sld [smem:[#allocation0]]
  $region30: #{_lambda_.21} parent=0
    _
  %s7 = ssub.s32 1, %s5
  %s8 = scalar_select 0, %s7, %s5
  $region1: #{_lambda_.21} parent=0
    #allocation3 [shape = 'u8[8192]{0}', space=vmem, size = 0x2000, scoped, tag = 'output window, operand 0, single buffered']
    #allocation4 [shape = 's32[1]{0}', space=sflag, size = 0x4, scoped, tag = 'scoped memory for _lambda_.21']
    %9 = vsyncpa [#allocation4], 0
    // Predicated region
    $region2: #{_lambda_.21} parent=1 // pred_check
      _
    $region3: #{_lambda_.21} parent=1 // pred_check_branch
      %11 = sbr.rel (0) target = $region5
    $region4: #{_lambda_.21} parent=1 // pred_region
      _
    $region5: #{_lambda_.21} parent=1 // pred_fallthru
      _
    // Predicated region
    $region6: #{_lambda_.21} parent=1 // pred_check
      _
    $region7: #{_lambda_.21} parent=1 // pred_check_branch
      %13 = sbr.rel (0) target = $region9
    $region8: #{_lambda_.21} parent=1 // pred_region
      _
    $region9: #{_lambda_.21} parent=1 // pred_fallthru
      _
    // Predicated region
    $region10: #{_lambda_.21} parent=1 // pred_check
      _
    $region11: #{_lambda_.21} parent=1 // pred_check_branch
      %15 = sbr.rel (0) target = $region13
    $region12: #{_lambda_.21} parent=1 // pred_region
      _
    $region13: #{_lambda_.21} parent=1 // pred_fallthru
      _
    // Predicated region
    $region14: #{_lambda_.21} parent=1 // pred_check
      _
    $region15: #{_lambda_.21} parent=1 // pred_check_branch
      %17 = sbr.rel (0) target = $region17
    $region16: #{_lambda_.21} parent=1 // pred_region
      _
    $region17: #{_lambda_.21} parent=1 // pred_fallthru
      _
    %p19 = scmp.eq.s32.totalorder 0, 0
    // Predicated region
    $region18: #{_lambda_.21} parent=1 // pred_check
      %p20 = pneg %p19
    $region19: #{_lambda_.21} parent=1 // pred_check_branch
      %22 = sbr.rel (%p20) target = $region21
    $region20: #{_lambda_.21} parent=1 // pred_region
      %v23 = vld [vmem:[%s0] sm:$0xff]
      %v24 = vld [vmem:[%s0 + $0x8] sm:$0xff]
      %v25 = vld [vmem:[%s1] sm:$0x1]
      %v26 = vld [vmem:[%s2] sm:$0x1]
      %vm27 = vcmask 261120
      %v28 = vsel %vm27, %v23, 0.0
      %29 = vadd.xlane.f32.xlu0 %v28
      %v30 = vpop.xlane.xlu0 %29
      %v31 = vsel %vm27, %v24, 0.0
      %32 = vadd.xlane.f32.xlu0 %v31
      %v33 = vpop.xlane.xlu0 %32
      %v34 = vrcp.pop 32.0
      %v35 = vmul.f32 %v30, %v34
      %v36 = vmul.f32 %v33, %v34
      %v37 = vsub.f32 %v23, %v35
      %v38 = vsub.f32 %v24, %v36
      %v39 = vmul.f32 %v37, %v37
      %v40 = vmul.f32 %v38, %v38
      %v41 = vsel %vm27, %v39, 0.0
      %42 = vadd.xlane.f32.xlu0 %v41
      %v43 = vpop.xlane.xlu0 %42
      %v44 = vsel %vm27, %v40, 0.0
      %45 = vadd.xlane.f32.xlu0 %v44
      %v46 = vpop.xlane.xlu0 %45
      %v47 = vmul.f32 %v43, %v34
      %v48 = vmul.f32 %v46, %v34
      %v49 = vadd.f32 %v47, 1e-05
      %v50 = vadd.f32 %v48, 1e-05
      %v51 = vrsqrt.pop %v49
      %v52 = vrsqrt.pop %v50
      %v53 = vmul.f32 %v37, %v51
      %v54 = vmul.f32 %v38, %v52
      %v56 = vlaneseq
      %v57 = vshrl.u32 %v56, 7
      %v58 = vsub.s32 0, %v57
      %v59 = vrot.slane %v25, %v58
      %v61 = vmul.f32 %v53, %v59
      %v62 = vmul.f32 %v54, %v59
      %v64 = vlaneseq
      %v65 = vshrl.u32 %v64, 7
      %v66 = vsub.s32 0, %v65
      %v67 = vrot.slane %v26, %v66
      %v69 = vadd.f32 %v61, %v67
      %v70 = vadd.f32 %v62, %v67
      %v71 = vpack.c.bf16 %v70, %v69
      %72 = vst.msk [vmem:[#allocation2] sm:$0xff] %vm27, %v71
    $region21: #{_lambda_.21} parent=1 // pred_fallthru
      _
    %v73 = vld [vmem:[#allocation2] sm:$0xff]
    %v74 = vld [vmem:[%s3] sm:$0xf]
    %v75 = vld [vmem:[%s3 + $0x4] sm:$0xf]
    %v76 = vld [vmem:[%s3 + $0x8] sm:$0xf]
    %v77 = vld [vmem:[%s3 + $0xc] sm:$0xf]
    %v78 = vld [vmem:[%s3 + $0x10] sm:$0xf]
    %v79 = vld [vmem:[%s3 + $0x14] sm:$0xf]
    %v80 = vld [vmem:[%s3 + $0x18] sm:$0xf]
    %v81 = vld [vmem:[%s3 + $0x1c] sm:$0xf]
    %v82 = vld [vmem:[%s3 + $0x20] sm:$0xf]
    %v83 = vld [vmem:[%s3 + $0x24] sm:$0xf]
    %v84 = vld [vmem:[%s3 + $0x28] sm:$0xf]
    %v85 = vld [vmem:[%s3 + $0x2c] sm:$0xf]
    %v86 = vld [vmem:[%s3 + $0x30] sm:$0xf]
    %v87 = vld [vmem:[%s3 + $0x34] sm:$0xf]
    %v88 = vld [vmem:[%s3 + $0x38] sm:$0xf]
    %v89 = vld [vmem:[%s3 + $0x3c] sm:$0xf]
    %v106 = vunpack.c.l.b16 %v74
    %v107 = vunpack.c.l.b16 %v75
    %v108 = vunpack.c.l.b16 %v76
    %v109 = vunpack.c.l.b16 %v77
    %v110 = vunpack.c.l.b16 %v78
    %v111 = vunpack.c.l.b16 %v79
    %v112 = vunpack.c.l.b16 %v80
    %v113 = vunpack.c.l.b16 %v81
    %v114 = vunpack.c.l.b16 %v82
    %v115 = vunpack.c.l.b16 %v83
    %v116 = vunpack.c.l.b16 %v84
    %v117 = vunpack.c.l.b16 %v85
    %v118 = vunpack.c.l.b16 %v86
    %v119 = vunpack.c.l.b16 %v87
    %v120 = vunpack.c.l.b16 %v88
    %v121 = vunpack.c.l.b16 %v89
    %v122 = vpack.c.b16 %v107, %v106
    %v123 = vpack.c.b16 %v109, %v108
    %v124 = vpack.c.b16 %v111, %v110
    %v125 = vpack.c.b16 %v113, %v112
    %v126 = vpack.c.b16 %v115, %v114
    %v127 = vpack.c.b16 %v117, %v116
    %v128 = vpack.c.b16 %v119, %v118
    %v129 = vpack.c.b16 %v121, %v120
    %vm130 = vcmask 261120
    %v132 = vsel %vm130, %v73, 0
    %v135 = vsel %vm130, %v122, 0
    %v138 = vsel %vm130, %v123, 0
    %v141 = vsel %vm130, %v124, 0
    %v144 = vsel %vm130, %v125, 0
    %v147 = vsel %vm130, %v126, 0
    %v150 = vsel %vm130, %v127, 0
    %v153 = vsel %vm130, %v128, 0
    %v156 = vsel %vm130, %v129, 0
    %158 = vmatprep.subr.bf16.mxu0 0
    %159 = vmatpush1.bf16.xpose.msra.mxu0 %v135
    %160 = vmatprep.subr.bf16.mxu0 0
    %161 = vmatpush1.bf16.xpose.msra.mxu0 %v138
    %162 = vmatprep.subr.bf16.mxu0 0
    %163 = vmatpush1.bf16.xpose.msra.mxu0 %v141
    %164 = vmatprep.subr.bf16.mxu0 0
    %165 = vmatpush1.bf16.xpose.msra.mxu0 %v144
    %166 = vmatprep.subr.bf16.mxu0 0
    %167 = vmatpush1.bf16.xpose.msra.mxu0 %v147
    %168 = vmatprep.subr.bf16.mxu0 0
    %169 = vmatpush1.bf16.xpose.msra.mxu0 %v150
    %170 = vmatprep.subr.bf16.mxu0 0
    %171 = vmatpush1.bf16.xpose.msra.mxu0 %v153
    %172 = vmatprep.subr.bf16.mxu0 0
    %173 = vmatpush1.bf16.xpose.msra.mxu0 %v156
    %174 = vmatprep.subr.bf16.mxu0 0
    %175 = vmatpush1.bf16.xpose.msra.mxu0 0
    %176 = vmatprep.subr.bf16.mxu0 0
    %177 = vmatpush1.bf16.xpose.msra.mxu0 0
    %178 = vmatprep.subr.bf16.mxu0 0
    %179 = vmatpush1.bf16.xpose.msra.mxu0 0
    %180 = vmatprep.subr.bf16.mxu0 0
    %181 = vmatpush1.bf16.xpose.msra.mxu0 0
    %182 = vmatprep.subr.bf16.mxu0 0
    %183 = vmatpush1.bf16.xpose.msra.mxu0 0
    %184 = vmatprep.subr.bf16.mxu0 0
    %185 = vmatpush1.bf16.xpose.msra.mxu0 0
    %186 = vmatprep.subr.bf16.mxu0 0
    %187 = vmatpush1.bf16.xpose.msra.mxu0 0
    %188 = vmatprep.subr.bf16.mxu0 0
    %189 = vmatpush1.bf16.xpose.msra.mxu0 0
    %190 = vmatprep.mubr.bf16.mxu0 0
    %191 = vmatmul.mubr.bf16.gmra.mrb[0].mxu0 %v132
    %v192 = vpop.f32.mrb[0].mxu0
    %v193 = vadd.f32 0.0, %v192
    %v194 = vpop.f32.mrb[0].mxu0
    %v195 = vpop.f32.mrb[0].mxu0
    %v196 = vadd.f32 0.0, %v195
    %v197 = vpop.f32.mrb[0].mxu0
    %198 = vdwg.mxu0
    %199 = vst [vmem:[#allocation3] sm:$0xff] %v193
    %200 = vst [vmem:[#allocation3 + $0x8] sm:$0xff] %v196
    // Predicated region
    $region22: #{_lambda_.21} parent=1 // pred_check
      _
    $region23: #{_lambda_.21} parent=1 // pred_check_branch
      %202 = sbr.rel (0) target = $region25
    $region24: #{_lambda_.21} parent=1 // pred_region
      %s204 = ssub.s32 256, 256
      %205 = vsyncadd [#allocation4], %s204
      %s206 = sshll.u32 [#allocation3], 4
      %s207 = int_to_ptr.vmem [resolvable:$true] %s206
      %212 = dma.vmem_to_hbm [thread:$0]  %s207, 256, %s4, [#allocation4], 128, 128, 8
    $region25: #{_lambda_.21} parent=1 // pred_fallthru
      _
    // Predicated region
    $region26: #{_lambda_.21} parent=1 // pred_check
      _
    $region27: #{_lambda_.21} parent=1 // pred_check_branch
      %214 = sbr.rel (0) target = $region29
    $region28: #{_lambda_.21} parent=1 // pred_region
      %215 = dma.done [#allocation4], 256
    $region29: #{_lambda_.21} parent=1 // pred_fallthru
      _
    %216 = vsyncpa [#allocation4], 1

</llo_original>
